<compile_context>
chip_gen: v7x
topology: tpu7x:2x2x1
jax: 0.10.0
libtpu: 0.0.40
codegen_flags: <defaults>
</compile_context>

<pallas_src>
from functools import partial

import jax
import jax.numpy as jnp
from jax import lax
from jax.experimental import pallas as pl
from jax.experimental.pallas import tpu as pltpu


# ----------------------------------------------------------------------------- #
# Model configuration (small synthetic config)
# ----------------------------------------------------------------------------- #
EMBED_DIM = 32            # decoder_embed_dim
HEADS = 4                 # decoder_retention_heads
LAYERS = 2                # decoder_layers
VALUE_DIM = 64            # decoder_value_embed_dim (2x embed, RetNet convention)
FFN_DIM = 64              # decoder_ffn_embed_dim
N_TOKENS = [6, 8, 12, 16, 8, 8, 4, 4, 8]   # per-field vocab sizes (9 fields)
PROMPT_VOCAB = 32000      # TokenEmbedding(embed_dim, 32000) / Linear(embed_dim, 32000)
EMBED_SCALE = 1.0         # RetNetConfig default no_scale_embedding=True
LN_EPS = 1e-5             # torchscale RetNetConfig layernorm_eps default
HEAD_KDIM = EMBED_DIM // HEADS      # 8
HEAD_VDIM = VALUE_DIM // HEADS      # 16
SCALING = HEAD_KDIM ** -0.5
PROMPT_TILE = 3200        # 32000 / 3200 = 10 lane-dense grid steps for the prompt head


# ----------------------------------------------------------------------------- #
# In-kernel math helpers (lower to VPU/EUP only; no exotic primitives)
# ----------------------------------------------------------------------------- #
def _erf_poly(x):
    # Abramowitz & Stegun 7.1.26 polynomial erf (|err| < 1.5e-7) — gives exact-GELU semantics
    # without depending on an erf lowering inside Mosaic.
    p = 0.3275911
    a1, a2, a3, a4, a5 = (0.254829592, -0.284496736, 1.421413741,
                          -1.453152027, 1.061405429)
    s = jnp.where(x >= 0.0, 1.0, -1.0)
    z = jnp.abs(x)
    t = 1.0 / (1.0 + p * z)
    poly = ((((a5 * t + a4) * t + a3) * t + a2) * t + a1) * t
    return s * (1.0 - poly * jnp.exp(-z * z))


def _gelu_exact(x):
    return 0.5 * x * (1.0 + _erf_poly(x * 0.7071067811865476))


# ----------------------------------------------------------------------------- #
# Pallas kernels
# ----------------------------------------------------------------------------- #
def _decoder_stack_kernel(eps, E, H, V, Fdim, L, scaling,
                          x_ref, norms_ref, sincos_ref, mask_ref,
                          wqkvg_ref, wo_ref, w12_ref, fc2_ref, heads_ref,
                          logits_ref, xn_ref):
    """Whole decoder stack in one grid step:
    L x (RMSNorm -> fused QKVG(+rot) proj -> retention -> group norm -> swish gate
         -> out proj -> residual -> RMSNorm -> GLU FFN -> residual),
    then final RMSNorm + fused 9-field heads.  Padded token rows stay exactly zero."""
    dk = E // H
    dv = V // H

    x = x_ref[...]                                  # (Mp, E) f32
    norms = norms_ref[...]                          # (2L+1, E) f32
    sin = sincos_ref[:, :E]                         # (Mp, E)
    cos = sincos_ref[:, E:]                         # (Mp, E)

    def rms(v, w):
        ms = jnp.mean(v * v, axis=-1, keepdims=True)
        return v * lax.rsqrt(ms + eps) * w

    for l in range(L):                              # static: L=2
        # ---------------- multi-scale retention block ----------------
        xn = rms(x, norms[2 * l:2 * l + 1, :])
        proj = jnp.dot(xn.astype(jnp.bfloat16), wqkvg_ref[l],
                       preferred_element_type=jnp.float32)      # (Mp, 4E+2V)
        q, qrot = proj[:, 0:E], proj[:, E:2 * E]
        k, krot = proj[:, 2 * E:3 * E], proj[:, 3 * E:4 * E]
        v = proj[:, 4 * E:4 * E + V]
        g = proj[:, 4 * E + V:4 * E + 2 * V]

        # xpos theta-shift (rotation already folded into the projection weights)
        qr = (q * cos + qrot * sin).astype(jnp.bfloat16)
        kr = ((k * cos + krot * sin) * scaling).astype(jnp.bfloat16)
        v_b = v.astype(jnp.bfloat16)

        wo = wo_ref[l]                                           # (V, E) bf16
        acc = jnp.zeros_like(x)
        for h in range(H):                                       # static: H=4
            qh = qr[:, h * dk:(h + 1) * dk]                      # (Mp, dk)
            kh = kr[:, h * dk:(h + 1) * dk]
            vh = v_b[:, h * dv:(h + 1) * dv]                     # (Mp, dv)
            # q @ k^T without an in-kernel transpose (contract dim 1 of both operands)
            qk = lax.dot_general(qh, kh, (((1,), (1,)), ((), ())),
                                 preferred_element_type=jnp.float32)    # (Mp, Mp)
            # block-diagonal (over batches) decay mask also zeroes padded rows/cols
            qk = qk * mask_ref[h]
            # torchscale normalizer: abs-row-sum clamped to [1, 5e4]
            denom = jnp.clip(jnp.sum(jnp.abs(qk), axis=-1, keepdims=True), 1.0, 5e4)
            qk = qk / denom
            ro = jnp.dot(qk.astype(jnp.bfloat16), vh,
                         preferred_element_type=jnp.float32)             # (Mp, dv)
            # per-head group norm = RMSNorm(head_dim) without affine
            gms = jnp.mean(ro * ro, axis=-1, keepdims=True)
            ro = ro * lax.rsqrt(gms + eps)
            gated = jax.nn.silu(g[:, h * dv:(h + 1) * dv]) * ro          # (Mp, dv)
            acc = acc + jnp.dot(gated.astype(jnp.bfloat16),
                                wo[h * dv:(h + 1) * dv, :],
                                preferred_element_type=jnp.float32)
        x = x + acc                                              # full-tile residual

        # ---------------- GLU FFN block ----------------
        xn2 = rms(x, norms[2 * l + 1:2 * l + 2, :])
        h12 = jnp.dot(xn2.astype(jnp.bfloat16), w12_ref[l],
                      preferred_element_type=jnp.float32)        # (Mp, 2*Fdim)
        act = _gelu_exact(h12[:, :Fdim]) * h12[:, Fdim:]
        x = x + jnp.dot(act.astype(jnp.bfloat16), fc2_ref[l],
                        preferred_element_type=jnp.float32)

    # ---------------- final RMSNorm + fused 9-field output heads ----------------
    xn_f = rms(x, norms[2 * L:2 * L + 1, :])
    xn_ref[...] = xn_f
    logits_ref[...] = jnp.dot(xn_f.astype(jnp.bfloat16), heads_ref[...],
                              preferred_element_type=jnp.float32)


def _prompt_ce_kernel(tn, x_ref, tgt_ref, w_ref, b_ref, stats_ref):
    """One 3200-wide tile of the prompt head: compute logits in VMEM, reduce to per-row
    (max, sum-exp, target-logit) partials, store a tiny lane-dense (Mp, 128) stats tile.
    The full (Mp, 32000) f32 logits never touch HBM."""
    j = pl.program_id(0)
    logits = jnp.dot(x_ref[...].astype(jnp.bfloat16), w_ref[...],
                     preferred_element_type=jnp.float32) + b_ref[...]   # (Mp, tn)
    m = jnp.max(logits, axis=-1, keepdims=True)                          # (Mp, 1)
    s = jnp.sum(jnp.exp(logits - m), axis=-1, keepdims=True)             # (Mp, 1)
    col = lax.broadcasted_iota(jnp.int32, logits.shape, 1) + j * tn
    t = jnp.sum(jnp.where(col == tgt_ref[...], logits, 0.0),
                axis=-1, keepdims=True)                                  # (Mp, 1)
    lane = lax.broadcasted_iota(jnp.int32, (logits.shape[0], 128), 1)
    stats_ref[...] = (jnp.where(lane == 0, m, 0.0)
                      + jnp.where(lane == 1, s, 0.0)
                      + jnp.where(lane == 2, t, 0.0))


# ----------------------------------------------------------------------------- #
# Pallas wrappers
# ----------------------------------------------------------------------------- #
def decoder_stack(x_pad, norms, sincos, mask_full, wqkvg, wo, w12, fc2, heads_w):
    Mp, E = x_pad.shape
    H = mask_full.shape[0]
    L, V, _ = wo.shape
    Fdim = fc2.shape[1]
    NH = heads_w.shape[1]
    P = wqkvg.shape[2]
    NR = norms.shape[0]
    kern = partial(_decoder_stack_kernel, LN_EPS, E, H, V, Fdim, L, SCALING)
    return pl.pallas_call(
        kern,
        out_shape=(jax.ShapeDtypeStruct((Mp, NH), jnp.float32),
                   jax.ShapeDtypeStruct((Mp, E), jnp.float32)),
        grid=(1,),
        in_specs=[
            pl.BlockSpec((Mp, E), lambda i: (0, 0)),
            pl.BlockSpec((NR, E), lambda i: (0, 0)),
            pl.BlockSpec((Mp, 2 * E), lambda i: (0, 0)),
            pl.BlockSpec((H, Mp, Mp), lambda i: (0, 0, 0)),
            pl.BlockSpec((L, E, P), lambda i: (0, 0, 0)),
            pl.BlockSpec((L, V, E), lambda i: (0, 0, 0)),
            pl.BlockSpec((L, E, 2 * Fdim), lambda i: (0, 0, 0)),
            pl.BlockSpec((L, Fdim, E), lambda i: (0, 0, 0)),
            pl.BlockSpec((E, NH), lambda i: (0, 0)),
        ],
        out_specs=(pl.BlockSpec((Mp, NH), lambda i: (0, 0)),
                   pl.BlockSpec((Mp, E), lambda i: (0, 0))),
        compiler_params=pltpu.CompilerParams(dimension_semantics=("arbitrary",)),
    )(x_pad, norms, sincos, mask_full, wqkvg, wo, w12, fc2, heads_w)


def prompt_ce_partials(xn_pad, targets_pad, w_bf16, bias):
    Mp, E = xn_pad.shape
    N = w_bf16.shape[1]
    tn = PROMPT_TILE
    nt = N // tn
    kern = partial(_prompt_ce_kernel, tn)
    return pl.pallas_call(
        kern,
        out_shape=jax.ShapeDtypeStruct((Mp, nt * 128), jnp.float32),
        grid=(nt,),
        in_specs=[
            pl.BlockSpec((Mp, E), lambda j: (0, 0)),
            pl.BlockSpec((Mp, 1), lambda j: (0, 0)),
            pl.BlockSpec((E, tn), lambda j: (0, j)),
            pl.BlockSpec((1, tn), lambda j: (0, j)),
        ],
        out_specs=pl.BlockSpec((Mp, 128), lambda j: (0, j)),
        compiler_params=pltpu.CompilerParams(
            dimension_semantics=("parallel",),
            vmem_limit_bytes=8 * 1024 * 1024),
    )(xn_pad, targets_pad, w_bf16, bias.reshape(1, N))


# ----------------------------------------------------------------------------- #
# Parameters
# ----------------------------------------------------------------------------- #
def init_params(key):
    p = {}

    def nrm(k, shape, std):
        return std * jax.random.normal(k, shape, jnp.float32)

    keys = iter(jax.random.split(key, 64 + 16 * LAYERS))
    p["field_emb"] = [nrm(next(keys), (n, EMBED_DIM), 0.02) for n in N_TOKENS]
    p["prompt_emb"] = nrm(next(keys), (PROMPT_VOCAB, EMBED_DIM), 0.02)

    layers = []
    for _ in range(LAYERS):
        lp = {
            "ln1": jnp.ones((EMBED_DIM,), jnp.float32),
            "wq": nrm(next(keys), (EMBED_DIM, EMBED_DIM), EMBED_DIM ** -0.5),
            "wk": nrm(next(keys), (EMBED_DIM, EMBED_DIM), EMBED_DIM ** -0.5),
            "wv": nrm(next(keys), (EMBED_DIM, VALUE_DIM), EMBED_DIM ** -0.5),
            "wg": nrm(next(keys), (EMBED_DIM, VALUE_DIM), EMBED_DIM ** -0.5),
            "wo": nrm(next(keys), (VALUE_DIM, EMBED_DIM), VALUE_DIM ** -0.5),
            "ln2": jnp.ones((EMBED_DIM,), jnp.float32),
            "fc1": nrm(next(keys), (EMBED_DIM, FFN_DIM), EMBED_DIM ** -0.5),
            "gate": nrm(next(keys), (EMBED_DIM, FFN_DIM), EMBED_DIM ** -0.5),
            "fc2": nrm(next(keys), (FFN_DIM, EMBED_DIM), FFN_DIM ** -0.5),
        }
        layers.append(lp)
    p["layers"] = layers
    p["ln_final"] = jnp.ones((EMBED_DIM,), jnp.float32)
    p["out_proj"] = [nrm(next(keys), (EMBED_DIM, n), EMBED_DIM ** -0.5) for n in N_TOKENS]
    p["prompt_w"] = nrm(next(keys), (EMBED_DIM, PROMPT_VOCAB), EMBED_DIM ** -0.5)
    p["prompt_b"] = jnp.zeros((PROMPT_VOCAB,), jnp.float32)
    return p


def _rot_pair_matrix(dk):
    """Matrix R such that x @ R == rotate_every_two(x): out[2m] = -x[2m+1], out[2m+1] = x[2m]."""
    idx = jnp.arange(dk // 2)
    r = jnp.zeros((dk, dk), jnp.float32)
    r = r.at[2 * idx, 2 * idx + 1].set(1.0)
    r = r.at[2 * idx + 1, 2 * idx].set(-1.0)
    return r


def prepare_params(p):
    """Fuse + pre-cast weights once (outside jit): xpos rotation folded into the QKVG
    projection, per-layer weights stacked along a leading L axis, fc1|gate concat, 9-field
    heads concat (lane-padded to 128), all norm weights stacked, bf16 matmul operands."""
    prep = {"field_emb": p["field_emb"], "prompt_emb": p["prompt_emb"]}
    R = jnp.kron(jnp.eye(HEADS, dtype=jnp.float32), _rot_pair_matrix(HEAD_KDIM))   # (E, E)

    wqkvg, wo, w12, fc2, norms = [], [], [], [], []
    for lp in p["layers"]:
        wqkvg.append(jnp.concatenate(
            [lp["wq"], lp["wq"] @ R, lp["wk"], lp["wk"] @ R, lp["wv"], lp["wg"]],
            axis=1).astype(jnp.bfloat16))                       # (E, 4E+2V)
        wo.append(lp["wo"].astype(jnp.bfloat16))                # (V, E)
        w12.append(jnp.concatenate([lp["fc1"], lp["gate"]], axis=1).astype(jnp.bfloat16))
        fc2.append(lp["fc2"].astype(jnp.bfloat16))
        norms.extend([lp["ln1"], lp["ln2"]])
    norms.append(p["ln_final"])

    prep["wqkvg"] = jnp.stack(wqkvg)            # (L, E, 4E+2V)
    prep["wo"] = jnp.stack(wo)                  # (L, V, E)
    prep["w12"] = jnp.stack(w12)                # (L, E, 2*FFN)
    prep["fc2"] = jnp.stack(fc2)                # (L, FFN, E)
    prep["norms"] = jnp.stack(norms)            # (2L+1, E)

    heads_w = jnp.concatenate(p["out_proj"], axis=1)            # (E, sum(N_TOKENS)=74)
    pad_to = ((heads_w.shape[1] + 127) // 128) * 128
    prep["heads_w"] = jnp.pad(
        heads_w, ((0, 0), (0, pad_to - heads_w.shape[1]))).astype(jnp.bfloat16)
    prep["prompt_w"] = p["prompt_w"].astype(jnp.bfloat16)
    prep["prompt_b"] = p["prompt_b"]
    return prep


# ----------------------------------------------------------------------------- #
# Plain-JAX glue
# ----------------------------------------------------------------------------- #
def retnet_rel_pos(slen):
    """RetNetRelPos parallel form: sin, cos (slen, dk) and decay mask (H, slen, slen)."""
    angle = 1.0 / (10000.0 ** jnp.linspace(0.0, 1.0, HEAD_KDIM // 2))
    angle = jnp.repeat(angle, 2)                                # (dk,)
    decay = jnp.log(1.0 - 2.0 ** (-5.0 - jnp.arange(HEADS, dtype=jnp.float32)))
    index = jnp.arange(slen, dtype=jnp.float32)
    sin = jnp.sin(index[:, None] * angle[None, :])              # (T, dk)
    cos = jnp.cos(index[:, None] * angle[None, :])
    diff = index[:, None] - index[None, :]
    tril = diff >= 0.0
    masked = jnp.where(tril, diff, jnp.inf)
    mask = jnp.exp(masked * decay[:, None, None])               # (H, T, T)
    mask = jnp.nan_to_num(mask)
    mask = mask / jnp.sqrt(jnp.sum(mask, axis=-1, keepdims=True))
    return sin, cos, mask


def cross_entropy(logits, targets, ignore_index=-100):
    """F.cross_entropy(logits.transpose(1,2), targets) with mean reduction."""
    lse = jax.scipy.special.logsumexp(logits, axis=-1)
    tgt = jnp.take_along_axis(logits, targets[..., None], axis=-1)[..., 0]
    nll = lse - tgt
    valid = targets != ignore_index
    denom = jnp.maximum(jnp.sum(valid), 1)
    return jnp.sum(jnp.where(valid, nll, 0.0)) / denom


# ----------------------------------------------------------------------------- #
# Forward pass (MusicXTransformer.forward -> MusicAutoregressiveWrapper.forward)
# ----------------------------------------------------------------------------- #
def music_x_transformer_forward(prep, seq, prompt, attribute):
    B, T, F = seq.shape
    xi = seq[:, :-1]                  # (B, T-1, F)
    xo = seq[:, 1:]                   # (B, T-1, F)
    prm = prompt[:, :-1]              # (B, T-1)
    Tm = T - 1

    # --- embedding (sum over fields + prompt embedding), scale, (dropout p=0) ---
    emb = jnp.zeros((B, Tm, EMBED_DIM), jnp.float32)
    for i, tbl in enumerate(prep["field_emb"]):
        emb = emb + jnp.take(tbl, xi[..., i], axis=0)
    emb = emb + jnp.take(prep["prompt_emb"], prm, axis=0)
    x = EMBED_SCALE * emb

    # --- pad token axis to a multiple of 8 once; padded rows stay exactly zero ---
    M = B * Tm
    Mp = ((M + 7) // 8) * 8
    x_pad = jnp.zeros((Mp, EMBED_DIM), jnp.float32).at[:M].set(x.reshape(M, EMBED_DIM))

    # --- rel-pos tables, packed operands for the fused decoder kernel ---
    sin, cos, dmask = retnet_rel_pos(Tm)
    sin_full = jnp.zeros((Mp, EMBED_DIM), jnp.float32).at[:M].set(
        jnp.tile(jnp.tile(sin, (1, HEADS)), (B, 1)))
    cos_full = jnp.zeros((Mp, EMBED_DIM), jnp.float32).at[:M].set(
        jnp.tile(jnp.tile(cos, (1, HEADS)), (B, 1)))
    sincos = jnp.concatenate([sin_full, cos_full], axis=1)      # (Mp, 2E)
    # decay mask laid out block-diagonally over the flattened (batch*time) token axis,
    # zero on cross-batch and padded entries -> whole stack runs on full (Mp, E) tiles.
    mask_full = jnp.zeros((HEADS, Mp, Mp), jnp.float32)
    for b in range(B):
        r0 = b * Tm
        mask_full = mask_full.at[:, r0:r0 + Tm, r0:r0 + Tm].set(dmask)

    # --- ONE fused pallas_call: both decoder layers + final norm + 9-field heads ---
    logits_cat, xn_pad = decoder_stack(
        x_pad, prep["norms"], sincos, mask_full,
        prep["wqkvg"], prep["wo"], prep["w12"], prep["fc2"], prep["heads_w"])

    # --- field losses (MusicAutoregressiveWrapper.forward) ---
    logits_cat = logits_cat[:M]
    losses = []
    off = 0
    for i, n in enumerate(N_TOKENS):
        li = logits_cat[:, off:off + n].reshape(B, Tm, n)
        losses.append(cross_entropy(li, xo[..., i]))
        off += n
    loss = sum(losses)

    # --- prompt loss: projection + CE reduction fused; logits never round-trip HBM ---
    tgt_prompt = attribute[:, :-1].reshape(M)
    tgt_pad = jnp.full((Mp, 1), -1, jnp.int32).at[:M, 0].set(tgt_prompt)
    nt = PROMPT_VOCAB // PROMPT_TILE
    stats = prompt_ce_partials(xn_pad, tgt_pad, prep["prompt_w"], prep["prompt_b"])
    stats = stats[:M].reshape(M, nt, 128)
    m_t, s_t, t_t = stats[:, :, 0], stats[:, :, 1], stats[:, :, 2]
    gmax = jnp.max(m_t, axis=1)
    lse = gmax + jnp.log(jnp.sum(s_t * jnp.exp(m_t - gmax[:, None]), axis=1))
    tgt_logit = jnp.sum(t_t, axis=1)          # exactly one tile contributes per row
    loss_prompt = jnp.mean(lse - tgt_logit)   # all targets valid (no ignore_index hits)

    loss = loss + loss_prompt
    losses = losses + [loss_prompt]
    return loss, losses


# ----------------------------------------------------------------------------- #
# Main
# ----------------------------------------------------------------------------- #
if __name__ == "__main__":
    key = jax.random.PRNGKey(0)
    kp, kd = jax.random.split(key)
    params = init_params(kp)
    prep = prepare_params(params)     # weight fusion / bf16 casts done once, outside jit

    B, T, F = 2, 8, len(N_TOKENS)
    keys = jax.random.split(kd, F + 2)
    seq_cols = [jax.random.randint(keys[i], (B, T, 1), 0, N_TOKENS[i], jnp.int32)
                for i in range(F)]
    seq = jnp.concatenate(seq_cols, axis=-1)                      # (B, T, F)
    prompt = jax.random.randint(keys[F], (B, T), 0, PROMPT_VOCAB, jnp.int32)
    attribute = jax.random.randint(keys[F + 1], (B, T), 0, PROMPT_VOCAB, jnp.int32)

    fwd = jax.jit(music_x_transformer_forward)
    loss, losses = fwd(prep, seq, prompt, attribute)
    jax.block_until_ready(loss)
    assert loss.shape == () and jnp.isfinite(loss), "bad loss"
    assert len(losses) == len(N_TOKENS) + 1
    print("KERNEL_OK")
</pallas_src>

<mosaic_0001>
module attributes {stable_mosaic.version = 11 : i64} {
  func.func @_decoder_stack_kernel(%arg0: i32, %arg1: memref<16x32xf32, #tpu.memory_space<vmem>>, %arg2: memref<5x32xf32, #tpu.memory_space<vmem>>, %arg3: memref<16x64xf32, #tpu.memory_space<vmem>>, %arg4: memref<4x16x16xf32, #tpu.memory_space<vmem>>, %arg5: memref<2x32x256xbf16, #tpu.memory_space<vmem>>, %arg6: memref<2x64x32xbf16, #tpu.memory_space<vmem>>, %arg7: memref<2x32x128xbf16, #tpu.memory_space<vmem>>, %arg8: memref<2x64x32xbf16, #tpu.memory_space<vmem>>, %arg9: memref<32x128xbf16, #tpu.memory_space<vmem>>, %arg10: memref<16x128xf32, #tpu.memory_space<vmem>>, %arg11: memref<16x32xf32, #tpu.memory_space<vmem>>) attributes {dimension_semantics = [#tpu.dimension_semantics<arbitrary>], iteration_bounds = array<i64: 1>, scalar_prefetch = 0 : i64, scratch_operands = 0 : i64, tpu.core_type = #tpu.core_type<tc>, window_params = [{pipeline_mode = #tpu.pipeline_mode<synchronous>, transform_indices = @transform_0, window_bounds = array<i64: 16, 32>}, {pipeline_mode = #tpu.pipeline_mode<synchronous>, transform_indices = @transform_1, window_bounds = array<i64: 5, 32>}, {pipeline_mode = #tpu.pipeline_mode<synchronous>, transform_indices = @transform_2, window_bounds = array<i64: 16, 64>}, {pipeline_mode = #tpu.pipeline_mode<synchronous>, transform_indices = @transform_3, window_bounds = array<i64: 4, 16, 16>}, {pipeline_mode = #tpu.pipeline_mode<synchronous>, transform_indices = @transform_4, window_bounds = array<i64: 2, 32, 256>}, {pipeline_mode = #tpu.pipeline_mode<synchronous>, transform_indices = @transform_5, window_bounds = array<i64: 2, 64, 32>}, {pipeline_mode = #tpu.pipeline_mode<synchronous>, transform_indices = @transform_6, window_bounds = array<i64: 2, 32, 128>}, {pipeline_mode = #tpu.pipeline_mode<synchronous>, transform_indices = @transform_7, window_bounds = array<i64: 2, 64, 32>}, {pipeline_mode = #tpu.pipeline_mode<synchronous>, transform_indices = @transform_8, window_bounds = array<i64: 32, 128>}, {pipeline_mode = #tpu.pipeline_mode<synchronous>, transform_indices = @transform_9, window_bounds = array<i64: 16, 128>}, {pipeline_mode = #tpu.pipeline_mode<synchronous>, transform_indices = @transform_10, window_bounds = array<i64: 16, 32>}]} {
    %c0 = arith.constant 0 : index
    %c0_0 = arith.constant 0 : index
    %0 = vector.load %arg1[%c0, %c0_0] : memref<16x32xf32, #tpu.memory_space<vmem>>, vector<16x32xf32>
    %c0_1 = arith.constant 0 : index
    %c0_2 = arith.constant 0 : index
    %1 = vector.load %arg2[%c0_1, %c0_2] : memref<5x32xf32, #tpu.memory_space<vmem>>, vector<5x32xf32>
    %c0_3 = arith.constant 0 : index
    %c0_4 = arith.constant 0 : index
    %2 = vector.load %arg3[%c0_3, %c0_4] : memref<16x64xf32, #tpu.memory_space<vmem>>, vector<16x32xf32>
    %c0_5 = arith.constant 0 : index
    %c32 = arith.constant 32 : index
    %3 = vector.load %arg3[%c0_5, %c32] : memref<16x64xf32, #tpu.memory_space<vmem>>, vector<16x32xf32>
    %4 = vector.extract_strided_slice %1 {offsets = [0, 0], sizes = [1, 32], strides = [1, 1]} : vector<5x32xf32> to vector<1x32xf32>
    %5 = arith.mulf %0, %0 : vector<16x32xf32>
    %cst = arith.constant dense<0.000000e+00> : vector<16xf32>
    %6 = vector.multi_reduction <add>, %5, %cst [1] : vector<16x32xf32> to vector<16xf32>
    %7 = vector.shape_cast %6 : vector<16xf32> to vector<16x1xf32>
    %cst_6 = arith.constant 3.200000e+01 : f32
    %8 = vector.broadcast %cst_6 : f32 to vector<16x1xf32>
    %9 = arith.divf %7, %8 : vector<16x1xf32>
    %cst_7 = arith.constant 9.99999974E-6 : f32
    %10 = vector.broadcast %cst_7 : f32 to vector<16x1xf32>
    %11 = arith.addf %9, %10 : vector<16x1xf32>
    %12 = math.rsqrt %11 : vector<16x1xf32>
    %13 = vector.broadcast %12 : vector<16x1xf32> to vector<16x32xf32>
    %14 = arith.mulf %0, %13 : vector<16x32xf32>
    %15 = vector.broadcast %4 : vector<1x32xf32> to vector<16x32xf32>
    %16 = arith.mulf %14, %15 : vector<16x32xf32>
    %17 = arith.truncf %16 : vector<16x32xf32> to vector<16x32xbf16>
    %c0_8 = arith.constant 0 : index
    %c0_9 = arith.constant 0 : index
    %c0_10 = arith.constant 0 : index
    %18 = vector.load %arg5[%c0_8, %c0_9, %c0_10] : memref<2x32x256xbf16, #tpu.memory_space<vmem>>, vector<1x32x256xbf16>
    %19 = vector.shape_cast %18 : vector<1x32x256xbf16> to vector<32x256xbf16>
    %cst_11 = arith.constant dense<0.000000e+00> : vector<16x256xf32>
    %20 = tpu.matmul %17, %19, %cst_11 {dimension_numbers = #tpu.dot_dimension_numbers<[1], [0], [0], [1], [0, 0, 1, 1], [], []>} : vector<16x32xbf16>, vector<32x256xbf16>, vector<16x256xf32> -> vector<16x256xf32>
    %21 = vector.extract_strided_slice %20 {offsets = [0, 0], sizes = [16, 32], strides = [1, 1]} : vector<16x256xf32> to vector<16x32xf32>
    %22 = vector.extract_strided_slice %20 {offsets = [0, 32], sizes = [16, 32], strides = [1, 1]} : vector<16x256xf32> to vector<16x32xf32>
    %23 = vector.extract_strided_slice %20 {offsets = [0, 64], sizes = [16, 32], strides = [1, 1]} : vector<16x256xf32> to vector<16x32xf32>
    %24 = vector.extract_strided_slice %20 {offsets = [0, 96], sizes = [16, 32], strides = [1, 1]} : vector<16x256xf32> to vector<16x32xf32>
    %25 = vector.extract_strided_slice %20 {offsets = [0, 128], sizes = [16, 64], strides = [1, 1]} : vector<16x256xf32> to vector<16x64xf32>
    %26 = vector.extract_strided_slice %20 {offsets = [0, 192], sizes = [16, 64], strides = [1, 1]} : vector<16x256xf32> to vector<16x64xf32>
    %27 = arith.mulf %21, %3 : vector<16x32xf32>
    %28 = arith.mulf %22, %2 : vector<16x32xf32>
    %29 = arith.addf %27, %28 : vector<16x32xf32>
    %30 = arith.truncf %29 : vector<16x32xf32> to vector<16x32xbf16>
    %31 = arith.mulf %23, %3 : vector<16x32xf32>
    %32 = arith.mulf %24, %2 : vector<16x32xf32>
    %33 = arith.addf %31, %32 : vector<16x32xf32>
    %cst_12 = arith.constant 0.353553385 : f32
    %34 = vector.broadcast %cst_12 : f32 to vector<16x32xf32>
    %35 = arith.mulf %33, %34 : vector<16x32xf32>
    %36 = arith.truncf %35 : vector<16x32xf32> to vector<16x32xbf16>
    %37 = arith.truncf %25 : vector<16x64xf32> to vector<16x64xbf16>
    %c0_13 = arith.constant 0 : index
    %c0_14 = arith.constant 0 : index
    %c0_15 = arith.constant 0 : index
    %38 = vector.load %arg6[%c0_13, %c0_14, %c0_15] : memref<2x64x32xbf16, #tpu.memory_space<vmem>>, vector<1x64x32xbf16>
    %39 = vector.shape_cast %38 : vector<1x64x32xbf16> to vector<64x32xbf16>
    %cst_16 = arith.constant 0.000000e+00 : f32
    %40 = vector.broadcast %cst_16 : f32 to vector<16x32xf32>
    %41 = vector.extract_strided_slice %30 {offsets = [0, 0], sizes = [16, 8], strides = [1, 1]} : vector<16x32xbf16> to vector<16x8xbf16>
    %42 = vector.extract_strided_slice %36 {offsets = [0, 0], sizes = [16, 8], strides = [1, 1]} : vector<16x32xbf16> to vector<16x8xbf16>
    %43 = vector.extract_strided_slice %37 {offsets = [0, 0], sizes = [16, 16], strides = [1, 1]} : vector<16x64xbf16> to vector<16x16xbf16>
    %cst_17 = arith.constant dense<0.000000e+00> : vector<16x16xf32>
    %44 = tpu.matmul %41, %42, %cst_17 {dimension_numbers = #tpu.dot_dimension_numbers<[1], [1], [0], [0], [0, 0, 1, 0], [], []>} : vector<16x8xbf16>, vector<16x8xbf16>, vector<16x16xf32> -> vector<16x16xf32>
    %c0_18 = arith.constant 0 : index
    %c0_19 = arith.constant 0 : index
    %c0_20 = arith.constant 0 : index
    %45 = vector.load %arg4[%c0_18, %c0_19, %c0_20] : memref<4x16x16xf32, #tpu.memory_space<vmem>>, vector<1x16x16xf32>
    %46 = vector.shape_cast %45 : vector<1x16x16xf32> to vector<16x16xf32>
    %47 = arith.mulf %44, %46 : vector<16x16xf32>
    %48 = math.absf %47 : vector<16x16xf32>
    %cst_21 = arith.constant dense<0.000000e+00> : vector<16xf32>
    %49 = vector.multi_reduction <add>, %48, %cst_21 [1] : vector<16x16xf32> to vector<16xf32>
    %50 = vector.shape_cast %49 : vector<16xf32> to vector<16x1xf32>
    %cst_22 = arith.constant 1.000000e+00 : f32
    %cst_23 = arith.constant 5.000000e+04 : f32
    %51 = vector.broadcast %cst_22 : f32 to vector<16x1xf32>
    %52 = arith.maximumf %51, %50 : vector<16x1xf32>
    %53 = vector.broadcast %cst_23 : f32 to vector<16x1xf32>
    %54 = arith.minimumf %53, %52 : vector<16x1xf32>
    %55 = vector.broadcast %54 : vector<16x1xf32> to vector<16x16xf32>
    %56 = arith.divf %47, %55 : vector<16x16xf32>
    %57 = arith.truncf %56 : vector<16x16xf32> to vector<16x16xbf16>
    %cst_24 = arith.constant dense<0.000000e+00> : vector<16x16xf32>
    %58 = tpu.matmul %57, %43, %cst_24 {dimension_numbers = #tpu.dot_dimension_numbers<[1], [0], [0], [1], [0, 0, 1, 1], [], []>} : vector<16x16xbf16>, vector<16x16xbf16>, vector<16x16xf32> -> vector<16x16xf32>
    %59 = arith.mulf %58, %58 : vector<16x16xf32>
    %cst_25 = arith.constant dense<0.000000e+00> : vector<16xf32>
    %60 = vector.multi_reduction <add>, %59, %cst_25 [1] : vector<16x16xf32> to vector<16xf32>
    %61 = vector.shape_cast %60 : vector<16xf32> to vector<16x1xf32>
    %cst_26 = arith.constant 1.600000e+01 : f32
    %62 = vector.broadcast %cst_26 : f32 to vector<16x1xf32>
    %63 = arith.divf %61, %62 : vector<16x1xf32>
    %cst_27 = arith.constant 9.99999974E-6 : f32
    %64 = vector.broadcast %cst_27 : f32 to vector<16x1xf32>
    %65 = arith.addf %63, %64 : vector<16x1xf32>
    %66 = math.rsqrt %65 : vector<16x1xf32>
    %67 = vector.broadcast %66 : vector<16x1xf32> to vector<16x16xf32>
    %68 = arith.mulf %58, %67 : vector<16x16xf32>
    %69 = vector.extract_strided_slice %26 {offsets = [0, 0], sizes = [16, 16], strides = [1, 1]} : vector<16x64xf32> to vector<16x16xf32>
    %70 = arith.negf %69 : vector<16x16xf32>
    %71 = math.exp %70 : vector<16x16xf32>
    %cst_28 = arith.constant 1.000000e+00 : f32
    %72 = vector.broadcast %cst_28 : f32 to vector<16x16xf32>
    %73 = arith.addf %72, %71 : vector<16x16xf32>
    %74 = arith.divf %72, %73 : vector<16x16xf32>
    %75 = arith.mulf %69, %74 : vector<16x16xf32>
    %76 = arith.mulf %75, %68 : vector<16x16xf32>
    %77 = arith.truncf %76 : vector<16x16xf32> to vector<16x16xbf16>
    %78 = vector.extract_strided_slice %39 {offsets = [0, 0], sizes = [16, 32], strides = [1, 1]} : vector<64x32xbf16> to vector<16x32xbf16>
    %cst_29 = arith.constant dense<0.000000e+00> : vector<16x32xf32>
    %79 = tpu.matmul %77, %78, %cst_29 {dimension_numbers = #tpu.dot_dimension_numbers<[1], [0], [0], [1], [0, 0, 1, 1], [], []>} : vector<16x16xbf16>, vector<16x32xbf16>, vector<16x32xf32> -> vector<16x32xf32>
    %80 = arith.addf %40, %79 : vector<16x32xf32>
    %81 = vector.extract_strided_slice %30 {offsets = [0, 8], sizes = [16, 8], strides = [1, 1]} : vector<16x32xbf16> to vector<16x8xbf16>
    %82 = vector.extract_strided_slice %36 {offsets = [0, 8], sizes = [16, 8], strides = [1, 1]} : vector<16x32xbf16> to vector<16x8xbf16>
    %83 = vector.extract_strided_slice %37 {offsets = [0, 16], sizes = [16, 16], strides = [1, 1]} : vector<16x64xbf16> to vector<16x16xbf16>
    %cst_30 = arith.constant dense<0.000000e+00> : vector<16x16xf32>
    %84 = tpu.matmul %81, %82, %cst_30 {dimension_numbers = #tpu.dot_dimension_numbers<[1], [1], [0], [0], [0, 0, 1, 0], [], []>} : vector<16x8xbf16>, vector<16x8xbf16>, vector<16x16xf32> -> vector<16x16xf32>
    %c1 = arith.constant 1 : index
    %c0_31 = arith.constant 0 : index
    %c0_32 = arith.constant 0 : index
    %85 = vector.load %arg4[%c1, %c0_31, %c0_32] : memref<4x16x16xf32, #tpu.memory_space<vmem>>, vector<1x16x16xf32>
    %86 = vector.shape_cast %85 : vector<1x16x16xf32> to vector<16x16xf32>
    %87 = arith.mulf %84, %86 : vector<16x16xf32>
    %88 = math.absf %87 : vector<16x16xf32>
    %cst_33 = arith.constant dense<0.000000e+00> : vector<16xf32>
    %89 = vector.multi_reduction <add>, %88, %cst_33 [1] : vector<16x16xf32> to vector<16xf32>
    %90 = vector.shape_cast %89 : vector<16xf32> to vector<16x1xf32>
    %cst_34 = arith.constant 1.000000e+00 : f32
    %cst_35 = arith.constant 5.000000e+04 : f32
    %91 = vector.broadcast %cst_34 : f32 to vector<16x1xf32>
    %92 = arith.maximumf %91, %90 : vector<16x1xf32>
    %93 = vector.broadcast %cst_35 : f32 to vector<16x1xf32>
    %94 = arith.minimumf %93, %92 : vector<16x1xf32>
    %95 = vector.broadcast %94 : vector<16x1xf32> to vector<16x16xf32>
    %96 = arith.divf %87, %95 : vector<16x16xf32>
    %97 = arith.truncf %96 : vector<16x16xf32> to vector<16x16xbf16>
    %cst_36 = arith.constant dense<0.000000e+00> : vector<16x16xf32>
    %98 = tpu.matmul %97, %83, %cst_36 {dimension_numbers = #tpu.dot_dimension_numbers<[1], [0], [0], [1], [0, 0, 1, 1], [], []>} : vector<16x16xbf16>, vector<16x16xbf16>, vector<16x16xf32> -> vector<16x16xf32>
    %99 = arith.mulf %98, %98 : vector<16x16xf32>
    %cst_37 = arith.constant dense<0.000000e+00> : vector<16xf32>
    %100 = vector.multi_reduction <add>, %99, %cst_37 [1] : vector<16x16xf32> to vector<16xf32>
    %101 = vector.shape_cast %100 : vector<16xf32> to vector<16x1xf32>
    %cst_38 = arith.constant 1.600000e+01 : f32
    %102 = vector.broadcast %cst_38 : f32 to vector<16x1xf32>
    %103 = arith.divf %101, %102 : vector<16x1xf32>
    %cst_39 = arith.constant 9.99999974E-6 : f32
    %104 = vector.broadcast %cst_39 : f32 to vector<16x1xf32>
    %105 = arith.addf %103, %104 : vector<16x1xf32>
    %106 = math.rsqrt %105 : vector<16x1xf32>
    %107 = vector.broadcast %106 : vector<16x1xf32> to vector<16x16xf32>
    %108 = arith.mulf %98, %107 : vector<16x16xf32>
    %109 = vector.extract_strided_slice %26 {offsets = [0, 16], sizes = [16, 16], strides = [1, 1]} : vector<16x64xf32> to vector<16x16xf32>
    %110 = arith.negf %109 : vector<16x16xf32>
    %111 = math.exp %110 : vector<16x16xf32>
    %cst_40 = arith.constant 1.000000e+00 : f32
    %112 = vector.broadcast %cst_40 : f32 to vector<16x16xf32>
    %113 = arith.addf %112, %111 : vector<16x16xf32>
    %114 = arith.divf %112, %113 : vector<16x16xf32>
    %115 = arith.mulf %109, %114 : vector<16x16xf32>
    %116 = arith.mulf %115, %108 : vector<16x16xf32>
    %117 = arith.truncf %116 : vector<16x16xf32> to vector<16x16xbf16>
    %118 = vector.extract_strided_slice %39 {offsets = [16, 0], sizes = [16, 32], strides = [1, 1]} : vector<64x32xbf16> to vector<16x32xbf16>
    %cst_41 = arith.constant dense<0.000000e+00> : vector<16x32xf32>
    %119 = tpu.matmul %117, %118, %cst_41 {dimension_numbers = #tpu.dot_dimension_numbers<[1], [0], [0], [1], [0, 0, 1, 1], [], []>} : vector<16x16xbf16>, vector<16x32xbf16>, vector<16x32xf32> -> vector<16x32xf32>
    %120 = arith.addf %80, %119 : vector<16x32xf32>
    %121 = vector.extract_strided_slice %30 {offsets = [0, 16], sizes = [16, 8], strides = [1, 1]} : vector<16x32xbf16> to vector<16x8xbf16>
    %122 = vector.extract_strided_slice %36 {offsets = [0, 16], sizes = [16, 8], strides = [1, 1]} : vector<16x32xbf16> to vector<16x8xbf16>
    %123 = vector.extract_strided_slice %37 {offsets = [0, 32], sizes = [16, 16], strides = [1, 1]} : vector<16x64xbf16> to vector<16x16xbf16>
    %cst_42 = arith.constant dense<0.000000e+00> : vector<16x16xf32>
    %124 = tpu.matmul %121, %122, %cst_42 {dimension_numbers = #tpu.dot_dimension_numbers<[1], [1], [0], [0], [0, 0, 1, 0], [], []>} : vector<16x8xbf16>, vector<16x8xbf16>, vector<16x16xf32> -> vector<16x16xf32>
    %c2 = arith.constant 2 : index
    %c0_43 = arith.constant 0 : index
    %c0_44 = arith.constant 0 : index
    %125 = vector.load %arg4[%c2, %c0_43, %c0_44] : memref<4x16x16xf32, #tpu.memory_space<vmem>>, vector<1x16x16xf32>
    %126 = vector.shape_cast %125 : vector<1x16x16xf32> to vector<16x16xf32>
    %127 = arith.mulf %124, %126 : vector<16x16xf32>
    %128 = math.absf %127 : vector<16x16xf32>
    %cst_45 = arith.constant dense<0.000000e+00> : vector<16xf32>
    %129 = vector.multi_reduction <add>, %128, %cst_45 [1] : vector<16x16xf32> to vector<16xf32>
    %130 = vector.shape_cast %129 : vector<16xf32> to vector<16x1xf32>
    %cst_46 = arith.constant 1.000000e+00 : f32
    %cst_47 = arith.constant 5.000000e+04 : f32
    %131 = vector.broadcast %cst_46 : f32 to vector<16x1xf32>
    %132 = arith.maximumf %131, %130 : vector<16x1xf32>
    %133 = vector.broadcast %cst_47 : f32 to vector<16x1xf32>
    %134 = arith.minimumf %133, %132 : vector<16x1xf32>
    %135 = vector.broadcast %134 : vector<16x1xf32> to vector<16x16xf32>
    %136 = arith.divf %127, %135 : vector<16x16xf32>
    %137 = arith.truncf %136 : vector<16x16xf32> to vector<16x16xbf16>
    %cst_48 = arith.constant dense<0.000000e+00> : vector<16x16xf32>
    %138 = tpu.matmul %137, %123, %cst_48 {dimension_numbers = #tpu.dot_dimension_numbers<[1], [0], [0], [1], [0, 0, 1, 1], [], []>} : vector<16x16xbf16>, vector<16x16xbf16>, vector<16x16xf32> -> vector<16x16xf32>
    %139 = arith.mulf %138, %138 : vector<16x16xf32>
    %cst_49 = arith.constant dense<0.000000e+00> : vector<16xf32>
    %140 = vector.multi_reduction <add>, %139, %cst_49 [1] : vector<16x16xf32> to vector<16xf32>
    %141 = vector.shape_cast %140 : vector<16xf32> to vector<16x1xf32>
    %cst_50 = arith.constant 1.600000e+01 : f32
    %142 = vector.broadcast %cst_50 : f32 to vector<16x1xf32>
    %143 = arith.divf %141, %142 : vector<16x1xf32>
    %cst_51 = arith.constant 9.99999974E-6 : f32
    %144 = vector.broadcast %cst_51 : f32 to vector<16x1xf32>
    %145 = arith.addf %143, %144 : vector<16x1xf32>
    %146 = math.rsqrt %145 : vector<16x1xf32>
    %147 = vector.broadcast %146 : vector<16x1xf32> to vector<16x16xf32>
    %148 = arith.mulf %138, %147 : vector<16x16xf32>
    %149 = vector.extract_strided_slice %26 {offsets = [0, 32], sizes = [16, 16], strides = [1, 1]} : vector<16x64xf32> to vector<16x16xf32>
    %150 = arith.negf %149 : vector<16x16xf32>
    %151 = math.exp %150 : vector<16x16xf32>
    %cst_52 = arith.constant 1.000000e+00 : f32
    %152 = vector.broadcast %cst_52 : f32 to vector<16x16xf32>
    %153 = arith.addf %152, %151 : vector<16x16xf32>
    %154 = arith.divf %152, %153 : vector<16x16xf32>
    %155 = arith.mulf %149, %154 : vector<16x16xf32>
    %156 = arith.mulf %155, %148 : vector<16x16xf32>
    %157 = arith.truncf %156 : vector<16x16xf32> to vector<16x16xbf16>
    %158 = vector.extract_strided_slice %39 {offsets = [32, 0], sizes = [16, 32], strides = [1, 1]} : vector<64x32xbf16> to vector<16x32xbf16>
    %cst_53 = arith.constant dense<0.000000e+00> : vector<16x32xf32>
    %159 = tpu.matmul %157, %158, %cst_53 {dimension_numbers = #tpu.dot_dimension_numbers<[1], [0], [0], [1], [0, 0, 1, 1], [], []>} : vector<16x16xbf16>, vector<16x32xbf16>, vector<16x32xf32> -> vector<16x32xf32>
    %160 = arith.addf %120, %159 : vector<16x32xf32>
    %161 = vector.extract_strided_slice %30 {offsets = [0, 24], sizes = [16, 8], strides = [1, 1]} : vector<16x32xbf16> to vector<16x8xbf16>
    %162 = vector.extract_strided_slice %36 {offsets = [0, 24], sizes = [16, 8], strides = [1, 1]} : vector<16x32xbf16> to vector<16x8xbf16>
    %163 = vector.extract_strided_slice %37 {offsets = [0, 48], sizes = [16, 16], strides = [1, 1]} : vector<16x64xbf16> to vector<16x16xbf16>
    %cst_54 = arith.constant dense<0.000000e+00> : vector<16x16xf32>
    %164 = tpu.matmul %161, %162, %cst_54 {dimension_numbers = #tpu.dot_dimension_numbers<[1], [1], [0], [0], [0, 0, 1, 0], [], []>} : vector<16x8xbf16>, vector<16x8xbf16>, vector<16x16xf32> -> vector<16x16xf32>
    %c3 = arith.constant 3 : index
    %c0_55 = arith.constant 0 : index
    %c0_56 = arith.constant 0 : index
    %165 = vector.load %arg4[%c3, %c0_55, %c0_56] : memref<4x16x16xf32, #tpu.memory_space<vmem>>, vector<1x16x16xf32>
    %166 = vector.shape_cast %165 : vector<1x16x16xf32> to vector<16x16xf32>
    %167 = arith.mulf %164, %166 : vector<16x16xf32>
    %168 = math.absf %167 : vector<16x16xf32>
    %cst_57 = arith.constant dense<0.000000e+00> : vector<16xf32>
    %169 = vector.multi_reduction <add>, %168, %cst_57 [1] : vector<16x16xf32> to vector<16xf32>
    %170 = vector.shape_cast %169 : vector<16xf32> to vector<16x1xf32>
    %cst_58 = arith.constant 1.000000e+00 : f32
    %cst_59 = arith.constant 5.000000e+04 : f32
    %171 = vector.broadcast %cst_58 : f32 to vector<16x1xf32>
    %172 = arith.maximumf %171, %170 : vector<16x1xf32>
    %173 = vector.broadcast %cst_59 : f32 to vector<16x1xf32>
    %174 = arith.minimumf %173, %172 : vector<16x1xf32>
    %175 = vector.broadcast %174 : vector<16x1xf32> to vector<16x16xf32>
    %176 = arith.divf %167, %175 : vector<16x16xf32>
    %177 = arith.truncf %176 : vector<16x16xf32> to vector<16x16xbf16>
    %cst_60 = arith.constant dense<0.000000e+00> : vector<16x16xf32>
    %178 = tpu.matmul %177, %163, %cst_60 {dimension_numbers = #tpu.dot_dimension_numbers<[1], [0], [0], [1], [0, 0, 1, 1], [], []>} : vector<16x16xbf16>, vector<16x16xbf16>, vector<16x16xf32> -> vector<16x16xf32>
    %179 = arith.mulf %178, %178 : vector<16x16xf32>
    %cst_61 = arith.constant dense<0.000000e+00> : vector<16xf32>
    %180 = vector.multi_reduction <add>, %179, %cst_61 [1] : vector<16x16xf32> to vector<16xf32>
    %181 = vector.shape_cast %180 : vector<16xf32> to vector<16x1xf32>
    %cst_62 = arith.constant 1.600000e+01 : f32
    %182 = vector.broadcast %cst_62 : f32 to vector<16x1xf32>
    %183 = arith.divf %181, %182 : vector<16x1xf32>
    %cst_63 = arith.constant 9.99999974E-6 : f32
    %184 = vector.broadcast %cst_63 : f32 to vector<16x1xf32>
    %185 = arith.addf %183, %184 : vector<16x1xf32>
    %186 = math.rsqrt %185 : vector<16x1xf32>
    %187 = vector.broadcast %186 : vector<16x1xf32> to vector<16x16xf32>
    %188 = arith.mulf %178, %187 : vector<16x16xf32>
    %189 = vector.extract_strided_slice %26 {offsets = [0, 48], sizes = [16, 16], strides = [1, 1]} : vector<16x64xf32> to vector<16x16xf32>
    %190 = arith.negf %189 : vector<16x16xf32>
    %191 = math.exp %190 : vector<16x16xf32>
    %cst_64 = arith.constant 1.000000e+00 : f32
    %192 = vector.broadcast %cst_64 : f32 to vector<16x16xf32>
    %193 = arith.addf %192, %191 : vector<16x16xf32>
    %194 = arith.divf %192, %193 : vector<16x16xf32>
    %195 = arith.mulf %189, %194 : vector<16x16xf32>
    %196 = arith.mulf %195, %188 : vector<16x16xf32>
    %197 = arith.truncf %196 : vector<16x16xf32> to vector<16x16xbf16>
    %198 = vector.extract_strided_slice %39 {offsets = [48, 0], sizes = [16, 32], strides = [1, 1]} : vector<64x32xbf16> to vector<16x32xbf16>
    %cst_65 = arith.constant dense<0.000000e+00> : vector<16x32xf32>
    %199 = tpu.matmul %197, %198, %cst_65 {dimension_numbers = #tpu.dot_dimension_numbers<[1], [0], [0], [1], [0, 0, 1, 1], [], []>} : vector<16x16xbf16>, vector<16x32xbf16>, vector<16x32xf32> -> vector<16x32xf32>
    %200 = arith.addf %160, %199 : vector<16x32xf32>
    %201 = arith.addf %0, %200 : vector<16x32xf32>
    %202 = vector.extract_strided_slice %1 {offsets = [1, 0], sizes = [1, 32], strides = [1, 1]} : vector<5x32xf32> to vector<1x32xf32>
    %203 = arith.mulf %201, %201 : vector<16x32xf32>
    %cst_66 = arith.constant dense<0.000000e+00> : vector<16xf32>
    %204 = vector.multi_reduction <add>, %203, %cst_66 [1] : vector<16x32xf32> to vector<16xf32>
    %205 = vector.shape_cast %204 : vector<16xf32> to vector<16x1xf32>
    %cst_67 = arith.constant 3.200000e+01 : f32
    %206 = vector.broadcast %cst_67 : f32 to vector<16x1xf32>
    %207 = arith.divf %205, %206 : vector<16x1xf32>
    %cst_68 = arith.constant 9.99999974E-6 : f32
    %208 = vector.broadcast %cst_68 : f32 to vector<16x1xf32>
    %209 = arith.addf %207, %208 : vector<16x1xf32>
    %210 = math.rsqrt %209 : vector<16x1xf32>
    %211 = vector.broadcast %210 : vector<16x1xf32> to vector<16x32xf32>
    %212 = arith.mulf %201, %211 : vector<16x32xf32>
    %213 = vector.broadcast %202 : vector<1x32xf32> to vector<16x32xf32>
    %214 = arith.mulf %212, %213 : vector<16x32xf32>
    %215 = arith.truncf %214 : vector<16x32xf32> to vector<16x32xbf16>
    %c0_69 = arith.constant 0 : index
    %c0_70 = arith.constant 0 : index
    %c0_71 = arith.constant 0 : index
    %216 = vector.load %arg7[%c0_69, %c0_70, %c0_71] : memref<2x32x128xbf16, #tpu.memory_space<vmem>>, vector<1x32x128xbf16>
    %217 = vector.shape_cast %216 : vector<1x32x128xbf16> to vector<32x128xbf16>
    %cst_72 = arith.constant dense<0.000000e+00> : vector<16x128xf32>
    %218 = tpu.matmul %215, %217, %cst_72 {dimension_numbers = #tpu.dot_dimension_numbers<[1], [0], [0], [1], [0, 0, 1, 1], [], []>} : vector<16x32xbf16>, vector<32x128xbf16>, vector<16x128xf32> -> vector<16x128xf32>
    %219 = vector.extract_strided_slice %218 {offsets = [0, 0], sizes = [16, 64], strides = [1, 1]} : vector<16x128xf32> to vector<16x64xf32>
    %cst_73 = arith.constant 5.000000e-01 : f32
    %220 = vector.broadcast %cst_73 : f32 to vector<16x64xf32>
    %221 = arith.mulf %220, %219 : vector<16x64xf32>
    %cst_74 = arith.constant 0.707106769 : f32
    %222 = vector.broadcast %cst_74 : f32 to vector<16x64xf32>
    %223 = arith.mulf %219, %222 : vector<16x64xf32>
    %cst_75 = arith.constant 0.000000e+00 : f32
    %224 = vector.broadcast %cst_75 : f32 to vector<16x64xf32>
    %225 = arith.cmpf oge, %223, %224 : vector<16x64xf32>
    %cst_76 = arith.constant 1.000000e+00 : f32
    %cst_77 = arith.constant -1.000000e+00 : f32
    %226 = vector.broadcast %cst_76 : f32 to vector<16x64xf32>
    %227 = vector.broadcast %cst_77 : f32 to vector<16x64xf32>
    %228 = arith.select %225, %226, %227 : vector<16x64xi1>, vector<16x64xf32>
    %229 = math.absf %223 : vector<16x64xf32>
    %cst_78 = arith.constant 0.327591091 : f32
    %230 = vector.broadcast %cst_78 : f32 to vector<16x64xf32>
    %231 = arith.mulf %230, %229 : vector<16x64xf32>
    %cst_79 = arith.constant 1.000000e+00 : f32
    %232 = vector.broadcast %cst_79 : f32 to vector<16x64xf32>
    %233 = arith.addf %232, %231 : vector<16x64xf32>
    %cst_80 = arith.constant 1.000000e+00 : f32
    %234 = vector.broadcast %cst_80 : f32 to vector<16x64xf32>
    %235 = arith.divf %234, %233 : vector<16x64xf32>
    %cst_81 = arith.constant 1.06140542 : f32
    %236 = vector.broadcast %cst_81 : f32 to vector<16x64xf32>
    %237 = arith.mulf %236, %235 : vector<16x64xf32>
    %cst_82 = arith.constant -1.45315206 : f32
    %238 = vector.broadcast %cst_82 : f32 to vector<16x64xf32>
    %239 = arith.addf %237, %238 : vector<16x64xf32>
    %240 = arith.mulf %239, %235 : vector<16x64xf32>
    %cst_83 = arith.constant 1.42141378 : f32
    %241 = vector.broadcast %cst_83 : f32 to vector<16x64xf32>
    %242 = arith.addf %240, %241 : vector<16x64xf32>
    %243 = arith.mulf %242, %235 : vector<16x64xf32>
    %cst_84 = arith.constant -0.284496725 : f32
    %244 = vector.broadcast %cst_84 : f32 to vector<16x64xf32>
    %245 = arith.addf %243, %244 : vector<16x64xf32>
    %246 = arith.mulf %245, %235 : vector<16x64xf32>
    %cst_85 = arith.constant 0.254829586 : f32
    %247 = vector.broadcast %cst_85 : f32 to vector<16x64xf32>
    %248 = arith.addf %246, %247 : vector<16x64xf32>
    %249 = arith.mulf %248, %235 : vector<16x64xf32>
    %cst_86 = arith.constant 0.000000e+00 : f32
    %250 = vector.broadcast %cst_86 : f32 to vector<16x64xf32>
    %251 = arith.subf %250, %229 : vector<16x64xf32>
    %252 = arith.mulf %251, %229 : vector<16x64xf32>
    %253 = math.exp %252 : vector<16x64xf32>
    %254 = arith.mulf %249, %253 : vector<16x64xf32>
    %cst_87 = arith.constant 1.000000e+00 : f32
    %255 = vector.broadcast %cst_87 : f32 to vector<16x64xf32>
    %256 = arith.subf %255, %254 : vector<16x64xf32>
    %257 = arith.mulf %228, %256 : vector<16x64xf32>
    %cst_88 = arith.constant 1.000000e+00 : f32
    %258 = vector.broadcast %cst_88 : f32 to vector<16x64xf32>
    %259 = arith.addf %258, %257 : vector<16x64xf32>
    %260 = arith.mulf %221, %259 : vector<16x64xf32>
    %261 = vector.extract_strided_slice %218 {offsets = [0, 64], sizes = [16, 64], strides = [1, 1]} : vector<16x128xf32> to vector<16x64xf32>
    %262 = arith.mulf %260, %261 : vector<16x64xf32>
    %263 = arith.truncf %262 : vector<16x64xf32> to vector<16x64xbf16>
    %c0_89 = arith.constant 0 : index
    %c0_90 = arith.constant 0 : index
    %c0_91 = arith.constant 0 : index
    %264 = vector.load %arg8[%c0_89, %c0_90, %c0_91] : memref<2x64x32xbf16, #tpu.memory_space<vmem>>, vector<1x64x32xbf16>
    %265 = vector.shape_cast %264 : vector<1x64x32xbf16> to vector<64x32xbf16>
    %cst_92 = arith.constant dense<0.000000e+00> : vector<16x32xf32>
    %266 = tpu.matmul %263, %265, %cst_92 {dimension_numbers = #tpu.dot_dimension_numbers<[1], [0], [0], [1], [0, 0, 1, 1], [], []>} : vector<16x64xbf16>, vector<64x32xbf16>, vector<16x32xf32> -> vector<16x32xf32>
    %267 = arith.addf %201, %266 : vector<16x32xf32>
    %268 = vector.extract_strided_slice %1 {offsets = [2, 0], sizes = [1, 32], strides = [1, 1]} : vector<5x32xf32> to vector<1x32xf32>
    %269 = arith.mulf %267, %267 : vector<16x32xf32>
    %cst_93 = arith.constant dense<0.000000e+00> : vector<16xf32>
    %270 = vector.multi_reduction <add>, %269, %cst_93 [1] : vector<16x32xf32> to vector<16xf32>
    %271 = vector.shape_cast %270 : vector<16xf32> to vector<16x1xf32>
    %cst_94 = arith.constant 3.200000e+01 : f32
    %272 = vector.broadcast %cst_94 : f32 to vector<16x1xf32>
    %273 = arith.divf %271, %272 : vector<16x1xf32>
    %cst_95 = arith.constant 9.99999974E-6 : f32
    %274 = vector.broadcast %cst_95 : f32 to vector<16x1xf32>
    %275 = arith.addf %273, %274 : vector<16x1xf32>
    %276 = math.rsqrt %275 : vector<16x1xf32>
    %277 = vector.broadcast %276 : vector<16x1xf32> to vector<16x32xf32>
    %278 = arith.mulf %267, %277 : vector<16x32xf32>
    %279 = vector.broadcast %268 : vector<1x32xf32> to vector<16x32xf32>
    %280 = arith.mulf %278, %279 : vector<16x32xf32>
    %281 = arith.truncf %280 : vector<16x32xf32> to vector<16x32xbf16>
    %c1_96 = arith.constant 1 : index
    %c0_97 = arith.constant 0 : index
    %c0_98 = arith.constant 0 : index
    %282 = vector.load %arg5[%c1_96, %c0_97, %c0_98] : memref<2x32x256xbf16, #tpu.memory_space<vmem>>, vector<1x32x256xbf16>
    %283 = vector.shape_cast %282 : vector<1x32x256xbf16> to vector<32x256xbf16>
    %cst_99 = arith.constant dense<0.000000e+00> : vector<16x256xf32>
    %284 = tpu.matmul %281, %283, %cst_99 {dimension_numbers = #tpu.dot_dimension_numbers<[1], [0], [0], [1], [0, 0, 1, 1], [], []>} : vector<16x32xbf16>, vector<32x256xbf16>, vector<16x256xf32> -> vector<16x256xf32>
    %285 = vector.extract_strided_slice %284 {offsets = [0, 0], sizes = [16, 32], strides = [1, 1]} : vector<16x256xf32> to vector<16x32xf32>
    %286 = vector.extract_strided_slice %284 {offsets = [0, 32], sizes = [16, 32], strides = [1, 1]} : vector<16x256xf32> to vector<16x32xf32>
    %287 = vector.extract_strided_slice %284 {offsets = [0, 64], sizes = [16, 32], strides = [1, 1]} : vector<16x256xf32> to vector<16x32xf32>
    %288 = vector.extract_strided_slice %284 {offsets = [0, 96], sizes = [16, 32], strides = [1, 1]} : vector<16x256xf32> to vector<16x32xf32>
    %289 = vector.extract_strided_slice %284 {offsets = [0, 128], sizes = [16, 64], strides = [1, 1]} : vector<16x256xf32> to vector<16x64xf32>
    %290 = vector.extract_strided_slice %284 {offsets = [0, 192], sizes = [16, 64], strides = [1, 1]} : vector<16x256xf32> to vector<16x64xf32>
    %291 = arith.mulf %285, %3 : vector<16x32xf32>
    %292 = arith.mulf %286, %2 : vector<16x32xf32>
    %293 = arith.addf %291, %292 : vector<16x32xf32>
    %294 = arith.truncf %293 : vector<16x32xf32> to vector<16x32xbf16>
    %295 = arith.mulf %287, %3 : vector<16x32xf32>
    %296 = arith.mulf %288, %2 : vector<16x32xf32>
    %297 = arith.addf %295, %296 : vector<16x32xf32>
    %cst_100 = arith.constant 0.353553385 : f32
    %298 = vector.broadcast %cst_100 : f32 to vector<16x32xf32>
    %299 = arith.mulf %297, %298 : vector<16x32xf32>
    %300 = arith.truncf %299 : vector<16x32xf32> to vector<16x32xbf16>
    %301 = arith.truncf %289 : vector<16x64xf32> to vector<16x64xbf16>
    %c1_101 = arith.constant 1 : index
    %c0_102 = arith.constant 0 : index
    %c0_103 = arith.constant 0 : index
    %302 = vector.load %arg6[%c1_101, %c0_102, %c0_103] : memref<2x64x32xbf16, #tpu.memory_space<vmem>>, vector<1x64x32xbf16>
    %303 = vector.shape_cast %302 : vector<1x64x32xbf16> to vector<64x32xbf16>
    %cst_104 = arith.constant 0.000000e+00 : f32
    %304 = vector.broadcast %cst_104 : f32 to vector<16x32xf32>
    %305 = vector.extract_strided_slice %294 {offsets = [0, 0], sizes = [16, 8], strides = [1, 1]} : vector<16x32xbf16> to vector<16x8xbf16>
    %306 = vector.extract_strided_slice %300 {offsets = [0, 0], sizes = [16, 8], strides = [1, 1]} : vector<16x32xbf16> to vector<16x8xbf16>
    %307 = vector.extract_strided_slice %301 {offsets = [0, 0], sizes = [16, 16], strides = [1, 1]} : vector<16x64xbf16> to vector<16x16xbf16>
    %cst_105 = arith.constant dense<0.000000e+00> : vector<16x16xf32>
    %308 = tpu.matmul %305, %306, %cst_105 {dimension_numbers = #tpu.dot_dimension_numbers<[1], [1], [0], [0], [0, 0, 1, 0], [], []>} : vector<16x8xbf16>, vector<16x8xbf16>, vector<16x16xf32> -> vector<16x16xf32>
    %c0_106 = arith.constant 0 : index
    %c0_107 = arith.constant 0 : index
    %c0_108 = arith.constant 0 : index
    %309 = vector.load %arg4[%c0_106, %c0_107, %c0_108] : memref<4x16x16xf32, #tpu.memory_space<vmem>>, vector<1x16x16xf32>
    %310 = vector.shape_cast %309 : vector<1x16x16xf32> to vector<16x16xf32>
    %311 = arith.mulf %308, %310 : vector<16x16xf32>
    %312 = math.absf %311 : vector<16x16xf32>
    %cst_109 = arith.constant dense<0.000000e+00> : vector<16xf32>
    %313 = vector.multi_reduction <add>, %312, %cst_109 [1] : vector<16x16xf32> to vector<16xf32>
    %314 = vector.shape_cast %313 : vector<16xf32> to vector<16x1xf32>
    %cst_110 = arith.constant 1.000000e+00 : f32
    %cst_111 = arith.constant 5.000000e+04 : f32
    %315 = vector.broadcast %cst_110 : f32 to vector<16x1xf32>
    %316 = arith.maximumf %315, %314 : vector<16x1xf32>
    %317 = vector.broadcast %cst_111 : f32 to vector<16x1xf32>
    %318 = arith.minimumf %317, %316 : vector<16x1xf32>
    %319 = vector.broadcast %318 : vector<16x1xf32> to vector<16x16xf32>
    %320 = arith.divf %311, %319 : vector<16x16xf32>
    %321 = arith.truncf %320 : vector<16x16xf32> to vector<16x16xbf16>
    %cst_112 = arith.constant dense<0.000000e+00> : vector<16x16xf32>
    %322 = tpu.matmul %321, %307, %cst_112 {dimension_numbers = #tpu.dot_dimension_numbers<[1], [0], [0], [1], [0, 0, 1, 1], [], []>} : vector<16x16xbf16>, vector<16x16xbf16>, vector<16x16xf32> -> vector<16x16xf32>
    %323 = arith.mulf %322, %322 : vector<16x16xf32>
    %cst_113 = arith.constant dense<0.000000e+00> : vector<16xf32>
    %324 = vector.multi_reduction <add>, %323, %cst_113 [1] : vector<16x16xf32> to vector<16xf32>
    %325 = vector.shape_cast %324 : vector<16xf32> to vector<16x1xf32>
    %cst_114 = arith.constant 1.600000e+01 : f32
    %326 = vector.broadcast %cst_114 : f32 to vector<16x1xf32>
    %327 = arith.divf %325, %326 : vector<16x1xf32>
    %cst_115 = arith.constant 9.99999974E-6 : f32
    %328 = vector.broadcast %cst_115 : f32 to vector<16x1xf32>
    %329 = arith.addf %327, %328 : vector<16x1xf32>
    %330 = math.rsqrt %329 : vector<16x1xf32>
    %331 = vector.broadcast %330 : vector<16x1xf32> to vector<16x16xf32>
    %332 = arith.mulf %322, %331 : vector<16x16xf32>
    %333 = vector.extract_strided_slice %290 {offsets = [0, 0], sizes = [16, 16], strides = [1, 1]} : vector<16x64xf32> to vector<16x16xf32>
    %334 = arith.negf %333 : vector<16x16xf32>
    %335 = math.exp %334 : vector<16x16xf32>
    %cst_116 = arith.constant 1.000000e+00 : f32
    %336 = vector.broadcast %cst_116 : f32 to vector<16x16xf32>
    %337 = arith.addf %336, %335 : vector<16x16xf32>
    %338 = arith.divf %336, %337 : vector<16x16xf32>
    %339 = arith.mulf %333, %338 : vector<16x16xf32>
    %340 = arith.mulf %339, %332 : vector<16x16xf32>
    %341 = arith.truncf %340 : vector<16x16xf32> to vector<16x16xbf16>
    %342 = vector.extract_strided_slice %303 {offsets = [0, 0], sizes = [16, 32], strides = [1, 1]} : vector<64x32xbf16> to vector<16x32xbf16>
    %cst_117 = arith.constant dense<0.000000e+00> : vector<16x32xf32>
    %343 = tpu.matmul %341, %342, %cst_117 {dimension_numbers = #tpu.dot_dimension_numbers<[1], [0], [0], [1], [0, 0, 1, 1], [], []>} : vector<16x16xbf16>, vector<16x32xbf16>, vector<16x32xf32> -> vector<16x32xf32>
    %344 = arith.addf %304, %343 : vector<16x32xf32>
    %345 = vector.extract_strided_slice %294 {offsets = [0, 8], sizes = [16, 8], strides = [1, 1]} : vector<16x32xbf16> to vector<16x8xbf16>
    %346 = vector.extract_strided_slice %300 {offsets = [0, 8], sizes = [16, 8], strides = [1, 1]} : vector<16x32xbf16> to vector<16x8xbf16>
    %347 = vector.extract_strided_slice %301 {offsets = [0, 16], sizes = [16, 16], strides = [1, 1]} : vector<16x64xbf16> to vector<16x16xbf16>
    %cst_118 = arith.constant dense<0.000000e+00> : vector<16x16xf32>
    %348 = tpu.matmul %345, %346, %cst_118 {dimension_numbers = #tpu.dot_dimension_numbers<[1], [1], [0], [0], [0, 0, 1, 0], [], []>} : vector<16x8xbf16>, vector<16x8xbf16>, vector<16x16xf32> -> vector<16x16xf32>
    %c1_119 = arith.constant 1 : index
    %c0_120 = arith.constant 0 : index
    %c0_121 = arith.constant 0 : index
    %349 = vector.load %arg4[%c1_119, %c0_120, %c0_121] : memref<4x16x16xf32, #tpu.memory_space<vmem>>, vector<1x16x16xf32>
    %350 = vector.shape_cast %349 : vector<1x16x16xf32> to vector<16x16xf32>
    %351 = arith.mulf %348, %350 : vector<16x16xf32>
    %352 = math.absf %351 : vector<16x16xf32>
    %cst_122 = arith.constant dense<0.000000e+00> : vector<16xf32>
    %353 = vector.multi_reduction <add>, %352, %cst_122 [1] : vector<16x16xf32> to vector<16xf32>
    %354 = vector.shape_cast %353 : vector<16xf32> to vector<16x1xf32>
    %cst_123 = arith.constant 1.000000e+00 : f32
    %cst_124 = arith.constant 5.000000e+04 : f32
    %355 = vector.broadcast %cst_123 : f32 to vector<16x1xf32>
    %356 = arith.maximumf %355, %354 : vector<16x1xf32>
    %357 = vector.broadcast %cst_124 : f32 to vector<16x1xf32>
    %358 = arith.minimumf %357, %356 : vector<16x1xf32>
    %359 = vector.broadcast %358 : vector<16x1xf32> to vector<16x16xf32>
    %360 = arith.divf %351, %359 : vector<16x16xf32>
    %361 = arith.truncf %360 : vector<16x16xf32> to vector<16x16xbf16>
    %cst_125 = arith.constant dense<0.000000e+00> : vector<16x16xf32>
    %362 = tpu.matmul %361, %347, %cst_125 {dimension_numbers = #tpu.dot_dimension_numbers<[1], [0], [0], [1], [0, 0, 1, 1], [], []>} : vector<16x16xbf16>, vector<16x16xbf16>, vector<16x16xf32> -> vector<16x16xf32>
    %363 = arith.mulf %362, %362 : vector<16x16xf32>
    %cst_126 = arith.constant dense<0.000000e+00> : vector<16xf32>
    %364 = vector.multi_reduction <add>, %363, %cst_126 [1] : vector<16x16xf32> to vector<16xf32>
    %365 = vector.shape_cast %364 : vector<16xf32> to vector<16x1xf32>
    %cst_127 = arith.constant 1.600000e+01 : f32
    %366 = vector.broadcast %cst_127 : f32 to vector<16x1xf32>
    %367 = arith.divf %365, %366 : vector<16x1xf32>
    %cst_128 = arith.constant 9.99999974E-6 : f32
    %368 = vector.broadcast %cst_128 : f32 to vector<16x1xf32>
    %369 = arith.addf %367, %368 : vector<16x1xf32>
    %370 = math.rsqrt %369 : vector<16x1xf32>
    %371 = vector.broadcast %370 : vector<16x1xf32> to vector<16x16xf32>
    %372 = arith.mulf %362, %371 : vector<16x16xf32>
    %373 = vector.extract_strided_slice %290 {offsets = [0, 16], sizes = [16, 16], strides = [1, 1]} : vector<16x64xf32> to vector<16x16xf32>
    %374 = arith.negf %373 : vector<16x16xf32>
    %375 = math.exp %374 : vector<16x16xf32>
    %cst_129 = arith.constant 1.000000e+00 : f32
    %376 = vector.broadcast %cst_129 : f32 to vector<16x16xf32>
    %377 = arith.addf %376, %375 : vector<16x16xf32>
    %378 = arith.divf %376, %377 : vector<16x16xf32>
    %379 = arith.mulf %373, %378 : vector<16x16xf32>
    %380 = arith.mulf %379, %372 : vector<16x16xf32>
    %381 = arith.truncf %380 : vector<16x16xf32> to vector<16x16xbf16>
    %382 = vector.extract_strided_slice %303 {offsets = [16, 0], sizes = [16, 32], strides = [1, 1]} : vector<64x32xbf16> to vector<16x32xbf16>
    %cst_130 = arith.constant dense<0.000000e+00> : vector<16x32xf32>
    %383 = tpu.matmul %381, %382, %cst_130 {dimension_numbers = #tpu.dot_dimension_numbers<[1], [0], [0], [1], [0, 0, 1, 1], [], []>} : vector<16x16xbf16>, vector<16x32xbf16>, vector<16x32xf32> -> vector<16x32xf32>
    %384 = arith.addf %344, %383 : vector<16x32xf32>
    %385 = vector.extract_strided_slice %294 {offsets = [0, 16], sizes = [16, 8], strides = [1, 1]} : vector<16x32xbf16> to vector<16x8xbf16>
    %386 = vector.extract_strided_slice %300 {offsets = [0, 16], sizes = [16, 8], strides = [1, 1]} : vector<16x32xbf16> to vector<16x8xbf16>
    %387 = vector.extract_strided_slice %301 {offsets = [0, 32], sizes = [16, 16], strides = [1, 1]} : vector<16x64xbf16> to vector<16x16xbf16>
    %cst_131 = arith.constant dense<0.000000e+00> : vector<16x16xf32>
    %388 = tpu.matmul %385, %386, %cst_131 {dimension_numbers = #tpu.dot_dimension_numbers<[1], [1], [0], [0], [0, 0, 1, 0], [], []>} : vector<16x8xbf16>, vector<16x8xbf16>, vector<16x16xf32> -> vector<16x16xf32>
    %c2_132 = arith.constant 2 : index
    %c0_133 = arith.constant 0 : index
    %c0_134 = arith.constant 0 : index
    %389 = vector.load %arg4[%c2_132, %c0_133, %c0_134] : memref<4x16x16xf32, #tpu.memory_space<vmem>>, vector<1x16x16xf32>
    %390 = vector.shape_cast %389 : vector<1x16x16xf32> to vector<16x16xf32>
    %391 = arith.mulf %388, %390 : vector<16x16xf32>
    %392 = math.absf %391 : vector<16x16xf32>
    %cst_135 = arith.constant dense<0.000000e+00> : vector<16xf32>
    %393 = vector.multi_reduction <add>, %392, %cst_135 [1] : vector<16x16xf32> to vector<16xf32>
    %394 = vector.shape_cast %393 : vector<16xf32> to vector<16x1xf32>
    %cst_136 = arith.constant 1.000000e+00 : f32
    %cst_137 = arith.constant 5.000000e+04 : f32
    %395 = vector.broadcast %cst_136 : f32 to vector<16x1xf32>
    %396 = arith.maximumf %395, %394 : vector<16x1xf32>
    %397 = vector.broadcast %cst_137 : f32 to vector<16x1xf32>
    %398 = arith.minimumf %397, %396 : vector<16x1xf32>
    %399 = vector.broadcast %398 : vector<16x1xf32> to vector<16x16xf32>
    %400 = arith.divf %391, %399 : vector<16x16xf32>
    %401 = arith.truncf %400 : vector<16x16xf32> to vector<16x16xbf16>
    %cst_138 = arith.constant dense<0.000000e+00> : vector<16x16xf32>
    %402 = tpu.matmul %401, %387, %cst_138 {dimension_numbers = #tpu.dot_dimension_numbers<[1], [0], [0], [1], [0, 0, 1, 1], [], []>} : vector<16x16xbf16>, vector<16x16xbf16>, vector<16x16xf32> -> vector<16x16xf32>
    %403 = arith.mulf %402, %402 : vector<16x16xf32>
    %cst_139 = arith.constant dense<0.000000e+00> : vector<16xf32>
    %404 = vector.multi_reduction <add>, %403, %cst_139 [1] : vector<16x16xf32> to vector<16xf32>
    %405 = vector.shape_cast %404 : vector<16xf32> to vector<16x1xf32>
    %cst_140 = arith.constant 1.600000e+01 : f32
    %406 = vector.broadcast %cst_140 : f32 to vector<16x1xf32>
    %407 = arith.divf %405, %406 : vector<16x1xf32>
    %cst_141 = arith.constant 9.99999974E-6 : f32
    %408 = vector.broadcast %cst_141 : f32 to vector<16x1xf32>
    %409 = arith.addf %407, %408 : vector<16x1xf32>
    %410 = math.rsqrt %409 : vector<16x1xf32>
    %411 = vector.broadcast %410 : vector<16x1xf32> to vector<16x16xf32>
    %412 = arith.mulf %402, %411 : vector<16x16xf32>
    %413 = vector.extract_strided_slice %290 {offsets = [0, 32], sizes = [16, 16], strides = [1, 1]} : vector<16x64xf32> to vector<16x16xf32>
    %414 = arith.negf %413 : vector<16x16xf32>
    %415 = math.exp %414 : vector<16x16xf32>
    %cst_142 = arith.constant 1.000000e+00 : f32
    %416 = vector.broadcast %cst_142 : f32 to vector<16x16xf32>
    %417 = arith.addf %416, %415 : vector<16x16xf32>
    %418 = arith.divf %416, %417 : vector<16x16xf32>
    %419 = arith.mulf %413, %418 : vector<16x16xf32>
    %420 = arith.mulf %419, %412 : vector<16x16xf32>
    %421 = arith.truncf %420 : vector<16x16xf32> to vector<16x16xbf16>
    %422 = vector.extract_strided_slice %303 {offsets = [32, 0], sizes = [16, 32], strides = [1, 1]} : vector<64x32xbf16> to vector<16x32xbf16>
    %cst_143 = arith.constant dense<0.000000e+00> : vector<16x32xf32>
    %423 = tpu.matmul %421, %422, %cst_143 {dimension_numbers = #tpu.dot_dimension_numbers<[1], [0], [0], [1], [0, 0, 1, 1], [], []>} : vector<16x16xbf16>, vector<16x32xbf16>, vector<16x32xf32> -> vector<16x32xf32>
    %424 = arith.addf %384, %423 : vector<16x32xf32>
    %425 = vector.extract_strided_slice %294 {offsets = [0, 24], sizes = [16, 8], strides = [1, 1]} : vector<16x32xbf16> to vector<16x8xbf16>
    %426 = vector.extract_strided_slice %300 {offsets = [0, 24], sizes = [16, 8], strides = [1, 1]} : vector<16x32xbf16> to vector<16x8xbf16>
    %427 = vector.extract_strided_slice %301 {offsets = [0, 48], sizes = [16, 16], strides = [1, 1]} : vector<16x64xbf16> to vector<16x16xbf16>
    %cst_144 = arith.constant dense<0.000000e+00> : vector<16x16xf32>
    %428 = tpu.matmul %425, %426, %cst_144 {dimension_numbers = #tpu.dot_dimension_numbers<[1], [1], [0], [0], [0, 0, 1, 0], [], []>} : vector<16x8xbf16>, vector<16x8xbf16>, vector<16x16xf32> -> vector<16x16xf32>
    %c3_145 = arith.constant 3 : index
    %c0_146 = arith.constant 0 : index
    %c0_147 = arith.constant 0 : index
    %429 = vector.load %arg4[%c3_145, %c0_146, %c0_147] : memref<4x16x16xf32, #tpu.memory_space<vmem>>, vector<1x16x16xf32>
    %430 = vector.shape_cast %429 : vector<1x16x16xf32> to vector<16x16xf32>
    %431 = arith.mulf %428, %430 : vector<16x16xf32>
    %432 = math.absf %431 : vector<16x16xf32>
    %cst_148 = arith.constant dense<0.000000e+00> : vector<16xf32>
    %433 = vector.multi_reduction <add>, %432, %cst_148 [1] : vector<16x16xf32> to vector<16xf32>
    %434 = vector.shape_cast %433 : vector<16xf32> to vector<16x1xf32>
    %cst_149 = arith.constant 1.000000e+00 : f32
    %cst_150 = arith.constant 5.000000e+04 : f32
    %435 = vector.broadcast %cst_149 : f32 to vector<16x1xf32>
    %436 = arith.maximumf %435, %434 : vector<16x1xf32>
    %437 = vector.broadcast %cst_150 : f32 to vector<16x1xf32>
    %438 = arith.minimumf %437, %436 : vector<16x1xf32>
    %439 = vector.broadcast %438 : vector<16x1xf32> to vector<16x16xf32>
    %440 = arith.divf %431, %439 : vector<16x16xf32>
    %441 = arith.truncf %440 : vector<16x16xf32> to vector<16x16xbf16>
    %cst_151 = arith.constant dense<0.000000e+00> : vector<16x16xf32>
    %442 = tpu.matmul %441, %427, %cst_151 {dimension_numbers = #tpu.dot_dimension_numbers<[1], [0], [0], [1], [0, 0, 1, 1], [], []>} : vector<16x16xbf16>, vector<16x16xbf16>, vector<16x16xf32> -> vector<16x16xf32>
    %443 = arith.mulf %442, %442 : vector<16x16xf32>
    %cst_152 = arith.constant dense<0.000000e+00> : vector<16xf32>
    %444 = vector.multi_reduction <add>, %443, %cst_152 [1] : vector<16x16xf32> to vector<16xf32>
    %445 = vector.shape_cast %444 : vector<16xf32> to vector<16x1xf32>
    %cst_153 = arith.constant 1.600000e+01 : f32
    %446 = vector.broadcast %cst_153 : f32 to vector<16x1xf32>
    %447 = arith.divf %445, %446 : vector<16x1xf32>
    %cst_154 = arith.constant 9.99999974E-6 : f32
    %448 = vector.broadcast %cst_154 : f32 to vector<16x1xf32>
    %449 = arith.addf %447, %448 : vector<16x1xf32>
    %450 = math.rsqrt %449 : vector<16x1xf32>
    %451 = vector.broadcast %450 : vector<16x1xf32> to vector<16x16xf32>
    %452 = arith.mulf %442, %451 : vector<16x16xf32>
    %453 = vector.extract_strided_slice %290 {offsets = [0, 48], sizes = [16, 16], strides = [1, 1]} : vector<16x64xf32> to vector<16x16xf32>
    %454 = arith.negf %453 : vector<16x16xf32>
    %455 = math.exp %454 : vector<16x16xf32>
    %cst_155 = arith.constant 1.000000e+00 : f32
    %456 = vector.broadcast %cst_155 : f32 to vector<16x16xf32>
    %457 = arith.addf %456, %455 : vector<16x16xf32>
    %458 = arith.divf %456, %457 : vector<16x16xf32>
    %459 = arith.mulf %453, %458 : vector<16x16xf32>
    %460 = arith.mulf %459, %452 : vector<16x16xf32>
    %461 = arith.truncf %460 : vector<16x16xf32> to vector<16x16xbf16>
    %462 = vector.extract_strided_slice %303 {offsets = [48, 0], sizes = [16, 32], strides = [1, 1]} : vector<64x32xbf16> to vector<16x32xbf16>
    %cst_156 = arith.constant dense<0.000000e+00> : vector<16x32xf32>
    %463 = tpu.matmul %461, %462, %cst_156 {dimension_numbers = #tpu.dot_dimension_numbers<[1], [0], [0], [1], [0, 0, 1, 1], [], []>} : vector<16x16xbf16>, vector<16x32xbf16>, vector<16x32xf32> -> vector<16x32xf32>
    %464 = arith.addf %424, %463 : vector<16x32xf32>
    %465 = arith.addf %267, %464 : vector<16x32xf32>
    %466 = vector.extract_strided_slice %1 {offsets = [3, 0], sizes = [1, 32], strides = [1, 1]} : vector<5x32xf32> to vector<1x32xf32>
    %467 = arith.mulf %465, %465 : vector<16x32xf32>
    %cst_157 = arith.constant dense<0.000000e+00> : vector<16xf32>
    %468 = vector.multi_reduction <add>, %467, %cst_157 [1] : vector<16x32xf32> to vector<16xf32>
    %469 = vector.shape_cast %468 : vector<16xf32> to vector<16x1xf32>
    %cst_158 = arith.constant 3.200000e+01 : f32
    %470 = vector.broadcast %cst_158 : f32 to vector<16x1xf32>
    %471 = arith.divf %469, %470 : vector<16x1xf32>
    %cst_159 = arith.constant 9.99999974E-6 : f32
    %472 = vector.broadcast %cst_159 : f32 to vector<16x1xf32>
    %473 = arith.addf %471, %472 : vector<16x1xf32>
    %474 = math.rsqrt %473 : vector<16x1xf32>
    %475 = vector.broadcast %474 : vector<16x1xf32> to vector<16x32xf32>
    %476 = arith.mulf %465, %475 : vector<16x32xf32>
    %477 = vector.broadcast %466 : vector<1x32xf32> to vector<16x32xf32>
    %478 = arith.mulf %476, %477 : vector<16x32xf32>
    %479 = arith.truncf %478 : vector<16x32xf32> to vector<16x32xbf16>
    %c1_160 = arith.constant 1 : index
    %c0_161 = arith.constant 0 : index
    %c0_162 = arith.constant 0 : index
    %480 = vector.load %arg7[%c1_160, %c0_161, %c0_162] : memref<2x32x128xbf16, #tpu.memory_space<vmem>>, vector<1x32x128xbf16>
    %481 = vector.shape_cast %480 : vector<1x32x128xbf16> to vector<32x128xbf16>
    %cst_163 = arith.constant dense<0.000000e+00> : vector<16x128xf32>
    %482 = tpu.matmul %479, %481, %cst_163 {dimension_numbers = #tpu.dot_dimension_numbers<[1], [0], [0], [1], [0, 0, 1, 1], [], []>} : vector<16x32xbf16>, vector<32x128xbf16>, vector<16x128xf32> -> vector<16x128xf32>
    %483 = vector.extract_strided_slice %482 {offsets = [0, 0], sizes = [16, 64], strides = [1, 1]} : vector<16x128xf32> to vector<16x64xf32>
    %cst_164 = arith.constant 5.000000e-01 : f32
    %484 = vector.broadcast %cst_164 : f32 to vector<16x64xf32>
    %485 = arith.mulf %484, %483 : vector<16x64xf32>
    %cst_165 = arith.constant 0.707106769 : f32
    %486 = vector.broadcast %cst_165 : f32 to vector<16x64xf32>
    %487 = arith.mulf %483, %486 : vector<16x64xf32>
    %cst_166 = arith.constant 0.000000e+00 : f32
    %488 = vector.broadcast %cst_166 : f32 to vector<16x64xf32>
    %489 = arith.cmpf oge, %487, %488 : vector<16x64xf32>
    %cst_167 = arith.constant 1.000000e+00 : f32
    %cst_168 = arith.constant -1.000000e+00 : f32
    %490 = vector.broadcast %cst_167 : f32 to vector<16x64xf32>
    %491 = vector.broadcast %cst_168 : f32 to vector<16x64xf32>
    %492 = arith.select %489, %490, %491 : vector<16x64xi1>, vector<16x64xf32>
    %493 = math.absf %487 : vector<16x64xf32>
    %cst_169 = arith.constant 0.327591091 : f32
    %494 = vector.broadcast %cst_169 : f32 to vector<16x64xf32>
    %495 = arith.mulf %494, %493 : vector<16x64xf32>
    %cst_170 = arith.constant 1.000000e+00 : f32
    %496 = vector.broadcast %cst_170 : f32 to vector<16x64xf32>
    %497 = arith.addf %496, %495 : vector<16x64xf32>
    %cst_171 = arith.constant 1.000000e+00 : f32
    %498 = vector.broadcast %cst_171 : f32 to vector<16x64xf32>
    %499 = arith.divf %498, %497 : vector<16x64xf32>
    %cst_172 = arith.constant 1.06140542 : f32
    %500 = vector.broadcast %cst_172 : f32 to vector<16x64xf32>
    %501 = arith.mulf %500, %499 : vector<16x64xf32>
    %cst_173 = arith.constant -1.45315206 : f32
    %502 = vector.broadcast %cst_173 : f32 to vector<16x64xf32>
    %503 = arith.addf %501, %502 : vector<16x64xf32>
    %504 = arith.mulf %503, %499 : vector<16x64xf32>
    %cst_174 = arith.constant 1.42141378 : f32
    %505 = vector.broadcast %cst_174 : f32 to vector<16x64xf32>
    %506 = arith.addf %504, %505 : vector<16x64xf32>
    %507 = arith.mulf %506, %499 : vector<16x64xf32>
    %cst_175 = arith.constant -0.284496725 : f32
    %508 = vector.broadcast %cst_175 : f32 to vector<16x64xf32>
    %509 = arith.addf %507, %508 : vector<16x64xf32>
    %510 = arith.mulf %509, %499 : vector<16x64xf32>
    %cst_176 = arith.constant 0.254829586 : f32
    %511 = vector.broadcast %cst_176 : f32 to vector<16x64xf32>
    %512 = arith.addf %510, %511 : vector<16x64xf32>
    %513 = arith.mulf %512, %499 : vector<16x64xf32>
    %cst_177 = arith.constant 0.000000e+00 : f32
    %514 = vector.broadcast %cst_177 : f32 to vector<16x64xf32>
    %515 = arith.subf %514, %493 : vector<16x64xf32>
    %516 = arith.mulf %515, %493 : vector<16x64xf32>
    %517 = math.exp %516 : vector<16x64xf32>
    %518 = arith.mulf %513, %517 : vector<16x64xf32>
    %cst_178 = arith.constant 1.000000e+00 : f32
    %519 = vector.broadcast %cst_178 : f32 to vector<16x64xf32>
    %520 = arith.subf %519, %518 : vector<16x64xf32>
    %521 = arith.mulf %492, %520 : vector<16x64xf32>
    %cst_179 = arith.constant 1.000000e+00 : f32
    %522 = vector.broadcast %cst_179 : f32 to vector<16x64xf32>
    %523 = arith.addf %522, %521 : vector<16x64xf32>
    %524 = arith.mulf %485, %523 : vector<16x64xf32>
    %525 = vector.extract_strided_slice %482 {offsets = [0, 64], sizes = [16, 64], strides = [1, 1]} : vector<16x128xf32> to vector<16x64xf32>
    %526 = arith.mulf %524, %525 : vector<16x64xf32>
    %527 = arith.truncf %526 : vector<16x64xf32> to vector<16x64xbf16>
    %c1_180 = arith.constant 1 : index
    %c0_181 = arith.constant 0 : index
    %c0_182 = arith.constant 0 : index
    %528 = vector.load %arg8[%c1_180, %c0_181, %c0_182] : memref<2x64x32xbf16, #tpu.memory_space<vmem>>, vector<1x64x32xbf16>
    %529 = vector.shape_cast %528 : vector<1x64x32xbf16> to vector<64x32xbf16>
    %cst_183 = arith.constant dense<0.000000e+00> : vector<16x32xf32>
    %530 = tpu.matmul %527, %529, %cst_183 {dimension_numbers = #tpu.dot_dimension_numbers<[1], [0], [0], [1], [0, 0, 1, 1], [], []>} : vector<16x64xbf16>, vector<64x32xbf16>, vector<16x32xf32> -> vector<16x32xf32>
    %531 = arith.addf %465, %530 : vector<16x32xf32>
    %532 = vector.extract_strided_slice %1 {offsets = [4, 0], sizes = [1, 32], strides = [1, 1]} : vector<5x32xf32> to vector<1x32xf32>
    %533 = arith.mulf %531, %531 : vector<16x32xf32>
    %cst_184 = arith.constant dense<0.000000e+00> : vector<16xf32>
    %534 = vector.multi_reduction <add>, %533, %cst_184 [1] : vector<16x32xf32> to vector<16xf32>
    %535 = vector.shape_cast %534 : vector<16xf32> to vector<16x1xf32>
    %cst_185 = arith.constant 3.200000e+01 : f32
    %536 = vector.broadcast %cst_185 : f32 to vector<16x1xf32>
    %537 = arith.divf %535, %536 : vector<16x1xf32>
    %cst_186 = arith.constant 9.99999974E-6 : f32
    %538 = vector.broadcast %cst_186 : f32 to vector<16x1xf32>
    %539 = arith.addf %537, %538 : vector<16x1xf32>
    %540 = math.rsqrt %539 : vector<16x1xf32>
    %541 = vector.broadcast %540 : vector<16x1xf32> to vector<16x32xf32>
    %542 = arith.mulf %531, %541 : vector<16x32xf32>
    %543 = vector.broadcast %532 : vector<1x32xf32> to vector<16x32xf32>
    %544 = arith.mulf %542, %543 : vector<16x32xf32>
    %c0_187 = arith.constant 0 : index
    %c0_188 = arith.constant 0 : index
    %545 = vector.load %arg11[%c0_187, %c0_188] : memref<16x32xf32, #tpu.memory_space<vmem>>, vector<16x32xf32>
    tpu.vector_store %arg11[%c0_187, %c0_188], %544 {strides = array<i32>} : memref<16x32xf32, #tpu.memory_space<vmem>>, vector<16x32xf32>,
    %546 = arith.truncf %544 : vector<16x32xf32> to vector<16x32xbf16>
    %c0_189 = arith.constant 0 : index
    %c0_190 = arith.constant 0 : index
    %547 = vector.load %arg9[%c0_189, %c0_190] : memref<32x128xbf16, #tpu.memory_space<vmem>>, vector<32x128xbf16>
    %cst_191 = arith.constant dense<0.000000e+00> : vector<16x128xf32>
    %548 = tpu.matmul %546, %547, %cst_191 {dimension_numbers = #tpu.dot_dimension_numbers<[1], [0], [0], [1], [0, 0, 1, 1], [], []>} : vector<16x32xbf16>, vector<32x128xbf16>, vector<16x128xf32> -> vector<16x128xf32>
    %c0_192 = arith.constant 0 : index
    %c0_193 = arith.constant 0 : index
    %549 = vector.load %arg10[%c0_192, %c0_193] : memref<16x128xf32, #tpu.memory_space<vmem>>, vector<16x128xf32>
    tpu.vector_store %arg10[%c0_192, %c0_193], %548 {strides = array<i32>} : memref<16x128xf32, #tpu.memory_space<vmem>>, vector<16x128xf32>,
    return
  }
  func.func @transform_0(%arg0: i32) -> (i32, i32) {
    %c0_i32 = arith.constant 0 : i32
    %c0_i32_0 = arith.constant 0 : i32
    %c0_i32_1 = arith.constant 0 : i32
    return %c0_i32, %c0_i32_0 : i32, i32
  }
  func.func @transform_1(%arg0: i32) -> (i32, i32) {
    %c0_i32 = arith.constant 0 : i32
    %c0_i32_0 = arith.constant 0 : i32
    %c0_i32_1 = arith.constant 0 : i32
    return %c0_i32, %c0_i32_0 : i32, i32
  }
  func.func @transform_2(%arg0: i32) -> (i32, i32) {
    %c0_i32 = arith.constant 0 : i32
    %c0_i32_0 = arith.constant 0 : i32
    %c0_i32_1 = arith.constant 0 : i32
    return %c0_i32, %c0_i32_0 : i32, i32
  }
  func.func @transform_3(%arg0: i32) -> (i32, i32, i32) {
    %c0_i32 = arith.constant 0 : i32
    %c0_i32_0 = arith.constant 0 : i32
    %c0_i32_1 = arith.constant 0 : i32
    %c0_i32_2 = arith.constant 0 : i32
    return %c0_i32, %c0_i32_0, %c0_i32_1 : i32, i32, i32
  }
  func.func @transform_4(%arg0: i32) -> (i32, i32, i32) {
    %c0_i32 = arith.constant 0 : i32
    %c0_i32_0 = arith.constant 0 : i32
    %c0_i32_1 = arith.constant 0 : i32
    %c0_i32_2 = arith.constant 0 : i32
    return %c0_i32, %c0_i32_0, %c0_i32_1 : i32, i32, i32
  }
  func.func @transform_5(%arg0: i32) -> (i32, i32, i32) {
    %c0_i32 = arith.constant 0 : i32
    %c0_i32_0 = arith.constant 0 : i32
    %c0_i32_1 = arith.constant 0 : i32
    %c0_i32_2 = arith.constant 0 : i32
    return %c0_i32, %c0_i32_0, %c0_i32_1 : i32, i32, i32
  }
  func.func @transform_6(%arg0: i32) -> (i32, i32, i32) {
    %c0_i32 = arith.constant 0 : i32
    %c0_i32_0 = arith.constant 0 : i32
    %c0_i32_1 = arith.constant 0 : i32
    %c0_i32_2 = arith.constant 0 : i32
    return %c0_i32, %c0_i32_0, %c0_i32_1 : i32, i32, i32
  }
  func.func @transform_7(%arg0: i32) -> (i32, i32, i32) {
    %c0_i32 = arith.constant 0 : i32
    %c0_i32_0 = arith.constant 0 : i32
    %c0_i32_1 = arith.constant 0 : i32
    %c0_i32_2 = arith.constant 0 : i32
    return %c0_i32, %c0_i32_0, %c0_i32_1 : i32, i32, i32
  }
  func.func @transform_8(%arg0: i32) -> (i32, i32) {
    %c0_i32 = arith.constant 0 : i32
    %c0_i32_0 = arith.constant 0 : i32
    %c0_i32_1 = arith.constant 0 : i32
    return %c0_i32, %c0_i32_0 : i32, i32
  }
  func.func @transform_9(%arg0: i32) -> (i32, i32) {
    %c0_i32 = arith.constant 0 : i32
    %c0_i32_0 = arith.constant 0 : i32
    %c0_i32_1 = arith.constant 0 : i32
    return %c0_i32, %c0_i32_0 : i32, i32
  }
  func.func @transform_10(%arg0: i32) -> (i32, i32) {
    %c0_i32 = arith.constant 0 : i32
    %c0_i32_0 = arith.constant 0 : i32
    %c0_i32_1 = arith.constant 0 : i32
    return %c0_i32, %c0_i32_0 : i32, i32
  }
}

module attributes {stable_mosaic.version = 11 : i64} {
  func.func @_prompt_ce_kernel(%arg0: i32, %arg1: memref<16x32xf32, #tpu.memory_space<vmem>>, %arg2: memref<16x1xi32, #tpu.memory_space<vmem>>, %arg3: memref<32x3200xbf16, #tpu.memory_space<vmem>>, %arg4: memref<1x3200xf32, #tpu.memory_space<vmem>>, %arg5: memref<16x128xf32, #tpu.memory_space<vmem>>) attributes {dimension_semantics = [#tpu.dimension_semantics<parallel>], iteration_bounds = array<i64: 10>, scalar_prefetch = 0 : i64, scratch_operands = 0 : i64, tpu.core_type = #tpu.core_type<tc>, window_params = [{pipeline_mode = #tpu.pipeline_mode<synchronous>, transform_indices = @transform_0, window_bounds = array<i64: 16, 32>}, {pipeline_mode = #tpu.pipeline_mode<synchronous>, transform_indices = @transform_1, window_bounds = array<i64: 16, 1>}, {transform_indices = @transform_2, window_bounds = array<i64: 32, 3200>}, {transform_indices = @transform_3, window_bounds = array<i64: 1, 3200>}, {transform_indices = @transform_4, window_bounds = array<i64: 16, 128>}]} {
    %c0 = arith.constant 0 : index
    %c0_0 = arith.constant 0 : index
    %0 = vector.load %arg1[%c0, %c0_0] : memref<16x32xf32, #tpu.memory_space<vmem>>, vector<16x32xf32>
    %1 = arith.truncf %0 : vector<16x32xf32> to vector<16x32xbf16>
    %c0_1 = arith.constant 0 : index
    %c0_2 = arith.constant 0 : index
    %2 = vector.load %arg3[%c0_1, %c0_2] : memref<32x3200xbf16, #tpu.memory_space<vmem>>, vector<32x3200xbf16>
    %cst = arith.constant dense<0.000000e+00> : vector<16x3200xf32>
    %3 = tpu.matmul %1, %2, %cst {dimension_numbers = #tpu.dot_dimension_numbers<[1], [0], [0], [1], [0, 0, 1, 1], [], []>} : vector<16x32xbf16>, vector<32x3200xbf16>, vector<16x3200xf32> -> vector<16x3200xf32>
    %c0_3 = arith.constant 0 : index
    %c0_4 = arith.constant 0 : index
    %4 = vector.load %arg4[%c0_3, %c0_4] : memref<1x3200xf32, #tpu.memory_space<vmem>>, vector<1x3200xf32>
    %5 = vector.broadcast %4 : vector<1x3200xf32> to vector<16x3200xf32>
    %6 = arith.addf %3, %5 : vector<16x3200xf32>
    %cst_5 = arith.constant dense<0xFF800000> : vector<16xf32>
    %7 = vector.multi_reduction <maximumf>, %6, %cst_5 [1] : vector<16x3200xf32> to vector<16xf32>
    %8 = vector.shape_cast %7 : vector<16xf32> to vector<16x1xf32>
    %9 = vector.broadcast %8 : vector<16x1xf32> to vector<16x3200xf32>
    %10 = arith.subf %6, %9 : vector<16x3200xf32>
    %11 = math.exp %10 : vector<16x3200xf32>
    %cst_6 = arith.constant dense<0.000000e+00> : vector<16xf32>
    %12 = vector.multi_reduction <add>, %11, %cst_6 [1] : vector<16x3200xf32> to vector<16xf32>
    %13 = vector.shape_cast %12 : vector<16xf32> to vector<16x1xf32>
    %14 = tpu.iota {dimensions = array<i32: 1>} : vector<16x3200xi32>
    %c3200_i32 = arith.constant 3200 : i32
    %15 = arith.muli %arg0, %c3200_i32 : i32
    %16 = vector.broadcast %15 : i32 to vector<16x3200xi32>
    %17 = arith.addi %14, %16 : vector<16x3200xi32>
    %c0_7 = arith.constant 0 : index
    %c0_8 = arith.constant 0 : index
    %18 = vector.load %arg2[%c0_7, %c0_8] : memref<16x1xi32, #tpu.memory_space<vmem>>, vector<16x1xi32>
    %19 = vector.broadcast %18 : vector<16x1xi32> to vector<16x3200xi32>
    %20 = arith.cmpi eq, %17, %19 : vector<16x3200xi32>
    %cst_9 = arith.constant 0.000000e+00 : f32
    %21 = vector.broadcast %cst_9 : f32 to vector<16x3200xf32>
    %22 = arith.select %20, %6, %21 : vector<16x3200xi1>, vector<16x3200xf32>
    %cst_10 = arith.constant dense<0.000000e+00> : vector<16xf32>
    %23 = vector.multi_reduction <add>, %22, %cst_10 [1] : vector<16x3200xf32> to vector<16xf32>
    %24 = vector.shape_cast %23 : vector<16xf32> to vector<16x1xf32>
    %25 = tpu.iota {dimensions = array<i32: 1>} : vector<16x128xi32>
    %c0_i32 = arith.constant 0 : i32
    %26 = vector.broadcast %c0_i32 : i32 to vector<16x128xi32>
    %27 = arith.cmpi eq, %25, %26 : vector<16x128xi32>
    %cst_11 = arith.constant 0.000000e+00 : f32
    %28 = vector.shape_cast %8 : vector<16x1xf32> to vector<16x1xf32>
    %29 = vector.broadcast %28 : vector<16x1xf32> to vector<16x128xf32>
    %30 = vector.broadcast %cst_11 : f32 to vector<16x128xf32>
    %31 = arith.select %27, %29, %30 : vector<16x128xi1>, vector<16x128xf32>
    %c1_i32 = arith.constant 1 : i32
    %32 = vector.broadcast %c1_i32 : i32 to vector<16x128xi32>
    %33 = arith.cmpi eq, %25, %32 : vector<16x128xi32>
    %cst_12 = arith.constant 0.000000e+00 : f32
    %34 = vector.shape_cast %13 : vector<16x1xf32> to vector<16x1xf32>
    %35 = vector.broadcast %34 : vector<16x1xf32> to vector<16x128xf32>
    %36 = vector.broadcast %cst_12 : f32 to vector<16x128xf32>
    %37 = arith.select %33, %35, %36 : vector<16x128xi1>, vector<16x128xf32>
    %38 = arith.addf %31, %37 : vector<16x128xf32>
    %c2_i32 = arith.constant 2 : i32
    %39 = vector.broadcast %c2_i32 : i32 to vector<16x128xi32>
    %40 = arith.cmpi eq, %25, %39 : vector<16x128xi32>
    %cst_13 = arith.constant 0.000000e+00 : f32
    %41 = vector.shape_cast %24 : vector<16x1xf32> to vector<16x1xf32>
    %42 = vector.broadcast %41 : vector<16x1xf32> to vector<16x128xf32>
    %43 = vector.broadcast %cst_13 : f32 to vector<16x128xf32>
    %44 = arith.select %40, %42, %43 : vector<16x128xi1>, vector<16x128xf32>
    %45 = arith.addf %38, %44 : vector<16x128xf32>
    %c0_14 = arith.constant 0 : index
    %c0_15 = arith.constant 0 : index
    %46 = vector.load %arg5[%c0_14, %c0_15] : memref<16x128xf32, #tpu.memory_space<vmem>>, vector<16x128xf32>
    tpu.vector_store %arg5[%c0_14, %c0_15], %45 {strides = array<i32>} : memref<16x128xf32, #tpu.memory_space<vmem>>, vector<16x128xf32>,
    return
  }
  func.func @transform_0(%arg0: i32) -> (i32, i32) {
    %c0_i32 = arith.constant 0 : i32
    %c0_i32_0 = arith.constant 0 : i32
    %c0_i32_1 = arith.constant 0 : i32
    return %c0_i32, %c0_i32_0 : i32, i32
  }
  func.func @transform_1(%arg0: i32) -> (i32, i32) {
    %c0_i32 = arith.constant 0 : i32
    %c0_i32_0 = arith.constant 0 : i32
    %c0_i32_1 = arith.constant 0 : i32
    return %c0_i32, %c0_i32_0 : i32, i32
  }
  func.func @transform_2(%arg0: i32) -> (i32, i32) {
    %c0_i32 = arith.constant 0 : i32
    %c0_i32_0 = arith.constant 0 : i32
    return %c0_i32, %arg0 : i32, i32
  }
  func.func @transform_3(%arg0: i32) -> (i32, i32) {
    %c0_i32 = arith.constant 0 : i32
    %c0_i32_0 = arith.constant 0 : i32
    return %c0_i32, %arg0 : i32, i32
  }
  func.func @transform_4(%arg0: i32) -> (i32, i32) {
    %c0_i32 = arith.constant 0 : i32
    %c0_i32_0 = arith.constant 0 : i32
    return %c0_i32, %arg0 : i32, i32
  }
}

</mosaic_0001>

<llo_original>
// kernel: music_x_transformer_forward.3
$region0: #{music_x_transformer_forward.3}
  #allocation0 [shape = 'u32[]', space=smem, size = 0x4, offset = 0x4, fixed_abs, tag = 'smem constant byte address 0x4 - core index']
  #allocation1 [shape = 'u32[144,128]{1,0:T(1,128)}', space=vmem, size = 0x12000, scoped, tag = 'internal scratch']
  %s0 = inlined_call_operand.vmem [shape: f32[16,32], index: 0, kind: input, shape index: {}]
  %s1 = inlined_call_operand.vmem [shape: s32[16,1], index: 1, kind: input, shape index: {}]
  %s2 = inlined_call_operand.vmem [shape: bf16[32,32000], index: 2, kind: input, shape index: {}]
  %s3 = inlined_call_operand.vmem [shape: f32[1,32000], index: 3, kind: input, shape index: {}]
  %s4 = inlined_call_operand.vmem [shape: f32[16,1280], index: 4, kind: output, shape index: {}]
  %s5 = sld [smem:[#allocation0]]
  $region109: #{music_x_transformer_forward.3} parent=0
    _
  %s7 = ssub.s32 1, %s5
  %s8 = scalar_select 0, %s7, %s5
  $region1: #{music_x_transformer_forward.3} parent=0
    #allocation2 [shape = 'u8[409600]{0}', space=vmem, size = 0x64000, scoped, tag = 'input window, operand 2']
    #allocation3 [shape = 'u8[16384]{0}', space=vmem, size = 0x4000, scoped, tag = 'output window, operand 0']
    loop: start=0, step=1, limit=12
    $region2: #{music_x_transformer_forward.3} parent=1 // loop_pre_header
      _
    $region3: #{music_x_transformer_forward.3} parent=1 // loop_header
      %s10 = sphi 0, %s14
      %p11 = scmp.ge.s32.totalorder %s10, 12
      %s18 = sphi 0, %s18
      %s20 = sphi 0, %s18
      %s21 = sphi 0, %s20
      %s35 = sphi 0, %s21
      %s39 = sphi 0, %s39
      %s41 = sphi 0, %s39
      %s42 = sphi 0, %s41
      %s56 = sphi 0, %s42
      %s62 = sphi 0, %s64
      %s65 = sphi 0, %s62
      %s66 = sphi 0, %s65
      %s82 = sphi 0, %s66
      %s88 = sphi 0, %s90
      %s91 = sphi 0, %s88
      %s92 = sphi 0, %s91
      %s108 = sphi 0, %s92
      %s114 = sphi 0, %s116
      %s117 = sphi 0, %s114
      %s118 = sphi 0, %s117
      %s134 = sphi 0, %s118
    $region4: #{music_x_transformer_forward.3} parent=1 // loop_header_branch
      %13 = sbr.rel (%p11) target = $region8
    $region5: #{music_x_transformer_forward.3} parent=1 // loop_body
      %s15 = ssub.s32 %s10, 1
      %s16 = ssub.s32 %s10, 2
      %s17 = sadd.s32 %s10, 1
      %s19 = sadd.s32 %s18, 1
      %p22 = scmp.eq.s32.totalorder %s10, 9
      %p23 = scmp.ne.s32.totalorder %s18, %s20
      %p24 = scmp.eq.s32.totalorder %s10, 0
      %p25 = por %p23, %p24
      %p26 = scmp.ne.s32.totalorder %s18, %s20
      %p27 = scmp.eq.s32.totalorder %s15, 9
      %p28 = por %p26, %p27
      %p29 = scmp.ne.s32.totalorder %s20, %s21
      %p30 = scmp.eq.s32.totalorder %s15, 0
      %p31 = por %p29, %p30
      %p32 = scmp.ne.s32.totalorder %s20, %s21
      %p33 = scmp.eq.s32.totalorder %s16, 9
      %p34 = por %p32, %p33
      %p36 = scmp.ne.s32.totalorder %s21, %s35
      %p37 = scmp.eq.s32.totalorder %s16, 0
      %p38 = por %p36, %p37
      %s40 = sadd.s32 %s39, 1
      %p43 = scmp.eq.s32.totalorder %s10, 9
      %p44 = scmp.ne.s32.totalorder %s39, %s41
      %p45 = scmp.eq.s32.totalorder %s10, 0
      %p46 = por %p44, %p45
      %p47 = scmp.ne.s32.totalorder %s39, %s41
      %p48 = scmp.eq.s32.totalorder %s15, 9
      %p49 = por %p47, %p48
      %p50 = scmp.ne.s32.totalorder %s41, %s42
      %p51 = scmp.eq.s32.totalorder %s15, 0
      %p52 = por %p50, %p51
      %p53 = scmp.ne.s32.totalorder %s41, %s42
      %p54 = scmp.eq.s32.totalorder %s16, 9
      %p55 = por %p53, %p54
      %p57 = scmp.ne.s32.totalorder %s42, %s56
      %p58 = scmp.eq.s32.totalorder %s16, 0
      %p59 = por %p57, %p58
      %s60 = ssub.s32 %s10, %s17
      %p61 = scmp.eq.s32.totalorder %s60, 0
      %s63 = sadd.s32 %s62, 1
      %s64 = scalar_select %p61, %s62, %s63
      %p67 = pneg %p61
      %p68 = scmp.eq.s32.totalorder %s10, 9
      %p69 = por %p67, %p68
      %p70 = scmp.ne.s32.totalorder %s62, %s65
      %p71 = scmp.eq.s32.totalorder %s10, 0
      %p72 = por %p70, %p71
      %p73 = scmp.ne.s32.totalorder %s62, %s65
      %p74 = scmp.eq.s32.totalorder %s15, 9
      %p75 = por %p73, %p74
      %p76 = scmp.ne.s32.totalorder %s65, %s66
      %p77 = scmp.eq.s32.totalorder %s15, 0
      %p78 = por %p76, %p77
      %p79 = scmp.ne.s32.totalorder %s65, %s66
      %p80 = scmp.eq.s32.totalorder %s16, 9
      %p81 = por %p79, %p80
      %p83 = scmp.ne.s32.totalorder %s66, %s82
      %p84 = scmp.eq.s32.totalorder %s16, 0
      %p85 = por %p83, %p84
      %s86 = ssub.s32 %s10, %s17
      %p87 = scmp.eq.s32.totalorder %s86, 0
      %s89 = sadd.s32 %s88, 1
      %s90 = scalar_select %p87, %s88, %s89
      %p93 = pneg %p87
      %p94 = scmp.eq.s32.totalorder %s10, 9
      %p95 = por %p93, %p94
      %p96 = scmp.ne.s32.totalorder %s88, %s91
      %p97 = scmp.eq.s32.totalorder %s10, 0
      %p98 = por %p96, %p97
      %p99 = scmp.ne.s32.totalorder %s88, %s91
      %p100 = scmp.eq.s32.totalorder %s15, 9
      %p101 = por %p99, %p100
      %p102 = scmp.ne.s32.totalorder %s91, %s92
      %p103 = scmp.eq.s32.totalorder %s15, 0
      %p104 = por %p102, %p103
      %p105 = scmp.ne.s32.totalorder %s91, %s92
      %p106 = scmp.eq.s32.totalorder %s16, 9
      %p107 = por %p105, %p106
      %p109 = scmp.ne.s32.totalorder %s92, %s108
      %p110 = scmp.eq.s32.totalorder %s16, 0
      %p111 = por %p109, %p110
      %s112 = ssub.s32 %s10, %s17
      %p113 = scmp.eq.s32.totalorder %s112, 0
      %s115 = sadd.s32 %s114, 1
      %s116 = scalar_select %p113, %s114, %s115
      %p119 = pneg %p113
      %p120 = scmp.eq.s32.totalorder %s10, 9
      %p121 = por %p119, %p120
      %p122 = scmp.ne.s32.totalorder %s114, %s117
      %p123 = scmp.eq.s32.totalorder %s10, 0
      %p124 = por %p122, %p123
      %p125 = scmp.ne.s32.totalorder %s114, %s117
      %p126 = scmp.eq.s32.totalorder %s15, 9
      %p127 = por %p125, %p126
      %p128 = scmp.ne.s32.totalorder %s117, %s118
      %p129 = scmp.eq.s32.totalorder %s15, 0
      %p130 = por %p128, %p129
      %p131 = scmp.ne.s32.totalorder %s117, %s118
      %p132 = scmp.eq.s32.totalorder %s16, 9
      %p133 = por %p131, %p132
      %p135 = scmp.ne.s32.totalorder %s118, %s134
      %p136 = scmp.eq.s32.totalorder %s16, 0
      %p137 = por %p135, %p136
      %p138 = scmp.le.s32.totalorder 1, %s10
      %p139 = scmp.lt.s32.totalorder %s10, 11
      %p140 = pnand %p138, %p139
      %p141 = pneg %p140
      // Predicated region
      $region9: #{music_x_transformer_forward.3} parent=5 // pred_check
        _
      $region10: #{music_x_transformer_forward.3} parent=5 // pred_check_branch
        %143 = sbr.rel (%p140) target = $region12
      $region11: #{music_x_transformer_forward.3} parent=5 // pred_region
        %s144 = ssub.s32 %s10, 1
        // Predicated region
        $region13: #{music_x_transformer_forward.3} parent=11 // pred_check
          %p145 = pneg %p31
        $region14: #{music_x_transformer_forward.3} parent=11 // pred_check_branch
          %147 = sbr.rel (%p145) target = $region16
        $region15: #{music_x_transformer_forward.3} parent=11 // pred_region
          _
        $region16: #{music_x_transformer_forward.3} parent=11 // pred_fallthru
          _
        // Predicated region
        $region17: #{music_x_transformer_forward.3} parent=11 // pred_check
          %p148 = pneg %p52
        $region18: #{music_x_transformer_forward.3} parent=11 // pred_check_branch
          %150 = sbr.rel (%p148) target = $region20
        $region19: #{music_x_transformer_forward.3} parent=11 // pred_region
          _
        $region20: #{music_x_transformer_forward.3} parent=11 // pred_fallthru
          _
      $region12: #{music_x_transformer_forward.3} parent=5 // pred_fallthru
        _
      %p151 = scmp.lt.s32.totalorder %s10, 10
      // Predicated region
      $region21: #{music_x_transformer_forward.3} parent=5 // pred_check
        %p152 = pneg %p151
      $region22: #{music_x_transformer_forward.3} parent=5 // pred_check_branch
        %154 = sbr.rel (%p152) target = $region24
      $region23: #{music_x_transformer_forward.3} parent=5 // pred_region
        // Predicated region
        $region25: #{music_x_transformer_forward.3} parent=23 // pred_check
          %p155 = pneg %p72
        $region26: #{music_x_transformer_forward.3} parent=23 // pred_check_branch
          %157 = sbr.rel (%p155) target = $region28
        $region27: #{music_x_transformer_forward.3} parent=23 // pred_region
          %s158 = sand.u32 %s62, 1
          %s159 = sand.u32 %s62, 1
          %s160 = smul.addr %s159, 400
          %s161 = scalar_lea.vmem [#allocation2], %s160
          %s162 = smul.u32 25, %s10
          %s163 = smul.addr %s162, 4
          %s164 = scalar_lea.vmem %s2, %s163
          // Predicated region
          $region29: #{music_x_transformer_forward.3} parent=27 // pred_check
            _
          $region30: #{music_x_transformer_forward.3} parent=27 // pred_check_branch
            %166 = sbr.rel (0) target = $region32
          $region31: #{music_x_transformer_forward.3} parent=27 // pred_region
            // Predicated region
            $region33: #{music_x_transformer_forward.3} parent=31 // pred_check
              _
            $region34: #{music_x_transformer_forward.3} parent=31 // pred_check_branch
              %168 = sbr.rel (0) target = $region36
            $region35: #{music_x_transformer_forward.3} parent=31 // pred_region
              %s169 = scalar_lea.vmem %s164, 96
              %s170 = scalar_lea.vmem %s161, 96 [#allocation2]
              loop: start=0, step=1, limit=1
              $region37: #{music_x_transformer_forward.3} parent=35 // loop_pre_header
                _
              $region38: #{music_x_transformer_forward.3} parent=35 // loop_header
                %s172 = sphi 0, %s176
                %p173 = scmp.ge.s32.totalorder %s172, 1
                %s177 = sphi %s164, %s164
                %s178 = sphi %s161, %s161
              $region39: #{music_x_transformer_forward.3} parent=35 // loop_header_branch
                %175 = sbr.rel (%p173) target = $region43
              $region40: #{music_x_transformer_forward.3} parent=35 // loop_body
                %v179 = vld [vmem:[%s177] sm:$0xff]
                %180 = vst [vmem:[%s178] sm:$0xff] %v179
                %v181 = vld [vmem:[%s177 + $0x8] sm:$0xff]
                %182 = vst [vmem:[%s178 + $0x8] sm:$0xff] %v181
                %v183 = vld [vmem:[%s177 + $0x10] sm:$0xff]
                %184 = vst [vmem:[%s178 + $0x10] sm:$0xff] %v183
                %v185 = vld [vmem:[%s177 + $0x18] sm:$0xff]
                %186 = vst [vmem:[%s178 + $0x18] sm:$0xff] %v185
                %v187 = vld [vmem:[%s177 + $0x20] sm:$0xff]
                %188 = vst [vmem:[%s178 + $0x20] sm:$0xff] %v187
                %v189 = vld [vmem:[%s177 + $0x28] sm:$0xff]
                %190 = vst [vmem:[%s178 + $0x28] sm:$0xff] %v189
                %v191 = vld [vmem:[%s177 + $0x30] sm:$0xff]
                %192 = vst [vmem:[%s178 + $0x30] sm:$0xff] %v191
                %v193 = vld [vmem:[%s177 + $0x38] sm:$0xff]
                %194 = vst [vmem:[%s178 + $0x38] sm:$0xff] %v193
                %v195 = vld [vmem:[%s177 + $0x40] sm:$0xff]
                %196 = vst [vmem:[%s178 + $0x40] sm:$0xff] %v195
                %v197 = vld [vmem:[%s177 + $0x48] sm:$0xff]
                %198 = vst [vmem:[%s178 + $0x48] sm:$0xff] %v197
                %v199 = vld [vmem:[%s177 + $0x50] sm:$0xff]
                %200 = vst [vmem:[%s178 + $0x50] sm:$0xff] %v199
                %v201 = vld [vmem:[%s177 + $0x58] sm:$0xff]
                %202 = vst [vmem:[%s178 + $0x58] sm:$0xff] %v201
                %v203 = vld [vmem:[%s177 + $0x3e8] sm:$0xff]
                %204 = vst [vmem:[%s178 + $0x64] sm:$0xff] %v203
                %v205 = vld [vmem:[%s177 + $0x3f0] sm:$0xff]
                %206 = vst [vmem:[%s178 + $0x6c] sm:$0xff] %v205
                %v207 = vld [vmem:[%s177 + $0x3f8] sm:$0xff]
                %208 = vst [vmem:[%s178 + $0x74] sm:$0xff] %v207
                %v209 = vld [vmem:[%s177 + $0x400] sm:$0xff]
                %210 = vst [vmem:[%s178 + $0x7c] sm:$0xff] %v209
                %v211 = vld [vmem:[%s177 + $0x408] sm:$0xff]
                %212 = vst [vmem:[%s178 + $0x84] sm:$0xff] %v211
                %v213 = vld [vmem:[%s177 + $0x410] sm:$0xff]
                %214 = vst [vmem:[%s178 + $0x8c] sm:$0xff] %v213
                %v215 = vld [vmem:[%s177 + $0x418] sm:$0xff]
                %216 = vst [vmem:[%s178 + $0x94] sm:$0xff] %v215
                %v217 = vld [vmem:[%s177 + $0x420] sm:$0xff]
                %218 = vst [vmem:[%s178 + $0x9c] sm:$0xff] %v217
                %v219 = vld [vmem:[%s177 + $0x428] sm:$0xff]
                %220 = vst [vmem:[%s178 + $0xa4] sm:$0xff] %v219
                %v221 = vld [vmem:[%s177 + $0x430] sm:$0xff]
                %222 = vst [vmem:[%s178 + $0xac] sm:$0xff] %v221
                %v223 = vld [vmem:[%s177 + $0x438] sm:$0xff]
                %224 = vst [vmem:[%s178 + $0xb4] sm:$0xff] %v223
                %v225 = vld [vmem:[%s177 + $0x440] sm:$0xff]
                %226 = vst [vmem:[%s178 + $0xbc] sm:$0xff] %v225
                %v227 = vld [vmem:[%s177 + $0x7d0] sm:$0xff]
                %228 = vst [vmem:[%s178 + $0xc8] sm:$0xff] %v227
                %v229 = vld [vmem:[%s177 + $0x7d8] sm:$0xff]
                %230 = vst [vmem:[%s178 + $0xd0] sm:$0xff] %v229
                %v231 = vld [vmem:[%s177 + $0x7e0] sm:$0xff]
                %232 = vst [vmem:[%s178 + $0xd8] sm:$0xff] %v231
                %v233 = vld [vmem:[%s177 + $0x7e8] sm:$0xff]
                %234 = vst [vmem:[%s178 + $0xe0] sm:$0xff] %v233
                %v235 = vld [vmem:[%s177 + $0x7f0] sm:$0xff]
                %236 = vst [vmem:[%s178 + $0xe8] sm:$0xff] %v235
                %v237 = vld [vmem:[%s177 + $0x7f8] sm:$0xff]
                %238 = vst [vmem:[%s178 + $0xf0] sm:$0xff] %v237
                %v239 = vld [vmem:[%s177 + $0x800] sm:$0xff]
                %240 = vst [vmem:[%s178 + $0xf8] sm:$0xff] %v239
                %v241 = vld [vmem:[%s177 + $0x808] sm:$0xff]
                %242 = vst [vmem:[%s178 + $0x100] sm:$0xff] %v241
                %v243 = vld [vmem:[%s177 + $0x810] sm:$0xff]
                %244 = vst [vmem:[%s178 + $0x108] sm:$0xff] %v243
                %v245 = vld [vmem:[%s177 + $0x818] sm:$0xff]
                %246 = vst [vmem:[%s178 + $0x110] sm:$0xff] %v245
                %v247 = vld [vmem:[%s177 + $0x820] sm:$0xff]
                %248 = vst [vmem:[%s178 + $0x118] sm:$0xff] %v247
                %v249 = vld [vmem:[%s177 + $0x828] sm:$0xff]
                %250 = vst [vmem:[%s178 + $0x120] sm:$0xff] %v249
                %v251 = vld [vmem:[%s177 + $0xbb8] sm:$0xff]
                %252 = vst [vmem:[%s178 + $0x12c] sm:$0xff] %v251
                %v253 = vld [vmem:[%s177 + $0xbc0] sm:$0xff]
                %254 = vst [vmem:[%s178 + $0x134] sm:$0xff] %v253
                %v255 = vld [vmem:[%s177 + $0xbc8] sm:$0xff]
                %256 = vst [vmem:[%s178 + $0x13c] sm:$0xff] %v255
                %v257 = vld [vmem:[%s177 + $0xbd0] sm:$0xff]
                %258 = vst [vmem:[%s178 + $0x144] sm:$0xff] %v257
                %v259 = vld [vmem:[%s177 + $0xbd8] sm:$0xff]
                %260 = vst [vmem:[%s178 + $0x14c] sm:$0xff] %v259
                %v261 = vld [vmem:[%s177 + $0xbe0] sm:$0xff]
                %262 = vst [vmem:[%s178 + $0x154] sm:$0xff] %v261
                %v263 = vld [vmem:[%s177 + $0xbe8] sm:$0xff]
                %264 = vst [vmem:[%s178 + $0x15c] sm:$0xff] %v263
                %v265 = vld [vmem:[%s177 + $0xbf0] sm:$0xff]
                %266 = vst [vmem:[%s178 + $0x164] sm:$0xff] %v265
                %v267 = vld [vmem:[%s177 + $0xbf8] sm:$0xff]
                %268 = vst [vmem:[%s178 + $0x16c] sm:$0xff] %v267
                %v269 = vld [vmem:[%s177 + $0xc00] sm:$0xff]
                %270 = vst [vmem:[%s178 + $0x174] sm:$0xff] %v269
                %v271 = vld [vmem:[%s177 + $0xc08] sm:$0xff]
                %272 = vst [vmem:[%s178 + $0x17c] sm:$0xff] %v271
                %v273 = vld [vmem:[%s177 + $0xc10] sm:$0xff]
                %274 = vst [vmem:[%s178 + $0x184] sm:$0xff] %v273
              $region41: #{music_x_transformer_forward.3} parent=35 // loop_footer
                %s176 = sadd.s32 1, %s172
              $region42: #{music_x_transformer_forward.3} parent=35 // loop_footer_branch
                %171 = sbr.rel target = $region38
              $region43: #{music_x_transformer_forward.3} parent=35 // loop_exit
                _
              loop: start=0, step=1, limit=1
              $region44: #{music_x_transformer_forward.3} parent=35 // loop_pre_header
                _
              $region45: #{music_x_transformer_forward.3} parent=35 // loop_header
                %s277 = sphi 0, %s281
                %p278 = scmp.ge.s32.totalorder %s277, 1
                %s282 = sphi %s169, %s169
                %s283 = sphi %s170, %s170
              $region46: #{music_x_transformer_forward.3} parent=35 // loop_header_branch
                %280 = sbr.rel (%p278) target = $region50
              $region47: #{music_x_transformer_forward.3} parent=35 // loop_body
                %v284 = vld [vmem:[%s282] sm:$0xf]
                %285 = vst [vmem:[%s283] sm:$0xf] %v284
                %v286 = vld [vmem:[%s282 + $0x3e8] sm:$0xf]
                %287 = vst [vmem:[%s283 + $0x64] sm:$0xf] %v286
                %v288 = vld [vmem:[%s282 + $0x7d0] sm:$0xf]
                %289 = vst [vmem:[%s283 + $0xc8] sm:$0xf] %v288
                %v290 = vld [vmem:[%s282 + $0xbb8] sm:$0xf]
                %291 = vst [vmem:[%s283 + $0x12c] sm:$0xf] %v290
              $region48: #{music_x_transformer_forward.3} parent=35 // loop_footer
                %s281 = sadd.s32 1, %s277
              $region49: #{music_x_transformer_forward.3} parent=35 // loop_footer_branch
                %276 = sbr.rel target = $region45
              $region50: #{music_x_transformer_forward.3} parent=35 // loop_exit
                _
            $region36: #{music_x_transformer_forward.3} parent=31 // pred_fallthru
              _
          $region32: #{music_x_transformer_forward.3} parent=27 // pred_fallthru
            _
          %292 = vnop
        $region28: #{music_x_transformer_forward.3} parent=23 // pred_fallthru
          _
        // Predicated region
        $region51: #{music_x_transformer_forward.3} parent=23 // pred_check
          %p293 = pneg %p98
        $region52: #{music_x_transformer_forward.3} parent=23 // pred_check_branch
          %295 = sbr.rel (%p293) target = $region54
        $region53: #{music_x_transformer_forward.3} parent=23 // pred_region
          %s296 = smul.u32 25, %s10
          %p297 = scmp.lt.s32.totalorder %s296, 249
          %s298 = scalar_select %p297, %s296, 249
          %s299 = scalar_lea.vmem %s3, %s298
          %s300 = smul.u32 25, %s10
        $region54: #{music_x_transformer_forward.3} parent=23 // pred_fallthru
          _
      $region24: #{music_x_transformer_forward.3} parent=5 // pred_fallthru
        _
      %p301 = scmp.le.s32.totalorder 1, %s10
      %p302 = scmp.lt.s32.totalorder %s10, 11
      %p303 = pnand %p301, %p302
      %p304 = pneg %p303
      // Predicated region
      $region55: #{music_x_transformer_forward.3} parent=5 // pred_check
        _
      $region56: #{music_x_transformer_forward.3} parent=5 // pred_check_branch
        %306 = sbr.rel (%p303) target = $region58
      $region57: #{music_x_transformer_forward.3} parent=5 // pred_region
        %s307 = ssub.s32 %s10, 1
        %s308 = sand.u32 %s65, 1
        %s309 = sand.u32 %s65, 1
        %s310 = smul.addr %s309, 400
        %s311 = scalar_lea.vmem [#allocation2], %s310
        // Predicated region
        $region59: #{music_x_transformer_forward.3} parent=57 // pred_check
          %p312 = pneg %p78
        $region60: #{music_x_transformer_forward.3} parent=57 // pred_check_branch
          %314 = sbr.rel (%p312) target = $region62
        $region61: #{music_x_transformer_forward.3} parent=57 // pred_region
          _
        $region62: #{music_x_transformer_forward.3} parent=57 // pred_fallthru
          _
        %p315 = pneg %p31
        %p316 = pneg %p28
        %p317 = pneg %p52
        %p318 = pneg %p49
        %s319 = sand.u32 %s65, 1
        %s320 = sand.u32 %s65, 1
        %s321 = smul.addr %s320, 400
        %s322 = scalar_lea.vmem [#allocation2], %s321
        %p323 = pneg %p78
        %p324 = pneg %p75
        %s325 = smul.u32 25, %s15
        %p326 = scmp.lt.s32.totalorder %s325, 249
        %s327 = scalar_select %p326, %s325, 249
        %s328 = scalar_lea.vmem %s3, %s327
        %p329 = pneg %p104
        %p330 = pneg %p101
        %p331 = pneg %p130
        %p332 = pneg %p127
        %s333 = sand.u32 %s117, 1
        %s334 = sand.u32 %s117, 1
        %s335 = smul.addr %s334, 16
        %s336 = scalar_lea.vmem [#allocation3], %s335
        %s337 = smul.u32 25, %s15
        %s338 = smul.u32 25, %s15
        %p339 = scmp.lt.s32.totalorder %s338, 249
        %s340 = scalar_select %p339, %s338, 249
        %s341 = scalar_lea.vmem %s3, %s340
        %s342 = smul.u32 25, %s15
        %v344 = vld [vmem:[%s0] sm:$0xff]
        %v345 = vld [vmem:[%s0 + $0x8] sm:$0xff]
        %v346 = vpack.c.bf16 %v345, %v344
        %v347 = vld [vmem:[%s311] sm:$0xff]
        %v348 = vld [vmem:[%s311 + $0x8] sm:$0xff]
        %v349 = vld [vmem:[%s311 + $0x10] sm:$0xff]
        %v350 = vld [vmem:[%s311 + $0x18] sm:$0xff]
        %v351 = vld [vmem:[%s311 + $0x20] sm:$0xff]
        %v352 = vld [vmem:[%s311 + $0x28] sm:$0xff]
        %v353 = vld [vmem:[%s311 + $0x30] sm:$0xff]
        %v354 = vld [vmem:[%s311 + $0x38] sm:$0xff]
        %v355 = vld [vmem:[%s311 + $0x40] sm:$0xff]
        %v356 = vld [vmem:[%s311 + $0x48] sm:$0xff]
        %v357 = vld [vmem:[%s311 + $0x50] sm:$0xff]
        %v358 = vld [vmem:[%s311 + $0x58] sm:$0xff]
        %v359 = vld [vmem:[%s311 + $0x60] sm:$0xf]
        %v360 = vld [vmem:[%s311 + $0x64] sm:$0xff]
        %v361 = vld [vmem:[%s311 + $0x6c] sm:$0xff]
        %v362 = vld [vmem:[%s311 + $0x74] sm:$0xff]
        %v363 = vld [vmem:[%s311 + $0x7c] sm:$0xff]
        %v364 = vld [vmem:[%s311 + $0x84] sm:$0xff]
        %v365 = vld [vmem:[%s311 + $0x8c] sm:$0xff]
        %v366 = vld [vmem:[%s311 + $0x94] sm:$0xff]
        %v367 = vld [vmem:[%s311 + $0x9c] sm:$0xff]
        %v368 = vld [vmem:[%s311 + $0xa4] sm:$0xff]
        %v369 = vld [vmem:[%s311 + $0xac] sm:$0xff]
        %v370 = vld [vmem:[%s311 + $0xb4] sm:$0xff]
        %v371 = vld [vmem:[%s311 + $0xbc] sm:$0xff]
        %v372 = vld [vmem:[%s311 + $0xc4] sm:$0xf]
        %v373 = vld [vmem:[%s311 + $0xc8] sm:$0xff]
        %v374 = vld [vmem:[%s311 + $0xd0] sm:$0xff]
        %v375 = vld [vmem:[%s311 + $0xd8] sm:$0xff]
        %v376 = vld [vmem:[%s311 + $0xe0] sm:$0xff]
        %v377 = vld [vmem:[%s311 + $0xe8] sm:$0xff]
        %v378 = vld [vmem:[%s311 + $0xf0] sm:$0xff]
        %v379 = vld [vmem:[%s311 + $0xf8] sm:$0xff]
        %v380 = vld [vmem:[%s311 + $0x100] sm:$0xff]
        %v381 = vld [vmem:[%s311 + $0x108] sm:$0xff]
        %v382 = vld [vmem:[%s311 + $0x110] sm:$0xff]
        %v383 = vld [vmem:[%s311 + $0x118] sm:$0xff]
        %v384 = vld [vmem:[%s311 + $0x120] sm:$0xff]
        %v385 = vld [vmem:[%s311 + $0x128] sm:$0xf]
        %v386 = vld [vmem:[%s311 + $0x12c] sm:$0xff]
        %v387 = vld [vmem:[%s311 + $0x134] sm:$0xff]
        %v388 = vld [vmem:[%s311 + $0x13c] sm:$0xff]
        %v389 = vld [vmem:[%s311 + $0x144] sm:$0xff]
        %v390 = vld [vmem:[%s311 + $0x14c] sm:$0xff]
        %v391 = vld [vmem:[%s311 + $0x154] sm:$0xff]
        %v392 = vld [vmem:[%s311 + $0x15c] sm:$0xff]
        %v393 = vld [vmem:[%s311 + $0x164] sm:$0xff]
        %v394 = vld [vmem:[%s311 + $0x16c] sm:$0xff]
        %v395 = vld [vmem:[%s311 + $0x174] sm:$0xff]
        %v396 = vld [vmem:[%s311 + $0x17c] sm:$0xff]
        %v397 = vld [vmem:[%s311 + $0x184] sm:$0xff]
        %v398 = vld [vmem:[%s311 + $0x18c] sm:$0xf]
        %v399 = vld [vmem:[%s341] sm:$0xff]
        %v400 = vld [vmem:[%s341 + $0x8] sm:$0xff]
        %v401 = vld [vmem:[%s341 + $0x10] sm:$0xff]
        %v402 = vld [vmem:[%s341 + $0x18] sm:$0x1]
        %v407 = vlaneseq
        %v408 = vshrl.u32 %v407, 7
        %v409 = vsub.s32 0, %v408
        %v410 = vrot.slane %v399, %v409
        %v411 = vlaneseq
        %v412 = vshrl.u32 %v411, 7
        %v413 = vsub.s32 1, %v412
        %v414 = vrot.slane %v399, %v413
        %v415 = vlaneseq
        %v416 = vshrl.u32 %v415, 7
        %v417 = vsub.s32 2, %v416
        %v418 = vrot.slane %v399, %v417
        %v419 = vlaneseq
        %v420 = vshrl.u32 %v419, 7
        %v421 = vsub.s32 3, %v420
        %v422 = vrot.slane %v399, %v421
        %v423 = vlaneseq
        %v424 = vshrl.u32 %v423, 7
        %v425 = vsub.s32 4, %v424
        %v426 = vrot.slane %v399, %v425
        %v427 = vlaneseq
        %v428 = vshrl.u32 %v427, 7
        %v429 = vsub.s32 5, %v428
        %v430 = vrot.slane %v399, %v429
        %v431 = vlaneseq
        %v432 = vshrl.u32 %v431, 7
        %v433 = vsub.s32 6, %v432
        %v434 = vrot.slane %v399, %v433
        %v435 = vlaneseq
        %v436 = vshrl.u32 %v435, 7
        %v437 = vsub.s32 7, %v436
        %v438 = vrot.slane %v399, %v437
        %v439 = vlaneseq
        %v440 = vshrl.u32 %v439, 7
        %v441 = vsub.s32 0, %v440
        %v442 = vrot.slane %v400, %v441
        %v443 = vlaneseq
        %v444 = vshrl.u32 %v443, 7
        %v445 = vsub.s32 1, %v444
        %v446 = vrot.slane %v400, %v445
        %v447 = vlaneseq
        %v448 = vshrl.u32 %v447, 7
        %v449 = vsub.s32 2, %v448
        %v450 = vrot.slane %v400, %v449
        %v451 = vlaneseq
        %v452 = vshrl.u32 %v451, 7
        %v453 = vsub.s32 3, %v452
        %v454 = vrot.slane %v400, %v453
        %v455 = vlaneseq
        %v456 = vshrl.u32 %v455, 7
        %v457 = vsub.s32 4, %v456
        %v458 = vrot.slane %v400, %v457
        %v459 = vlaneseq
        %v460 = vshrl.u32 %v459, 7
        %v461 = vsub.s32 5, %v460
        %v462 = vrot.slane %v400, %v461
        %v463 = vlaneseq
        %v464 = vshrl.u32 %v463, 7
        %v465 = vsub.s32 6, %v464
        %v466 = vrot.slane %v400, %v465
        %v467 = vlaneseq
        %v468 = vshrl.u32 %v467, 7
        %v469 = vsub.s32 7, %v468
        %v470 = vrot.slane %v400, %v469
        %v471 = vlaneseq
        %v472 = vshrl.u32 %v471, 7
        %v473 = vsub.s32 0, %v472
        %v474 = vrot.slane %v401, %v473
        %v475 = vlaneseq
        %v476 = vshrl.u32 %v475, 7
        %v477 = vsub.s32 1, %v476
        %v478 = vrot.slane %v401, %v477
        %v479 = vlaneseq
        %v480 = vshrl.u32 %v479, 7
        %v481 = vsub.s32 2, %v480
        %v482 = vrot.slane %v401, %v481
        %v483 = vlaneseq
        %v484 = vshrl.u32 %v483, 7
        %v485 = vsub.s32 3, %v484
        %v486 = vrot.slane %v401, %v485
        %v487 = vlaneseq
        %v488 = vshrl.u32 %v487, 7
        %v489 = vsub.s32 4, %v488
        %v490 = vrot.slane %v401, %v489
        %v491 = vlaneseq
        %v492 = vshrl.u32 %v491, 7
        %v493 = vsub.s32 5, %v492
        %v494 = vrot.slane %v401, %v493
        %v495 = vlaneseq
        %v496 = vshrl.u32 %v495, 7
        %v497 = vsub.s32 6, %v496
        %v498 = vrot.slane %v401, %v497
        %v499 = vlaneseq
        %v500 = vshrl.u32 %v499, 7
        %v501 = vsub.s32 7, %v500
        %v502 = vrot.slane %v401, %v501
        %v503 = vlaneseq
        %v504 = vshrl.u32 %v503, 7
        %v505 = vsub.s32 0, %v504
        %v506 = vrot.slane %v402, %v505
        %v584 = vunpack.c.l.b16 %v347
        %v585 = vunpack.c.h.b16 %v347
        %v586 = vunpack.c.l.b16 %v348
        %v587 = vunpack.c.h.b16 %v348
        %v588 = vunpack.c.l.b16 %v349
        %v589 = vunpack.c.h.b16 %v349
        %v590 = vunpack.c.l.b16 %v350
        %v591 = vunpack.c.h.b16 %v350
        %v592 = vunpack.c.l.b16 %v351
        %v593 = vunpack.c.h.b16 %v351
        %v594 = vunpack.c.l.b16 %v352
        %v595 = vunpack.c.h.b16 %v352
        %v596 = vunpack.c.l.b16 %v353
        %v597 = vunpack.c.h.b16 %v353
        %v598 = vunpack.c.l.b16 %v354
        %v599 = vunpack.c.h.b16 %v354
        %v600 = vunpack.c.l.b16 %v355
        %v601 = vunpack.c.h.b16 %v355
        %v602 = vunpack.c.l.b16 %v356
        %v603 = vunpack.c.h.b16 %v356
        %v604 = vunpack.c.l.b16 %v357
        %v605 = vunpack.c.h.b16 %v357
        %v606 = vunpack.c.l.b16 %v358
        %v607 = vunpack.c.h.b16 %v358
        %v608 = vunpack.c.l.b16 %v359
        %v609 = vunpack.c.l.b16 %v360
        %v610 = vunpack.c.h.b16 %v360
        %v611 = vunpack.c.l.b16 %v361
        %v612 = vunpack.c.h.b16 %v361
        %v613 = vunpack.c.l.b16 %v362
        %v614 = vunpack.c.h.b16 %v362
        %v615 = vunpack.c.l.b16 %v363
        %v616 = vunpack.c.h.b16 %v363
        %v617 = vunpack.c.l.b16 %v364
        %v618 = vunpack.c.h.b16 %v364
        %v619 = vunpack.c.l.b16 %v365
        %v620 = vunpack.c.h.b16 %v365
        %v621 = vunpack.c.l.b16 %v366
        %v622 = vunpack.c.h.b16 %v366
        %v623 = vunpack.c.l.b16 %v367
        %v624 = vunpack.c.h.b16 %v367
        %v625 = vunpack.c.l.b16 %v368
        %v626 = vunpack.c.h.b16 %v368
        %v627 = vunpack.c.l.b16 %v369
        %v628 = vunpack.c.h.b16 %v369
        %v629 = vunpack.c.l.b16 %v370
        %v630 = vunpack.c.h.b16 %v370
        %v631 = vunpack.c.l.b16 %v371
        %v632 = vunpack.c.h.b16 %v371
        %v633 = vunpack.c.l.b16 %v372
        %v634 = vunpack.c.l.b16 %v373
        %v635 = vunpack.c.h.b16 %v373
        %v636 = vunpack.c.l.b16 %v374
        %v637 = vunpack.c.h.b16 %v374
        %v638 = vunpack.c.l.b16 %v375
        %v639 = vunpack.c.h.b16 %v375
        %v640 = vunpack.c.l.b16 %v376
        %v641 = vunpack.c.h.b16 %v376
        %v642 = vunpack.c.l.b16 %v377
        %v643 = vunpack.c.h.b16 %v377
        %v644 = vunpack.c.l.b16 %v378
        %v645 = vunpack.c.h.b16 %v378
        %v646 = vunpack.c.l.b16 %v379
        %v647 = vunpack.c.h.b16 %v379
        %v648 = vunpack.c.l.b16 %v380
        %v649 = vunpack.c.h.b16 %v380
        %v650 = vunpack.c.l.b16 %v381
        %v651 = vunpack.c.h.b16 %v381
        %v652 = vunpack.c.l.b16 %v382
        %v653 = vunpack.c.h.b16 %v382
        %v654 = vunpack.c.l.b16 %v383
        %v655 = vunpack.c.h.b16 %v383
        %v656 = vunpack.c.l.b16 %v384
        %v657 = vunpack.c.h.b16 %v384
        %v658 = vunpack.c.l.b16 %v385
        %v659 = vunpack.c.l.b16 %v386
        %v660 = vunpack.c.h.b16 %v386
        %v661 = vunpack.c.l.b16 %v387
        %v662 = vunpack.c.h.b16 %v387
        %v663 = vunpack.c.l.b16 %v388
        %v664 = vunpack.c.h.b16 %v388
        %v665 = vunpack.c.l.b16 %v389
        %v666 = vunpack.c.h.b16 %v389
        %v667 = vunpack.c.l.b16 %v390
        %v668 = vunpack.c.h.b16 %v390
        %v669 = vunpack.c.l.b16 %v391
        %v670 = vunpack.c.h.b16 %v391
        %v671 = vunpack.c.l.b16 %v392
        %v672 = vunpack.c.h.b16 %v392
        %v673 = vunpack.c.l.b16 %v393
        %v674 = vunpack.c.h.b16 %v393
        %v675 = vunpack.c.l.b16 %v394
        %v676 = vunpack.c.h.b16 %v394
        %v677 = vunpack.c.l.b16 %v395
        %v678 = vunpack.c.h.b16 %v395
        %v679 = vunpack.c.l.b16 %v396
        %v680 = vunpack.c.h.b16 %v396
        %v681 = vunpack.c.l.b16 %v397
        %v682 = vunpack.c.h.b16 %v397
        %v683 = vunpack.c.l.b16 %v398
        %v684 = vpack.c.b16 %v609, %v584
        %v685 = vpack.c.b16 %v610, %v585
        %v686 = vpack.c.b16 %v611, %v586
        %v687 = vpack.c.b16 %v612, %v587
        %v688 = vpack.c.b16 %v613, %v588
        %v689 = vpack.c.b16 %v614, %v589
        %v690 = vpack.c.b16 %v615, %v590
        %v691 = vpack.c.b16 %v616, %v591
        %v692 = vpack.c.b16 %v617, %v592
        %v693 = vpack.c.b16 %v618, %v593
        %v694 = vpack.c.b16 %v619, %v594
        %v695 = vpack.c.b16 %v620, %v595
        %v696 = vpack.c.b16 %v621, %v596
        %v697 = vpack.c.b16 %v622, %v597
        %v698 = vpack.c.b16 %v623, %v598
        %v699 = vpack.c.b16 %v624, %v599
        %v700 = vpack.c.b16 %v625, %v600
        %v701 = vpack.c.b16 %v626, %v601
        %v702 = vpack.c.b16 %v627, %v602
        %v703 = vpack.c.b16 %v628, %v603
        %v704 = vpack.c.b16 %v629, %v604
        %v705 = vpack.c.b16 %v630, %v605
        %v706 = vpack.c.b16 %v631, %v606
        %v707 = vpack.c.b16 %v632, %v607
        %v708 = vpack.c.b16 %v633, %v608
        %v709 = vpack.c.b16 %v659, %v634
        %v710 = vpack.c.b16 %v660, %v635
        %v711 = vpack.c.b16 %v661, %v636
        %v712 = vpack.c.b16 %v662, %v637
        %v713 = vpack.c.b16 %v663, %v638
        %v714 = vpack.c.b16 %v664, %v639
        %v715 = vpack.c.b16 %v665, %v640
        %v716 = vpack.c.b16 %v666, %v641
        %v717 = vpack.c.b16 %v667, %v642
        %v718 = vpack.c.b16 %v668, %v643
        %v719 = vpack.c.b16 %v669, %v644
        %v720 = vpack.c.b16 %v670, %v645
        %v721 = vpack.c.b16 %v671, %v646
        %v722 = vpack.c.b16 %v672, %v647
        %v723 = vpack.c.b16 %v673, %v648
        %v724 = vpack.c.b16 %v674, %v649
        %v725 = vpack.c.b16 %v675, %v650
        %v726 = vpack.c.b16 %v676, %v651
        %v727 = vpack.c.b16 %v677, %v652
        %v728 = vpack.c.b16 %v678, %v653
        %v729 = vpack.c.b16 %v679, %v654
        %v730 = vpack.c.b16 %v680, %v655
        %v731 = vpack.c.b16 %v681, %v656
        %v732 = vpack.c.b16 %v682, %v657
        %v733 = vpack.c.b16 %v683, %v658
        %vm784 = vcmask 261120
        %v786 = vsel %vm784, %v346, 0
        %788 = vmatprep.subr.bf16.mxu0 %v685
        %789 = vmatpush1.bf16.msra.mxu0 %v684
        %790 = vmatprep.subr.bf16.mxu0 %v710
        %791 = vmatpush1.bf16.msra.mxu0 %v709
        %792 = vmatprep.subr.bf16.mxu0 0
        %793 = vmatpush1.bf16.msra.mxu0 0
        %794 = vmatprep.subr.bf16.mxu0 0
        %795 = vmatpush1.bf16.msra.mxu0 0
        %796 = vmatprep.subr.bf16.mxu0 0
        %797 = vmatpush1.bf16.msra.mxu0 0
        %798 = vmatprep.subr.bf16.mxu0 0
        %799 = vmatpush1.bf16.msra.mxu0 0
        %800 = vmatprep.subr.bf16.mxu0 0
        %801 = vmatpush1.bf16.msra.mxu0 0
        %802 = vmatprep.subr.bf16.mxu0 0
        %803 = vmatpush1.bf16.msra.mxu0 0
        %804 = vmatprep.subr.bf16.mxu0 0
        %805 = vmatpush1.bf16.msra.mxu0 0
        %806 = vmatprep.subr.bf16.mxu0 0
        %807 = vmatpush1.bf16.msra.mxu0 0
        %808 = vmatprep.subr.bf16.mxu0 0
        %809 = vmatpush1.bf16.msra.mxu0 0
        %810 = vmatprep.subr.bf16.mxu0 0
        %811 = vmatpush1.bf16.msra.mxu0 0
        %812 = vmatprep.subr.bf16.mxu0 0
        %813 = vmatpush1.bf16.msra.mxu0 0
        %814 = vmatprep.subr.bf16.mxu0 0
        %815 = vmatpush1.bf16.msra.mxu0 0
        %816 = vmatprep.subr.bf16.mxu0 0
        %817 = vmatpush1.bf16.msra.mxu0 0
        %818 = vmatprep.subr.bf16.mxu0 0
        %819 = vmatpush1.bf16.msra.mxu0 0
        %820 = vmatprep.mubr.bf16.mxu0 0
        %821 = vmatmul.mubr.bf16.gmra.mrb[0].mxu0 %v786
        %v822 = vpop.f32.mrb[0].mxu0
        %v823 = vadd.f32 %v410, %v822
        %v824 = vpop.f32.mrb[0].mxu0
        %v825 = vadd.f32 %v414, %v824
        %v826 = vpop.f32.mrb[0].mxu0
        %v827 = vadd.f32 %v410, %v826
        %v828 = vpop.f32.mrb[0].mxu0
        %v829 = vadd.f32 %v414, %v828
        %830 = vdwg.mxu0
        %831 = vmatprep.subr.bf16.mxu0 %v687
        %832 = vmatpush1.bf16.msra.mxu0 %v686
        %833 = vmatprep.subr.bf16.mxu0 %v712
        %834 = vmatpush1.bf16.msra.mxu0 %v711
        %835 = vmatprep.subr.bf16.mxu0 0
        %836 = vmatpush1.bf16.msra.mxu0 0
        %837 = vmatprep.subr.bf16.mxu0 0
        %838 = vmatpush1.bf16.msra.mxu0 0
        %839 = vmatprep.subr.bf16.mxu0 0
        %840 = vmatpush1.bf16.msra.mxu0 0
        %841 = vmatprep.subr.bf16.mxu0 0
        %842 = vmatpush1.bf16.msra.mxu0 0
        %843 = vmatprep.subr.bf16.mxu0 0
        %844 = vmatpush1.bf16.msra.mxu0 0
        %845 = vmatprep.subr.bf16.mxu0 0
        %846 = vmatpush1.bf16.msra.mxu0 0
        %847 = vmatprep.subr.bf16.mxu0 0
        %848 = vmatpush1.bf16.msra.mxu0 0
        %849 = vmatprep.subr.bf16.mxu0 0
        %850 = vmatpush1.bf16.msra.mxu0 0
        %851 = vmatprep.subr.bf16.mxu0 0
        %852 = vmatpush1.bf16.msra.mxu0 0
        %853 = vmatprep.subr.bf16.mxu0 0
        %854 = vmatpush1.bf16.msra.mxu0 0
        %855 = vmatprep.subr.bf16.mxu0 0
        %856 = vmatpush1.bf16.msra.mxu0 0
        %857 = vmatprep.subr.bf16.mxu0 0
        %858 = vmatpush1.bf16.msra.mxu0 0
        %859 = vmatprep.subr.bf16.mxu0 0
        %860 = vmatpush1.bf16.msra.mxu0 0
        %861 = vmatprep.subr.bf16.mxu0 0
        %862 = vmatpush1.bf16.msra.mxu0 0
        %863 = vmatprep.mubr.bf16.mxu0 0
        %864 = vmatmul.mubr.bf16.gmra.mrb[0].mxu0 %v786
        %v865 = vpop.f32.mrb[0].mxu0
        %v866 = vadd.f32 %v418, %v865
        %v867 = vpop.f32.mrb[0].mxu0
        %v868 = vadd.f32 %v422, %v867
        %v869 = vpop.f32.mrb[0].mxu0
        %v870 = vadd.f32 %v418, %v869
        %v871 = vpop.f32.mrb[0].mxu0
        %v872 = vadd.f32 %v422, %v871
        %873 = vdwg.mxu0
        %874 = vmatprep.subr.bf16.mxu0 %v689
        %875 = vmatpush1.bf16.msra.mxu0 %v688
        %876 = vmatprep.subr.bf16.mxu0 %v714
        %877 = vmatpush1.bf16.msra.mxu0 %v713
        %878 = vmatprep.subr.bf16.mxu0 0
        %879 = vmatpush1.bf16.msra.mxu0 0
        %880 = vmatprep.subr.bf16.mxu0 0
        %881 = vmatpush1.bf16.msra.mxu0 0
        %882 = vmatprep.subr.bf16.mxu0 0
        %883 = vmatpush1.bf16.msra.mxu0 0
        %884 = vmatprep.subr.bf16.mxu0 0
        %885 = vmatpush1.bf16.msra.mxu0 0
        %886 = vmatprep.subr.bf16.mxu0 0
        %887 = vmatpush1.bf16.msra.mxu0 0
        %888 = vmatprep.subr.bf16.mxu0 0
        %889 = vmatpush1.bf16.msra.mxu0 0
        %890 = vmatprep.subr.bf16.mxu0 0
        %891 = vmatpush1.bf16.msra.mxu0 0
        %892 = vmatprep.subr.bf16.mxu0 0
        %893 = vmatpush1.bf16.msra.mxu0 0
        %894 = vmatprep.subr.bf16.mxu0 0
        %895 = vmatpush1.bf16.msra.mxu0 0
        %896 = vmatprep.subr.bf16.mxu0 0
        %897 = vmatpush1.bf16.msra.mxu0 0
        %898 = vmatprep.subr.bf16.mxu0 0
        %899 = vmatpush1.bf16.msra.mxu0 0
        %900 = vmatprep.subr.bf16.mxu0 0
        %901 = vmatpush1.bf16.msra.mxu0 0
        %902 = vmatprep.subr.bf16.mxu0 0
        %903 = vmatpush1.bf16.msra.mxu0 0
        %904 = vmatprep.subr.bf16.mxu0 0
        %905 = vmatpush1.bf16.msra.mxu0 0
        %906 = vmatprep.mubr.bf16.mxu0 0
        %907 = vmatmul.mubr.bf16.gmra.mrb[0].mxu0 %v786
        %v908 = vpop.f32.mrb[0].mxu0
        %v909 = vadd.f32 %v426, %v908
        %v910 = vpop.f32.mrb[0].mxu0
        %v911 = vadd.f32 %v430, %v910
        %v912 = vpop.f32.mrb[0].mxu0
        %v913 = vadd.f32 %v426, %v912
        %v914 = vpop.f32.mrb[0].mxu0
        %v915 = vadd.f32 %v430, %v914
        %916 = vdwg.mxu0
        %917 = vmatprep.subr.bf16.mxu0 %v691
        %918 = vmatpush1.bf16.msra.mxu0 %v690
        %919 = vmatprep.subr.bf16.mxu0 %v716
        %920 = vmatpush1.bf16.msra.mxu0 %v715
        %921 = vmatprep.subr.bf16.mxu0 0
        %922 = vmatpush1.bf16.msra.mxu0 0
        %923 = vmatprep.subr.bf16.mxu0 0
        %924 = vmatpush1.bf16.msra.mxu0 0
        %925 = vmatprep.subr.bf16.mxu0 0
        %926 = vmatpush1.bf16.msra.mxu0 0
        %927 = vmatprep.subr.bf16.mxu0 0
        %928 = vmatpush1.bf16.msra.mxu0 0
        %929 = vmatprep.subr.bf16.mxu0 0
        %930 = vmatpush1.bf16.msra.mxu0 0
        %931 = vmatprep.subr.bf16.mxu0 0
        %932 = vmatpush1.bf16.msra.mxu0 0
        %933 = vmatprep.subr.bf16.mxu0 0
        %934 = vmatpush1.bf16.msra.mxu0 0
        %935 = vmatprep.subr.bf16.mxu0 0
        %936 = vmatpush1.bf16.msra.mxu0 0
        %937 = vmatprep.subr.bf16.mxu0 0
        %938 = vmatpush1.bf16.msra.mxu0 0
        %939 = vmatprep.subr.bf16.mxu0 0
        %940 = vmatpush1.bf16.msra.mxu0 0
        %941 = vmatprep.subr.bf16.mxu0 0
        %942 = vmatpush1.bf16.msra.mxu0 0
        %943 = vmatprep.subr.bf16.mxu0 0
        %944 = vmatpush1.bf16.msra.mxu0 0
        %945 = vmatprep.subr.bf16.mxu0 0
        %946 = vmatpush1.bf16.msra.mxu0 0
        %947 = vmatprep.subr.bf16.mxu0 0
        %948 = vmatpush1.bf16.msra.mxu0 0
        %949 = vmatprep.mubr.bf16.mxu0 0
        %950 = vmatmul.mubr.bf16.gmra.mrb[0].mxu0 %v786
        %v951 = vpop.f32.mrb[0].mxu0
        %v952 = vadd.f32 %v434, %v951
        %v953 = vpop.f32.mrb[0].mxu0
        %v954 = vadd.f32 %v438, %v953
        %v955 = vpop.f32.mrb[0].mxu0
        %v956 = vadd.f32 %v434, %v955
        %v957 = vpop.f32.mrb[0].mxu0
        %v958 = vadd.f32 %v438, %v957
        %959 = vdwg.mxu0
        %960 = vmatprep.subr.bf16.mxu0 %v693
        %961 = vmatpush1.bf16.msra.mxu0 %v692
        %962 = vmatprep.subr.bf16.mxu0 %v718
        %963 = vmatpush1.bf16.msra.mxu0 %v717
        %964 = vmatprep.subr.bf16.mxu0 0
        %965 = vmatpush1.bf16.msra.mxu0 0
        %966 = vmatprep.subr.bf16.mxu0 0
        %967 = vmatpush1.bf16.msra.mxu0 0
        %968 = vmatprep.subr.bf16.mxu0 0
        %969 = vmatpush1.bf16.msra.mxu0 0
        %970 = vmatprep.subr.bf16.mxu0 0
        %971 = vmatpush1.bf16.msra.mxu0 0
        %972 = vmatprep.subr.bf16.mxu0 0
        %973 = vmatpush1.bf16.msra.mxu0 0
        %974 = vmatprep.subr.bf16.mxu0 0
        %975 = vmatpush1.bf16.msra.mxu0 0
        %976 = vmatprep.subr.bf16.mxu0 0
        %977 = vmatpush1.bf16.msra.mxu0 0
        %978 = vmatprep.subr.bf16.mxu0 0
        %979 = vmatpush1.bf16.msra.mxu0 0
        %980 = vmatprep.subr.bf16.mxu0 0
        %981 = vmatpush1.bf16.msra.mxu0 0
        %982 = vmatprep.subr.bf16.mxu0 0
        %983 = vmatpush1.bf16.msra.mxu0 0
        %984 = vmatprep.subr.bf16.mxu0 0
        %985 = vmatpush1.bf16.msra.mxu0 0
        %986 = vmatprep.subr.bf16.mxu0 0
        %987 = vmatpush1.bf16.msra.mxu0 0
        %988 = vmatprep.subr.bf16.mxu0 0
        %989 = vmatpush1.bf16.msra.mxu0 0
        %990 = vmatprep.subr.bf16.mxu0 0
        %991 = vmatpush1.bf16.msra.mxu0 0
        %992 = vmatprep.mubr.bf16.mxu0 0
        %993 = vmatmul.mubr.bf16.gmra.mrb[0].mxu0 %v786
        %v994 = vpop.f32.mrb[0].mxu0
        %v995 = vadd.f32 %v442, %v994
        %v996 = vpop.f32.mrb[0].mxu0
        %v997 = vadd.f32 %v446, %v996
        %v998 = vpop.f32.mrb[0].mxu0
        %v999 = vadd.f32 %v442, %v998
        %v1000 = vpop.f32.mrb[0].mxu0
        %v1001 = vadd.f32 %v446, %v1000
        %1002 = vdwg.mxu0
        %1003 = vmatprep.subr.bf16.mxu0 %v695
        %1004 = vmatpush1.bf16.msra.mxu0 %v694
        %1005 = vmatprep.subr.bf16.mxu0 %v720
        %1006 = vmatpush1.bf16.msra.mxu0 %v719
        %1007 = vmatprep.subr.bf16.mxu0 0
        %1008 = vmatpush1.bf16.msra.mxu0 0
        %1009 = vmatprep.subr.bf16.mxu0 0
        %1010 = vmatpush1.bf16.msra.mxu0 0
        %1011 = vmatprep.subr.bf16.mxu0 0
        %1012 = vmatpush1.bf16.msra.mxu0 0
        %1013 = vmatprep.subr.bf16.mxu0 0
        %1014 = vmatpush1.bf16.msra.mxu0 0
        %1015 = vmatprep.subr.bf16.mxu0 0
        %1016 = vmatpush1.bf16.msra.mxu0 0
        %1017 = vmatprep.subr.bf16.mxu0 0
        %1018 = vmatpush1.bf16.msra.mxu0 0
        %1019 = vmatprep.subr.bf16.mxu0 0
        %1020 = vmatpush1.bf16.msra.mxu0 0
        %1021 = vmatprep.subr.bf16.mxu0 0
        %1022 = vmatpush1.bf16.msra.mxu0 0
        %1023 = vmatprep.subr.bf16.mxu0 0
        %1024 = vmatpush1.bf16.msra.mxu0 0
        %1025 = vmatprep.subr.bf16.mxu0 0
        %1026 = vmatpush1.bf16.msra.mxu0 0
        %1027 = vmatprep.subr.bf16.mxu0 0
        %1028 = vmatpush1.bf16.msra.mxu0 0
        %1029 = vmatprep.subr.bf16.mxu0 0
        %1030 = vmatpush1.bf16.msra.mxu0 0
        %1031 = vmatprep.subr.bf16.mxu0 0
        %1032 = vmatpush1.bf16.msra.mxu0 0
        %1033 = vmatprep.subr.bf16.mxu0 0
        %1034 = vmatpush1.bf16.msra.mxu0 0
        %1035 = vmatprep.mubr.bf16.mxu0 0
        %1036 = vmatmul.mubr.bf16.gmra.mrb[0].mxu0 %v786
        %v1037 = vpop.f32.mrb[0].mxu0
        %v1038 = vadd.f32 %v450, %v1037
        %v1039 = vpop.f32.mrb[0].mxu0
        %v1040 = vadd.f32 %v454, %v1039
        %v1041 = vpop.f32.mrb[0].mxu0
        %v1042 = vadd.f32 %v450, %v1041
        %v1043 = vpop.f32.mrb[0].mxu0
        %v1044 = vadd.f32 %v454, %v1043
        %1045 = vdwg.mxu0
        %1046 = vmatprep.subr.bf16.mxu0 %v697
        %1047 = vmatpush1.bf16.msra.mxu0 %v696
        %1048 = vmatprep.subr.bf16.mxu0 %v722
        %1049 = vmatpush1.bf16.msra.mxu0 %v721
        %1050 = vmatprep.subr.bf16.mxu0 0
        %1051 = vmatpush1.bf16.msra.mxu0 0
        %1052 = vmatprep.subr.bf16.mxu0 0
        %1053 = vmatpush1.bf16.msra.mxu0 0
        %1054 = vmatprep.subr.bf16.mxu0 0
        %1055 = vmatpush1.bf16.msra.mxu0 0
        %1056 = vmatprep.subr.bf16.mxu0 0
        %1057 = vmatpush1.bf16.msra.mxu0 0
        %1058 = vmatprep.subr.bf16.mxu0 0
        %1059 = vmatpush1.bf16.msra.mxu0 0
        %1060 = vmatprep.subr.bf16.mxu0 0
        %1061 = vmatpush1.bf16.msra.mxu0 0
        %1062 = vmatprep.subr.bf16.mxu0 0
        %1063 = vmatpush1.bf16.msra.mxu0 0
        %1064 = vmatprep.subr.bf16.mxu0 0
        %1065 = vmatpush1.bf16.msra.mxu0 0
        %1066 = vmatprep.subr.bf16.mxu0 0
        %1067 = vmatpush1.bf16.msra.mxu0 0
        %1068 = vmatprep.subr.bf16.mxu0 0
        %1069 = vmatpush1.bf16.msra.mxu0 0
        %1070 = vmatprep.subr.bf16.mxu0 0
        %1071 = vmatpush1.bf16.msra.mxu0 0
        %1072 = vmatprep.subr.bf16.mxu0 0
        %1073 = vmatpush1.bf16.msra.mxu0 0
        %1074 = vmatprep.subr.bf16.mxu0 0
        %1075 = vmatpush1.bf16.msra.mxu0 0
        %1076 = vmatprep.subr.bf16.mxu0 0
        %1077 = vmatpush1.bf16.msra.mxu0 0
        %1078 = vmatprep.mubr.bf16.mxu0 0
        %1079 = vmatmul.mubr.bf16.gmra.mrb[0].mxu0 %v786
        %v1080 = vpop.f32.mrb[0].mxu0
        %v1081 = vadd.f32 %v458, %v1080
        %v1082 = vpop.f32.mrb[0].mxu0
        %v1083 = vadd.f32 %v462, %v1082
        %v1084 = vpop.f32.mrb[0].mxu0
        %v1085 = vadd.f32 %v458, %v1084
        %v1086 = vpop.f32.mrb[0].mxu0
        %v1087 = vadd.f32 %v462, %v1086
        %1088 = vdwg.mxu0
        %1089 = vmatprep.subr.bf16.mxu0 %v699
        %1090 = vmatpush1.bf16.msra.mxu0 %v698
        %1091 = vmatprep.subr.bf16.mxu0 %v724
        %1092 = vmatpush1.bf16.msra.mxu0 %v723
        %1093 = vmatprep.subr.bf16.mxu0 0
        %1094 = vmatpush1.bf16.msra.mxu0 0
        %1095 = vmatprep.subr.bf16.mxu0 0
        %1096 = vmatpush1.bf16.msra.mxu0 0
        %1097 = vmatprep.subr.bf16.mxu0 0
        %1098 = vmatpush1.bf16.msra.mxu0 0
        %1099 = vmatprep.subr.bf16.mxu0 0
        %1100 = vmatpush1.bf16.msra.mxu0 0
        %1101 = vmatprep.subr.bf16.mxu0 0
        %1102 = vmatpush1.bf16.msra.mxu0 0
        %1103 = vmatprep.subr.bf16.mxu0 0
        %1104 = vmatpush1.bf16.msra.mxu0 0
        %1105 = vmatprep.subr.bf16.mxu0 0
        %1106 = vmatpush1.bf16.msra.mxu0 0
        %1107 = vmatprep.subr.bf16.mxu0 0
        %1108 = vmatpush1.bf16.msra.mxu0 0
        %1109 = vmatprep.subr.bf16.mxu0 0
        %1110 = vmatpush1.bf16.msra.mxu0 0
        %1111 = vmatprep.subr.bf16.mxu0 0
        %1112 = vmatpush1.bf16.msra.mxu0 0
        %1113 = vmatprep.subr.bf16.mxu0 0
        %1114 = vmatpush1.bf16.msra.mxu0 0
        %1115 = vmatprep.subr.bf16.mxu0 0
        %1116 = vmatpush1.bf16.msra.mxu0 0
        %1117 = vmatprep.subr.bf16.mxu0 0
        %1118 = vmatpush1.bf16.msra.mxu0 0
        %1119 = vmatprep.subr.bf16.mxu0 0
        %1120 = vmatpush1.bf16.msra.mxu0 0
        %1121 = vmatprep.mubr.bf16.mxu0 0
        %1122 = vmatmul.mubr.bf16.gmra.mrb[0].mxu0 %v786
        %v1123 = vpop.f32.mrb[0].mxu0
        %v1124 = vadd.f32 %v466, %v1123
        %v1125 = vpop.f32.mrb[0].mxu0
        %v1126 = vadd.f32 %v470, %v1125
        %v1127 = vpop.f32.mrb[0].mxu0
        %v1128 = vadd.f32 %v466, %v1127
        %v1129 = vpop.f32.mrb[0].mxu0
        %v1130 = vadd.f32 %v470, %v1129
        %1131 = vdwg.mxu0
        %1132 = vmatprep.subr.bf16.mxu0 %v701
        %1133 = vmatpush1.bf16.msra.mxu0 %v700
        %1134 = vmatprep.subr.bf16.mxu0 %v726
        %1135 = vmatpush1.bf16.msra.mxu0 %v725
        %1136 = vmatprep.subr.bf16.mxu0 0
        %1137 = vmatpush1.bf16.msra.mxu0 0
        %1138 = vmatprep.subr.bf16.mxu0 0
        %1139 = vmatpush1.bf16.msra.mxu0 0
        %1140 = vmatprep.subr.bf16.mxu0 0
        %1141 = vmatpush1.bf16.msra.mxu0 0
        %1142 = vmatprep.subr.bf16.mxu0 0
        %1143 = vmatpush1.bf16.msra.mxu0 0
        %1144 = vmatprep.subr.bf16.mxu0 0
        %1145 = vmatpush1.bf16.msra.mxu0 0
        %1146 = vmatprep.subr.bf16.mxu0 0
        %1147 = vmatpush1.bf16.msra.mxu0 0
        %1148 = vmatprep.subr.bf16.mxu0 0
        %1149 = vmatpush1.bf16.msra.mxu0 0
        %1150 = vmatprep.subr.bf16.mxu0 0
        %1151 = vmatpush1.bf16.msra.mxu0 0
        %1152 = vmatprep.subr.bf16.mxu0 0
        %1153 = vmatpush1.bf16.msra.mxu0 0
        %1154 = vmatprep.subr.bf16.mxu0 0
        %1155 = vmatpush1.bf16.msra.mxu0 0
        %1156 = vmatprep.subr.bf16.mxu0 0
        %1157 = vmatpush1.bf16.msra.mxu0 0
        %1158 = vmatprep.subr.bf16.mxu0 0
        %1159 = vmatpush1.bf16.msra.mxu0 0
        %1160 = vmatprep.subr.bf16.mxu0 0
        %1161 = vmatpush1.bf16.msra.mxu0 0
        %1162 = vmatprep.subr.bf16.mxu0 0
        %1163 = vmatpush1.bf16.msra.mxu0 0
        %1164 = vmatprep.mubr.bf16.mxu0 0
        %1165 = vmatmul.mubr.bf16.gmra.mrb[0].mxu0 %v786
        %v1166 = vpop.f32.mrb[0].mxu0
        %v1167 = vadd.f32 %v474, %v1166
        %v1168 = vpop.f32.mrb[0].mxu0
        %v1169 = vadd.f32 %v478, %v1168
        %v1170 = vpop.f32.mrb[0].mxu0
        %v1171 = vadd.f32 %v474, %v1170
        %v1172 = vpop.f32.mrb[0].mxu0
        %v1173 = vadd.f32 %v478, %v1172
        %1174 = vdwg.mxu0
        %1175 = vmatprep.subr.bf16.mxu0 %v703
        %1176 = vmatpush1.bf16.msra.mxu0 %v702
        %1177 = vmatprep.subr.bf16.mxu0 %v728
        %1178 = vmatpush1.bf16.msra.mxu0 %v727
        %1179 = vmatprep.subr.bf16.mxu0 0
        %1180 = vmatpush1.bf16.msra.mxu0 0
        %1181 = vmatprep.subr.bf16.mxu0 0
        %1182 = vmatpush1.bf16.msra.mxu0 0
        %1183 = vmatprep.subr.bf16.mxu0 0
        %1184 = vmatpush1.bf16.msra.mxu0 0
        %1185 = vmatprep.subr.bf16.mxu0 0
        %1186 = vmatpush1.bf16.msra.mxu0 0
        %1187 = vmatprep.subr.bf16.mxu0 0
        %1188 = vmatpush1.bf16.msra.mxu0 0
        %1189 = vmatprep.subr.bf16.mxu0 0
        %1190 = vmatpush1.bf16.msra.mxu0 0
        %1191 = vmatprep.subr.bf16.mxu0 0
        %1192 = vmatpush1.bf16.msra.mxu0 0
        %1193 = vmatprep.subr.bf16.mxu0 0
        %1194 = vmatpush1.bf16.msra.mxu0 0
        %1195 = vmatprep.subr.bf16.mxu0 0
        %1196 = vmatpush1.bf16.msra.mxu0 0
        %1197 = vmatprep.subr.bf16.mxu0 0
        %1198 = vmatpush1.bf16.msra.mxu0 0
        %1199 = vmatprep.subr.bf16.mxu0 0
        %1200 = vmatpush1.bf16.msra.mxu0 0
        %1201 = vmatprep.subr.bf16.mxu0 0
        %1202 = vmatpush1.bf16.msra.mxu0 0
        %1203 = vmatprep.subr.bf16.mxu0 0
        %1204 = vmatpush1.bf16.msra.mxu0 0
        %1205 = vmatprep.subr.bf16.mxu0 0
        %1206 = vmatpush1.bf16.msra.mxu0 0
        %1207 = vmatprep.mubr.bf16.mxu0 0
        %1208 = vmatmul.mubr.bf16.gmra.mrb[0].mxu0 %v786
        %v1209 = vpop.f32.mrb[0].mxu0
        %v1210 = vadd.f32 %v482, %v1209
        %v1211 = vpop.f32.mrb[0].mxu0
        %v1212 = vadd.f32 %v486, %v1211
        %v1213 = vpop.f32.mrb[0].mxu0
        %v1214 = vadd.f32 %v482, %v1213
        %v1215 = vpop.f32.mrb[0].mxu0
        %v1216 = vadd.f32 %v486, %v1215
        %1217 = vdwg.mxu0
        %1218 = vmatprep.subr.bf16.mxu0 %v705
        %1219 = vmatpush1.bf16.msra.mxu0 %v704
        %1220 = vmatprep.subr.bf16.mxu0 %v730
        %1221 = vmatpush1.bf16.msra.mxu0 %v729
        %1222 = vmatprep.subr.bf16.mxu0 0
        %1223 = vmatpush1.bf16.msra.mxu0 0
        %1224 = vmatprep.subr.bf16.mxu0 0
        %1225 = vmatpush1.bf16.msra.mxu0 0
        %1226 = vmatprep.subr.bf16.mxu0 0
        %1227 = vmatpush1.bf16.msra.mxu0 0
        %1228 = vmatprep.subr.bf16.mxu0 0
        %1229 = vmatpush1.bf16.msra.mxu0 0
        %1230 = vmatprep.subr.bf16.mxu0 0
        %1231 = vmatpush1.bf16.msra.mxu0 0
        %1232 = vmatprep.subr.bf16.mxu0 0
        %1233 = vmatpush1.bf16.msra.mxu0 0
        %1234 = vmatprep.subr.bf16.mxu0 0
        %1235 = vmatpush1.bf16.msra.mxu0 0
        %1236 = vmatprep.subr.bf16.mxu0 0
        %1237 = vmatpush1.bf16.msra.mxu0 0
        %1238 = vmatprep.subr.bf16.mxu0 0
        %1239 = vmatpush1.bf16.msra.mxu0 0
        %1240 = vmatprep.subr.bf16.mxu0 0
        %1241 = vmatpush1.bf16.msra.mxu0 0
        %1242 = vmatprep.subr.bf16.mxu0 0
        %1243 = vmatpush1.bf16.msra.mxu0 0
        %1244 = vmatprep.subr.bf16.mxu0 0
        %1245 = vmatpush1.bf16.msra.mxu0 0
        %1246 = vmatprep.subr.bf16.mxu0 0
        %1247 = vmatpush1.bf16.msra.mxu0 0
        %1248 = vmatprep.subr.bf16.mxu0 0
        %1249 = vmatpush1.bf16.msra.mxu0 0
        %1250 = vmatprep.mubr.bf16.mxu0 0
        %1251 = vmatmul.mubr.bf16.gmra.mrb[0].mxu0 %v786
        %v1252 = vpop.f32.mrb[0].mxu0
        %v1253 = vadd.f32 %v490, %v1252
        %v1254 = vpop.f32.mrb[0].mxu0
        %v1255 = vadd.f32 %v494, %v1254
        %v1256 = vpop.f32.mrb[0].mxu0
        %v1257 = vadd.f32 %v490, %v1256
        %v1258 = vpop.f32.mrb[0].mxu0
        %v1259 = vadd.f32 %v494, %v1258
        %1260 = vdwg.mxu0
        %1261 = vmatprep.subr.bf16.mxu0 %v707
        %1262 = vmatpush1.bf16.msra.mxu0 %v706
        %1263 = vmatprep.subr.bf16.mxu0 %v732
        %1264 = vmatpush1.bf16.msra.mxu0 %v731
        %1265 = vmatprep.subr.bf16.mxu0 0
        %1266 = vmatpush1.bf16.msra.mxu0 0
        %1267 = vmatprep.subr.bf16.mxu0 0
        %1268 = vmatpush1.bf16.msra.mxu0 0
        %1269 = vmatprep.subr.bf16.mxu0 0
        %1270 = vmatpush1.bf16.msra.mxu0 0
        %1271 = vmatprep.subr.bf16.mxu0 0
        %1272 = vmatpush1.bf16.msra.mxu0 0
        %1273 = vmatprep.subr.bf16.mxu0 0
        %1274 = vmatpush1.bf16.msra.mxu0 0
        %1275 = vmatprep.subr.bf16.mxu0 0
        %1276 = vmatpush1.bf16.msra.mxu0 0
        %1277 = vmatprep.subr.bf16.mxu0 0
        %1278 = vmatpush1.bf16.msra.mxu0 0
        %1279 = vmatprep.subr.bf16.mxu0 0
        %1280 = vmatpush1.bf16.msra.mxu0 0
        %1281 = vmatprep.subr.bf16.mxu0 0
        %1282 = vmatpush1.bf16.msra.mxu0 0
        %1283 = vmatprep.subr.bf16.mxu0 0
        %1284 = vmatpush1.bf16.msra.mxu0 0
        %1285 = vmatprep.subr.bf16.mxu0 0
        %1286 = vmatpush1.bf16.msra.mxu0 0
        %1287 = vmatprep.subr.bf16.mxu0 0
        %1288 = vmatpush1.bf16.msra.mxu0 0
        %1289 = vmatprep.subr.bf16.mxu0 0
        %1290 = vmatpush1.bf16.msra.mxu0 0
        %1291 = vmatprep.subr.bf16.mxu0 0
        %1292 = vmatpush1.bf16.msra.mxu0 0
        %1293 = vmatprep.mubr.bf16.mxu0 0
        %1294 = vmatmul.mubr.bf16.gmra.mrb[0].mxu0 %v786
        %v1295 = vpop.f32.mrb[0].mxu0
        %v1296 = vadd.f32 %v498, %v1295
        %v1297 = vpop.f32.mrb[0].mxu0
        %v1298 = vadd.f32 %v502, %v1297
        %v1299 = vpop.f32.mrb[0].mxu0
        %v1300 = vadd.f32 %v498, %v1299
        %v1301 = vpop.f32.mrb[0].mxu0
        %v1302 = vadd.f32 %v502, %v1301
        %1303 = vdwg.mxu0
        %1304 = vmatprep.subr.bf16.mxu0 0
        %1305 = vmatpush1.bf16.msra.mxu0 %v708
        %1306 = vmatprep.subr.bf16.mxu0 0
        %1307 = vmatpush1.bf16.msra.mxu0 %v733
        %1308 = vmatprep.subr.bf16.mxu0 0
        %1309 = vmatpush1.bf16.msra.mxu0 0
        %1310 = vmatprep.subr.bf16.mxu0 0
        %1311 = vmatpush1.bf16.msra.mxu0 0
        %1312 = vmatprep.subr.bf16.mxu0 0
        %1313 = vmatpush1.bf16.msra.mxu0 0
        %1314 = vmatprep.subr.bf16.mxu0 0
        %1315 = vmatpush1.bf16.msra.mxu0 0
        %1316 = vmatprep.subr.bf16.mxu0 0
        %1317 = vmatpush1.bf16.msra.mxu0 0
        %1318 = vmatprep.subr.bf16.mxu0 0
        %1319 = vmatpush1.bf16.msra.mxu0 0
        %1320 = vmatprep.subr.bf16.mxu0 0
        %1321 = vmatpush1.bf16.msra.mxu0 0
        %1322 = vmatprep.subr.bf16.mxu0 0
        %1323 = vmatpush1.bf16.msra.mxu0 0
        %1324 = vmatprep.subr.bf16.mxu0 0
        %1325 = vmatpush1.bf16.msra.mxu0 0
        %1326 = vmatprep.subr.bf16.mxu0 0
        %1327 = vmatpush1.bf16.msra.mxu0 0
        %1328 = vmatprep.subr.bf16.mxu0 0
        %1329 = vmatpush1.bf16.msra.mxu0 0
        %1330 = vmatprep.subr.bf16.mxu0 0
        %1331 = vmatpush1.bf16.msra.mxu0 0
        %1332 = vmatprep.subr.bf16.mxu0 0
        %1333 = vmatpush1.bf16.msra.mxu0 0
        %1334 = vmatprep.subr.bf16.mxu0 0
        %1335 = vmatpush1.bf16.msra.mxu0 0
        %1336 = vmatprep.mubr.bf16.mxu0 0
        %1337 = vmatmul.mubr.bf16.gmra.mrb[0].mxu0 %v786
        %v1338 = vpop.f32.mrb[0].mxu0
        %v1339 = vadd.f32 %v506, %v1338
        %v1340 = vpop.f32.mrb[0].mxu0
        %v1341 = vpop.f32.mrb[0].mxu0
        %v1342 = vadd.f32 %v506, %v1341
        %v1343 = vpop.f32.mrb[0].mxu0
        %1344 = vdwg.mxu0
        %v1345 = vmax.f32 %v823, %v866
        %v1346 = vmax.f32 %v825, %v868
        %v1347 = vmax.f32 %v1345, %v909
        %v1348 = vmax.f32 %v1346, %v911
        %v1349 = vmax.f32 %v1347, %v952
        %v1350 = vmax.f32 %v1348, %v954
        %v1351 = vmax.f32 %v1349, %v995
        %v1352 = vmax.f32 %v1350, %v997
        %v1353 = vmax.f32 %v1351, %v1038
        %v1354 = vmax.f32 %v1352, %v1040
        %v1355 = vmax.f32 %v1353, %v1081
        %v1356 = vmax.f32 %v1354, %v1083
        %v1357 = vmax.f32 %v1355, %v1124
        %v1358 = vmax.f32 %v1356, %v1126
        %v1359 = vmax.f32 %v1357, %v1167
        %v1360 = vmax.f32 %v1358, %v1169
        %v1361 = vmax.f32 %v1359, %v1210
        %v1362 = vmax.f32 %v1360, %v1212
        %v1363 = vmax.f32 %v1361, %v1253
        %v1364 = vmax.f32 %v1362, %v1255
        %v1365 = vmax.f32 %v1363, %v1296
        %v1366 = vmax.f32 %v1364, %v1298
        %v1367 = vmax.f32 %v1365, %v1339
        %v1368 = vmax.f32 %v1367, %v1366
        %1369 = vmax.xlane.f32.xlu0 %v1368
        %v1370 = vpop.xlane.xlu0 %1369
        %v1371 = vmax.f32 %v827, %v870
        %v1372 = vmax.f32 %v829, %v872
        %v1373 = vmax.f32 %v1371, %v913
        %v1374 = vmax.f32 %v1372, %v915
        %v1375 = vmax.f32 %v1373, %v956
        %v1376 = vmax.f32 %v1374, %v958
        %v1377 = vmax.f32 %v1375, %v999
        %v1378 = vmax.f32 %v1376, %v1001
        %v1379 = vmax.f32 %v1377, %v1042
        %v1380 = vmax.f32 %v1378, %v1044
        %v1381 = vmax.f32 %v1379, %v1085
        %v1382 = vmax.f32 %v1380, %v1087
        %v1383 = vmax.f32 %v1381, %v1128
        %v1384 = vmax.f32 %v1382, %v1130
        %v1385 = vmax.f32 %v1383, %v1171
        %v1386 = vmax.f32 %v1384, %v1173
        %v1387 = vmax.f32 %v1385, %v1214
        %v1388 = vmax.f32 %v1386, %v1216
        %v1389 = vmax.f32 %v1387, %v1257
        %v1390 = vmax.f32 %v1388, %v1259
        %v1391 = vmax.f32 %v1389, %v1300
        %v1392 = vmax.f32 %v1390, %v1302
        %v1393 = vmax.f32 %v1391, %v1342
        %v1394 = vmax.f32 %v1393, %v1392
        %1395 = vmax.xlane.f32.xlu0 %v1394
        %v1396 = vpop.xlane.xlu0 %1395
        %v1397 = vsub.f32 %v823, %v1370
        %v1398 = vsub.f32 %v825, %v1370
        %v1399 = vsub.f32 %v866, %v1370
        %v1400 = vsub.f32 %v868, %v1370
        %v1401 = vsub.f32 %v909, %v1370
        %v1402 = vsub.f32 %v911, %v1370
        %v1403 = vsub.f32 %v952, %v1370
        %v1404 = vsub.f32 %v954, %v1370
        %v1405 = vsub.f32 %v995, %v1370
        %v1406 = vsub.f32 %v997, %v1370
        %v1407 = vsub.f32 %v1038, %v1370
        %v1408 = vsub.f32 %v1040, %v1370
        %v1409 = vsub.f32 %v1081, %v1370
        %v1410 = vsub.f32 %v1083, %v1370
        %v1411 = vsub.f32 %v1124, %v1370
        %v1412 = vsub.f32 %v1126, %v1370
        %v1413 = vsub.f32 %v1167, %v1370
        %v1414 = vsub.f32 %v1169, %v1370
        %v1415 = vsub.f32 %v1210, %v1370
        %v1416 = vsub.f32 %v1212, %v1370
        %v1417 = vsub.f32 %v1253, %v1370
        %v1418 = vsub.f32 %v1255, %v1370
        %v1419 = vsub.f32 %v1296, %v1370
        %v1420 = vsub.f32 %v1298, %v1370
        %v1421 = vsub.f32 %v1339, %v1370
        %v1422 = vsub.f32 %v827, %v1396
        %v1423 = vsub.f32 %v829, %v1396
        %v1424 = vsub.f32 %v870, %v1396
        %v1425 = vsub.f32 %v872, %v1396
        %v1426 = vsub.f32 %v913, %v1396
        %v1427 = vsub.f32 %v915, %v1396
        %v1428 = vsub.f32 %v956, %v1396
        %v1429 = vsub.f32 %v958, %v1396
        %v1430 = vsub.f32 %v999, %v1396
        %v1431 = vsub.f32 %v1001, %v1396
        %v1432 = vsub.f32 %v1042, %v1396
        %v1433 = vsub.f32 %v1044, %v1396
        %v1434 = vsub.f32 %v1085, %v1396
        %v1435 = vsub.f32 %v1087, %v1396
        %v1436 = vsub.f32 %v1128, %v1396
        %v1437 = vsub.f32 %v1130, %v1396
        %v1438 = vsub.f32 %v1171, %v1396
        %v1439 = vsub.f32 %v1173, %v1396
        %v1440 = vsub.f32 %v1214, %v1396
        %v1441 = vsub.f32 %v1216, %v1396
        %v1442 = vsub.f32 %v1257, %v1396
        %v1443 = vsub.f32 %v1259, %v1396
        %v1444 = vsub.f32 %v1300, %v1396
        %v1445 = vsub.f32 %v1302, %v1396
        %v1446 = vsub.f32 %v1342, %v1396
        %v1447 = vmul.f32 %v1397, 1.442695
        %v1448 = vpow.pop %v1447
        %v1449 = vmul.f32 %v1398, 1.442695
        %v1450 = vpow.pop %v1449
        %v1451 = vmul.f32 %v1399, 1.442695
        %v1452 = vpow.pop %v1451
        %v1453 = vmul.f32 %v1400, 1.442695
        %v1454 = vpow.pop %v1453
        %v1455 = vmul.f32 %v1401, 1.442695
        %v1456 = vpow.pop %v1455
        %v1457 = vmul.f32 %v1402, 1.442695
        %v1458 = vpow.pop %v1457
        %v1459 = vmul.f32 %v1403, 1.442695
        %v1460 = vpow.pop %v1459
        %v1461 = vmul.f32 %v1404, 1.442695
        %v1462 = vpow.pop %v1461
        %v1463 = vmul.f32 %v1405, 1.442695
        %v1464 = vpow.pop %v1463
        %v1465 = vmul.f32 %v1406, 1.442695
        %v1466 = vpow.pop %v1465
        %v1467 = vmul.f32 %v1407, 1.442695
        %v1468 = vpow.pop %v1467
        %v1469 = vmul.f32 %v1408, 1.442695
        %v1470 = vpow.pop %v1469
        %v1471 = vmul.f32 %v1409, 1.442695
        %v1472 = vpow.pop %v1471
        %v1473 = vmul.f32 %v1410, 1.442695
        %v1474 = vpow.pop %v1473
        %v1475 = vmul.f32 %v1411, 1.442695
        %v1476 = vpow.pop %v1475
        %v1477 = vmul.f32 %v1412, 1.442695
        %v1478 = vpow.pop %v1477
        %v1479 = vmul.f32 %v1413, 1.442695
        %v1480 = vpow.pop %v1479
        %v1481 = vmul.f32 %v1414, 1.442695
        %v1482 = vpow.pop %v1481
        %v1483 = vmul.f32 %v1415, 1.442695
        %v1484 = vpow.pop %v1483
        %v1485 = vmul.f32 %v1416, 1.442695
        %v1486 = vpow.pop %v1485
        %v1487 = vmul.f32 %v1417, 1.442695
        %v1488 = vpow.pop %v1487
        %v1489 = vmul.f32 %v1418, 1.442695
        %v1490 = vpow.pop %v1489
        %v1491 = vmul.f32 %v1419, 1.442695
        %v1492 = vpow.pop %v1491
        %v1493 = vmul.f32 %v1420, 1.442695
        %v1494 = vpow.pop %v1493
        %v1495 = vmul.f32 %v1421, 1.442695
        %v1496 = vpow.pop %v1495
        %v1497 = vmul.f32 %v1422, 1.442695
        %v1498 = vpow.pop %v1497
        %v1499 = vmul.f32 %v1423, 1.442695
        %v1500 = vpow.pop %v1499
        %v1501 = vmul.f32 %v1424, 1.442695
        %v1502 = vpow.pop %v1501
        %v1503 = vmul.f32 %v1425, 1.442695
        %v1504 = vpow.pop %v1503
        %v1505 = vmul.f32 %v1426, 1.442695
        %v1506 = vpow.pop %v1505
        %v1507 = vmul.f32 %v1427, 1.442695
        %v1508 = vpow.pop %v1507
        %v1509 = vmul.f32 %v1428, 1.442695
        %v1510 = vpow.pop %v1509
        %v1511 = vmul.f32 %v1429, 1.442695
        %v1512 = vpow.pop %v1511
        %v1513 = vmul.f32 %v1430, 1.442695
        %v1514 = vpow.pop %v1513
        %v1515 = vmul.f32 %v1431, 1.442695
        %v1516 = vpow.pop %v1515
        %v1517 = vmul.f32 %v1432, 1.442695
        %v1518 = vpow.pop %v1517
        %v1519 = vmul.f32 %v1433, 1.442695
        %v1520 = vpow.pop %v1519
        %v1521 = vmul.f32 %v1434, 1.442695
        %v1522 = vpow.pop %v1521
        %v1523 = vmul.f32 %v1435, 1.442695
        %v1524 = vpow.pop %v1523
        %v1525 = vmul.f32 %v1436, 1.442695
        %v1526 = vpow.pop %v1525
        %v1527 = vmul.f32 %v1437, 1.442695
        %v1528 = vpow.pop %v1527
        %v1529 = vmul.f32 %v1438, 1.442695
        %v1530 = vpow.pop %v1529
        %v1531 = vmul.f32 %v1439, 1.442695
        %v1532 = vpow.pop %v1531
        %v1533 = vmul.f32 %v1440, 1.442695
        %v1534 = vpow.pop %v1533
        %v1535 = vmul.f32 %v1441, 1.442695
        %v1536 = vpow.pop %v1535
        %v1537 = vmul.f32 %v1442, 1.442695
        %v1538 = vpow.pop %v1537
        %v1539 = vmul.f32 %v1443, 1.442695
        %v1540 = vpow.pop %v1539
        %v1541 = vmul.f32 %v1444, 1.442695
        %v1542 = vpow.pop %v1541
        %v1543 = vmul.f32 %v1445, 1.442695
        %v1544 = vpow.pop %v1543
        %v1545 = vmul.f32 %v1446, 1.442695
        %v1546 = vpow.pop %v1545
        %v1547 = vadd.f32 %v1448, %v1450
        %v1548 = vadd.f32 %v1547, %v1452
        %v1549 = vadd.f32 %v1548, %v1454
        %v1550 = vadd.f32 %v1549, %v1456
        %v1551 = vadd.f32 %v1550, %v1458
        %v1552 = vadd.f32 %v1551, %v1460
        %v1553 = vadd.f32 %v1552, %v1462
        %v1554 = vadd.f32 %v1553, %v1464
        %v1555 = vadd.f32 %v1554, %v1466
        %v1556 = vadd.f32 %v1555, %v1468
        %v1557 = vadd.f32 %v1556, %v1470
        %v1558 = vadd.f32 %v1557, %v1472
        %v1559 = vadd.f32 %v1558, %v1474
        %v1560 = vadd.f32 %v1559, %v1476
        %v1561 = vadd.f32 %v1560, %v1478
        %v1562 = vadd.f32 %v1561, %v1480
        %v1563 = vadd.f32 %v1562, %v1482
        %v1564 = vadd.f32 %v1563, %v1484
        %v1565 = vadd.f32 %v1564, %v1486
        %v1566 = vadd.f32 %v1565, %v1488
        %v1567 = vadd.f32 %v1566, %v1490
        %v1568 = vadd.f32 %v1567, %v1492
        %v1569 = vadd.f32 %v1568, %v1494
        %v1570 = vadd.f32 %v1569, %v1496
        %1571 = vadd.xlane.f32.xlu0 %v1570
        %v1572 = vpop.xlane.xlu0 %1571
        %v1573 = vadd.f32 %v1498, %v1500
        %v1574 = vadd.f32 %v1573, %v1502
        %v1575 = vadd.f32 %v1574, %v1504
        %v1576 = vadd.f32 %v1575, %v1506
        %v1577 = vadd.f32 %v1576, %v1508
        %v1578 = vadd.f32 %v1577, %v1510
        %v1579 = vadd.f32 %v1578, %v1512
        %v1580 = vadd.f32 %v1579, %v1514
        %v1581 = vadd.f32 %v1580, %v1516
        %v1582 = vadd.f32 %v1581, %v1518
        %v1583 = vadd.f32 %v1582, %v1520
        %v1584 = vadd.f32 %v1583, %v1522
        %v1585 = vadd.f32 %v1584, %v1524
        %v1586 = vadd.f32 %v1585, %v1526
        %v1587 = vadd.f32 %v1586, %v1528
        %v1588 = vadd.f32 %v1587, %v1530
        %v1589 = vadd.f32 %v1588, %v1532
        %v1590 = vadd.f32 %v1589, %v1534
        %v1591 = vadd.f32 %v1590, %v1536
        %v1592 = vadd.f32 %v1591, %v1538
        %v1593 = vadd.f32 %v1592, %v1540
        %v1594 = vadd.f32 %v1593, %v1542
        %v1595 = vadd.f32 %v1594, %v1544
        %v1596 = vadd.f32 %v1595, %v1546
        %1597 = vadd.xlane.f32.xlu0 %v1596
        %v1598 = vpop.xlane.xlu0 %1597
        %v1599 = vlaneseq
        %v1600 = vand.u32 %v1599, 127
        %v1601 = vadd.s32 %v1600, 128
        %v1602 = vadd.s32 %v1600, 256
        %v1603 = vadd.s32 %v1600, 384
        %v1604 = vadd.s32 %v1600, 512
        %v1605 = vadd.s32 %v1600, 640
        %v1606 = vadd.s32 %v1600, 768
        %v1607 = vadd.s32 %v1600, 896
        %v1608 = vadd.s32 %v1600, 1024
        %v1609 = vadd.s32 %v1600, 1152
        %v1610 = vadd.s32 %v1600, 1280
        %v1611 = vadd.s32 %v1600, 1408
        %v1612 = vadd.s32 %v1600, 1536
        %v1613 = vadd.s32 %v1600, 1664
        %v1614 = vadd.s32 %v1600, 1792
        %v1615 = vadd.s32 %v1600, 1920
        %v1616 = vadd.s32 %v1600, 2048
        %v1617 = vadd.s32 %v1600, 2176
        %v1618 = vadd.s32 %v1600, 2304
        %v1619 = vadd.s32 %v1600, 2432
        %v1620 = vadd.s32 %v1600, 2560
        %v1621 = vadd.s32 %v1600, 2688
        %v1622 = vadd.s32 %v1600, 2816
        %v1623 = vadd.s32 %v1600, 2944
        %v1624 = vadd.s32 %v1600, 3072
        %s1625 = smul.u32 %s15, 3200
        %v1626 = vstv %s1625
        %v1627 = vadd.s32 %v1600, %v1626
        %v1628 = vadd.s32 %v1601, %v1626
        %v1629 = vadd.s32 %v1602, %v1626
        %v1630 = vadd.s32 %v1603, %v1626
        %v1631 = vadd.s32 %v1604, %v1626
        %v1632 = vadd.s32 %v1605, %v1626
        %v1633 = vadd.s32 %v1606, %v1626
        %v1634 = vadd.s32 %v1607, %v1626
        %v1635 = vadd.s32 %v1608, %v1626
        %v1636 = vadd.s32 %v1609, %v1626
        %v1637 = vadd.s32 %v1610, %v1626
        %v1638 = vadd.s32 %v1611, %v1626
        %v1639 = vadd.s32 %v1612, %v1626
        %v1640 = vadd.s32 %v1613, %v1626
        %v1641 = vadd.s32 %v1614, %v1626
        %v1642 = vadd.s32 %v1615, %v1626
        %v1643 = vadd.s32 %v1616, %v1626
        %v1644 = vadd.s32 %v1617, %v1626
        %v1645 = vadd.s32 %v1618, %v1626
        %v1646 = vadd.s32 %v1619, %v1626
        %v1647 = vadd.s32 %v1620, %v1626
        %v1648 = vadd.s32 %v1621, %v1626
        %v1649 = vadd.s32 %v1622, %v1626
        %v1650 = vadd.s32 %v1623, %v1626
        %v1651 = vadd.s32 %v1624, %v1626
        %v1652 = vld [vmem:[%s1] sm:$0xff]
        %v1653 = vld [vmem:[%s1 + $0x8] sm:$0xff]
        %1654 = vset.pattern.permute.xlu0 0
        %1655 = vperm.xlu0 %1654, %v1652
        %v1656 = vpop.permute.xlu0 %1655
        %1657 = vset.pattern.permute.xlu0 0
        %1658 = vperm.xlu0 %1657, %v1653
        %v1659 = vpop.permute.xlu0 %1658
        %vm1660 = vcmp.eq.s32.totalorder %v1627, %v1656
        %vm1661 = vcmp.eq.s32.totalorder %v1628, %v1656
        %vm1662 = vcmp.eq.s32.totalorder %v1629, %v1656
        %vm1663 = vcmp.eq.s32.totalorder %v1630, %v1656
        %vm1664 = vcmp.eq.s32.totalorder %v1631, %v1656
        %vm1665 = vcmp.eq.s32.totalorder %v1632, %v1656
        %vm1666 = vcmp.eq.s32.totalorder %v1633, %v1656
        %vm1667 = vcmp.eq.s32.totalorder %v1634, %v1656
        %vm1668 = vcmp.eq.s32.totalorder %v1635, %v1656
        %vm1669 = vcmp.eq.s32.totalorder %v1636, %v1656
        %vm1670 = vcmp.eq.s32.totalorder %v1637, %v1656
        %vm1671 = vcmp.eq.s32.totalorder %v1638, %v1656
        %vm1672 = vcmp.eq.s32.totalorder %v1639, %v1656
        %vm1673 = vcmp.eq.s32.totalorder %v1640, %v1656
        %vm1674 = vcmp.eq.s32.totalorder %v1641, %v1656
        %vm1675 = vcmp.eq.s32.totalorder %v1642, %v1656
        %vm1676 = vcmp.eq.s32.totalorder %v1643, %v1656
        %vm1677 = vcmp.eq.s32.totalorder %v1644, %v1656
        %vm1678 = vcmp.eq.s32.totalorder %v1645, %v1656
        %vm1679 = vcmp.eq.s32.totalorder %v1646, %v1656
        %vm1680 = vcmp.eq.s32.totalorder %v1647, %v1656
        %vm1681 = vcmp.eq.s32.totalorder %v1648, %v1656
        %vm1682 = vcmp.eq.s32.totalorder %v1649, %v1656
        %vm1683 = vcmp.eq.s32.totalorder %v1650, %v1656
        %vm1684 = vcmp.eq.s32.totalorder %v1651, %v1656
        %vm1685 = vcmp.eq.s32.totalorder %v1627, %v1659
        %vm1686 = vcmp.eq.s32.totalorder %v1628, %v1659
        %vm1687 = vcmp.eq.s32.totalorder %v1629, %v1659
        %vm1688 = vcmp.eq.s32.totalorder %v1630, %v1659
        %vm1689 = vcmp.eq.s32.totalorder %v1631, %v1659
        %vm1690 = vcmp.eq.s32.totalorder %v1632, %v1659
        %vm1691 = vcmp.eq.s32.totalorder %v1633, %v1659
        %vm1692 = vcmp.eq.s32.totalorder %v1634, %v1659
        %vm1693 = vcmp.eq.s32.totalorder %v1635, %v1659
        %vm1694 = vcmp.eq.s32.totalorder %v1636, %v1659
        %vm1695 = vcmp.eq.s32.totalorder %v1637, %v1659
        %vm1696 = vcmp.eq.s32.totalorder %v1638, %v1659
        %vm1697 = vcmp.eq.s32.totalorder %v1639, %v1659
        %vm1698 = vcmp.eq.s32.totalorder %v1640, %v1659
        %vm1699 = vcmp.eq.s32.totalorder %v1641, %v1659
        %vm1700 = vcmp.eq.s32.totalorder %v1642, %v1659
        %vm1701 = vcmp.eq.s32.totalorder %v1643, %v1659
        %vm1702 = vcmp.eq.s32.totalorder %v1644, %v1659
        %vm1703 = vcmp.eq.s32.totalorder %v1645, %v1659
        %vm1704 = vcmp.eq.s32.totalorder %v1646, %v1659
        %vm1705 = vcmp.eq.s32.totalorder %v1647, %v1659
        %vm1706 = vcmp.eq.s32.totalorder %v1648, %v1659
        %vm1707 = vcmp.eq.s32.totalorder %v1649, %v1659
        %vm1708 = vcmp.eq.s32.totalorder %v1650, %v1659
        %vm1709 = vcmp.eq.s32.totalorder %v1651, %v1659
        %v1710 = vsel %vm1660, %v823, 0.0
        %v1711 = vsel %vm1661, %v825, 0.0
        %v1712 = vsel %vm1662, %v866, 0.0
        %v1713 = vsel %vm1663, %v868, 0.0
        %v1714 = vsel %vm1664, %v909, 0.0
        %v1715 = vsel %vm1665, %v911, 0.0
        %v1716 = vsel %vm1666, %v952, 0.0
        %v1717 = vsel %vm1667, %v954, 0.0
        %v1718 = vsel %vm1668, %v995, 0.0
        %v1719 = vsel %vm1669, %v997, 0.0
        %v1720 = vsel %vm1670, %v1038, 0.0
        %v1721 = vsel %vm1671, %v1040, 0.0
        %v1722 = vsel %vm1672, %v1081, 0.0
        %v1723 = vsel %vm1673, %v1083, 0.0
        %v1724 = vsel %vm1674, %v1124, 0.0
        %v1725 = vsel %vm1675, %v1126, 0.0
        %v1726 = vsel %vm1676, %v1167, 0.0
        %v1727 = vsel %vm1677, %v1169, 0.0
        %v1728 = vsel %vm1678, %v1210, 0.0
        %v1729 = vsel %vm1679, %v1212, 0.0
        %v1730 = vsel %vm1680, %v1253, 0.0
        %v1731 = vsel %vm1681, %v1255, 0.0
        %v1732 = vsel %vm1682, %v1296, 0.0
        %v1733 = vsel %vm1683, %v1298, 0.0
        %v1734 = vsel %vm1684, %v1339, 0.0
        %v1735 = vsel %vm1685, %v827, 0.0
        %v1736 = vsel %vm1686, %v829, 0.0
        %v1737 = vsel %vm1687, %v870, 0.0
        %v1738 = vsel %vm1688, %v872, 0.0
        %v1739 = vsel %vm1689, %v913, 0.0
        %v1740 = vsel %vm1690, %v915, 0.0
        %v1741 = vsel %vm1691, %v956, 0.0
        %v1742 = vsel %vm1692, %v958, 0.0
        %v1743 = vsel %vm1693, %v999, 0.0
        %v1744 = vsel %vm1694, %v1001, 0.0
        %v1745 = vsel %vm1695, %v1042, 0.0
        %v1746 = vsel %vm1696, %v1044, 0.0
        %v1747 = vsel %vm1697, %v1085, 0.0
        %v1748 = vsel %vm1698, %v1087, 0.0
        %v1749 = vsel %vm1699, %v1128, 0.0
        %v1750 = vsel %vm1700, %v1130, 0.0
        %v1751 = vsel %vm1701, %v1171, 0.0
        %v1752 = vsel %vm1702, %v1173, 0.0
        %v1753 = vsel %vm1703, %v1214, 0.0
        %v1754 = vsel %vm1704, %v1216, 0.0
        %v1755 = vsel %vm1705, %v1257, 0.0
        %v1756 = vsel %vm1706, %v1259, 0.0
        %v1757 = vsel %vm1707, %v1300, 0.0
        %v1758 = vsel %vm1708, %v1302, 0.0
        %v1759 = vsel %vm1709, %v1342, 0.0
        %v1760 = vadd.f32 %v1710, %v1711
        %v1761 = vadd.f32 %v1760, %v1712
        %v1762 = vadd.f32 %v1761, %v1713
        %v1763 = vadd.f32 %v1762, %v1714
        %v1764 = vadd.f32 %v1763, %v1715
        %v1765 = vadd.f32 %v1764, %v1716
        %v1766 = vadd.f32 %v1765, %v1717
        %v1767 = vadd.f32 %v1766, %v1718
        %v1768 = vadd.f32 %v1767, %v1719
        %v1769 = vadd.f32 %v1768, %v1720
        %v1770 = vadd.f32 %v1769, %v1721
        %v1771 = vadd.f32 %v1770, %v1722
        %v1772 = vadd.f32 %v1771, %v1723
        %v1773 = vadd.f32 %v1772, %v1724
        %v1774 = vadd.f32 %v1773, %v1725
        %v1775 = vadd.f32 %v1774, %v1726
        %v1776 = vadd.f32 %v1775, %v1727
        %v1777 = vadd.f32 %v1776, %v1728
        %v1778 = vadd.f32 %v1777, %v1729
        %v1779 = vadd.f32 %v1778, %v1730
        %v1780 = vadd.f32 %v1779, %v1731
        %v1781 = vadd.f32 %v1780, %v1732
        %v1782 = vadd.f32 %v1781, %v1733
        %v1783 = vadd.f32 %v1782, %v1734
        %1784 = vadd.xlane.f32.xlu0 %v1783
        %v1785 = vpop.xlane.xlu0 %1784
        %v1786 = vadd.f32 %v1735, %v1736
        %v1787 = vadd.f32 %v1786, %v1737
        %v1788 = vadd.f32 %v1787, %v1738
        %v1789 = vadd.f32 %v1788, %v1739
        %v1790 = vadd.f32 %v1789, %v1740
        %v1791 = vadd.f32 %v1790, %v1741
        %v1792 = vadd.f32 %v1791, %v1742
        %v1793 = vadd.f32 %v1792, %v1743
        %v1794 = vadd.f32 %v1793, %v1744
        %v1795 = vadd.f32 %v1794, %v1745
        %v1796 = vadd.f32 %v1795, %v1746
        %v1797 = vadd.f32 %v1796, %v1747
        %v1798 = vadd.f32 %v1797, %v1748
        %v1799 = vadd.f32 %v1798, %v1749
        %v1800 = vadd.f32 %v1799, %v1750
        %v1801 = vadd.f32 %v1800, %v1751
        %v1802 = vadd.f32 %v1801, %v1752
        %v1803 = vadd.f32 %v1802, %v1753
        %v1804 = vadd.f32 %v1803, %v1754
        %v1805 = vadd.f32 %v1804, %v1755
        %v1806 = vadd.f32 %v1805, %v1756
        %v1807 = vadd.f32 %v1806, %v1757
        %v1808 = vadd.f32 %v1807, %v1758
        %v1809 = vadd.f32 %v1808, %v1759
        %1810 = vadd.xlane.f32.xlu0 %v1809
        %v1811 = vpop.xlane.xlu0 %1810
        %vm1812 = vcmp.eq.s32.totalorder %v1600, 0
        %v1813 = vsel %vm1812, %v1370, 0.0
        %v1814 = vsel %vm1812, %v1396, 0.0
        %vm1815 = vcmp.eq.s32.totalorder %v1600, 1
        %v1816 = vsel %vm1815, %v1572, 0.0
        %v1817 = vsel %vm1815, %v1598, 0.0
        %v1818 = vadd.f32 %v1813, %v1816
        %v1819 = vadd.f32 %v1814, %v1817
        %vm1820 = vcmp.eq.s32.totalorder %v1600, 2
        %v1821 = vsel %vm1820, %v1785, 0.0
        %v1822 = vsel %vm1820, %v1811, 0.0
        %v1823 = vadd.f32 %v1818, %v1821
        %v1824 = vadd.f32 %v1819, %v1822
        %1825 = vst [vmem:[%s336] sm:$0xff] %v1823
        %1826 = vst [vmem:[%s336 + $0x8] sm:$0xff] %v1824
        %s1827 = sand.u32 %s117, 1
        %s1828 = sand.u32 %s117, 1
        %s1829 = smul.addr %s1828, 16
        %s1830 = scalar_lea.vmem [#allocation3], %s1829
        // Predicated region
        $region63: #{music_x_transformer_forward.3} parent=57 // pred_check
          %p1831 = pneg %p127
        $region64: #{music_x_transformer_forward.3} parent=57 // pred_check_branch
          %1833 = sbr.rel (%p1831) target = $region66
        $region65: #{music_x_transformer_forward.3} parent=57 // pred_region
          %s1834 = smul.addr %s15, 8
          %s1835 = scalar_lea.vmem %s4, %s1834
          // Predicated region
          $region67: #{music_x_transformer_forward.3} parent=65 // pred_check
            _
          $region68: #{music_x_transformer_forward.3} parent=65 // pred_check_branch
            %1837 = sbr.rel (0) target = $region70
          $region69: #{music_x_transformer_forward.3} parent=65 // pred_region
            // Predicated region
            $region71: #{music_x_transformer_forward.3} parent=69 // pred_check
              _
            $region72: #{music_x_transformer_forward.3} parent=69 // pred_check_branch
              %1839 = sbr.rel (0) target = $region74
            $region73: #{music_x_transformer_forward.3} parent=69 // pred_region
              // Predicated region
              $region86: #{music_x_transformer_forward.3} parent=73 // pred_check
                _
              $region87: #{music_x_transformer_forward.3} parent=73 // pred_check_branch
                %1856 = sbr.rel (0) target = $region89
              $region88: #{music_x_transformer_forward.3} parent=73 // pred_region
                loop: start=0, step=1, limit=1
                $region90: #{music_x_transformer_forward.3} parent=88 // loop_pre_header
                  _
                $region91: #{music_x_transformer_forward.3} parent=88 // loop_header
                  %s1858 = sphi 0, %s1862
                  %p1859 = scmp.ge.s32.totalorder %s1858, 1
                  %s1863 = sphi %s1830, %s1830
                  %s1864 = sphi %s1835, %s1835
                $region92: #{music_x_transformer_forward.3} parent=88 // loop_header_branch
                  %1861 = sbr.rel (%p1859) target = $region96
                $region93: #{music_x_transformer_forward.3} parent=88 // loop_body
                  %v1865 = vld [vmem:[%s1863] sm:$0xff]
                  %1866 = vst [vmem:[%s1864] sm:$0xff] %v1865
                  %v1867 = vld [vmem:[%s1863 + $0x8] sm:$0xff]
                  %1868 = vst [vmem:[%s1864 + $0x50] sm:$0xff] %v1867
                $region94: #{music_x_transformer_forward.3} parent=88 // loop_footer
                  %s1862 = sadd.s32 1, %s1858
                $region95: #{music_x_transformer_forward.3} parent=88 // loop_footer_branch
                  %1857 = sbr.rel target = $region91
                $region96: #{music_x_transformer_forward.3} parent=88 // loop_exit
                  _
              $region89: #{music_x_transformer_forward.3} parent=73 // pred_fallthru
                _
              // Predicated region
              $region97: #{music_x_transformer_forward.3} parent=73 // pred_check
                _
              $region98: #{music_x_transformer_forward.3} parent=73 // pred_check_branch
                %1870 = sbr.rel target = $region100
              $region99: #{music_x_transformer_forward.3} parent=73 // pred_region
                _
              $region100: #{music_x_transformer_forward.3} parent=73 // pred_fallthru
                _
            $region74: #{music_x_transformer_forward.3} parent=69 // pred_fallthru
              _
            // Predicated region
            $region75: #{music_x_transformer_forward.3} parent=69 // pred_check
              _
            $region76: #{music_x_transformer_forward.3} parent=69 // pred_check_branch
              %1841 = sbr.rel target = $region78
            $region77: #{music_x_transformer_forward.3} parent=69 // pred_region
              loop: start=0, step=1, limit=1
              $region79: #{music_x_transformer_forward.3} parent=77 // loop_pre_header
                _
              $region80: #{music_x_transformer_forward.3} parent=77 // loop_header
                %s1844 = sphi 0, %s1848
                %p1845 = scmp.ge.s32.totalorder %s1844, 1
                %s1849 = sphi %s1830, %s1830
                %s1850 = sphi %s1835, %s1835
              $region81: #{music_x_transformer_forward.3} parent=77 // loop_header_branch
                %1847 = sbr.rel (%p1845) target = $region85
              $region82: #{music_x_transformer_forward.3} parent=77 // loop_body
                %v1851 = vld [vmem:[%s1849] sm:$0xff]
                %1852 = vst [vmem:[%s1850] sm:$0xff] %v1851
                %v1853 = vld [vmem:[%s1849 + $0x8] sm:$0xff]
                %1854 = vst [vmem:[%s1850 + $0x50] sm:$0xff] %v1853
              $region83: #{music_x_transformer_forward.3} parent=77 // loop_footer
                %s1848 = sadd.s32 1, %s1844
              $region84: #{music_x_transformer_forward.3} parent=77 // loop_footer_branch
                %1843 = sbr.rel target = $region80
              $region85: #{music_x_transformer_forward.3} parent=77 // loop_exit
                _
            $region78: #{music_x_transformer_forward.3} parent=69 // pred_fallthru
              _
          $region70: #{music_x_transformer_forward.3} parent=65 // pred_fallthru
            _
          %1871 = vnop
        $region66: #{music_x_transformer_forward.3} parent=57 // pred_fallthru
          _
      $region58: #{music_x_transformer_forward.3} parent=5 // pred_fallthru
        _
      %p1872 = scmp.le.s32.totalorder 2, %s10
      // Predicated region
      $region101: #{music_x_transformer_forward.3} parent=5 // pred_check
        %p1873 = pneg %p1872
      $region102: #{music_x_transformer_forward.3} parent=5 // pred_check_branch
        %1875 = sbr.rel (%p1873) target = $region104
      $region103: #{music_x_transformer_forward.3} parent=5 // pred_region
        %s1876 = ssub.s32 %s10, 2
        // Predicated region
        $region105: #{music_x_transformer_forward.3} parent=103 // pred_check
          %p1877 = pneg %p133
        $region106: #{music_x_transformer_forward.3} parent=103 // pred_check_branch
          %1879 = sbr.rel (%p1877) target = $region108
        $region107: #{music_x_transformer_forward.3} parent=103 // pred_region
          %s1880 = sand.u32 %s118, 1
          %s1881 = sand.u32 %s118, 1
          %s1882 = smul.addr %s1881, 16
          %s1883 = scalar_lea.vmem [#allocation3], %s1882
        $region108: #{music_x_transformer_forward.3} parent=103 // pred_fallthru
          _
      $region104: #{music_x_transformer_forward.3} parent=5 // pred_fallthru
        _
    $region6: #{music_x_transformer_forward.3} parent=1 // loop_footer
      %s14 = sadd.s32 1, %s10
    $region7: #{music_x_transformer_forward.3} parent=1 // loop_footer_branch
      %9 = sbr.rel target = $region3
    $region8: #{music_x_transformer_forward.3} parent=1 // loop_exit
      _

// kernel: music_x_transformer_forward.2
$region0: #{music_x_transformer_forward.2}
  #allocation0 [shape = 'u32[]', space=smem, size = 0x4, offset = 0x4, fixed_abs, tag = 'smem constant byte address 0x4 - core index']
  #allocation1 [shape = 'u32[144,128]{1,0:T(1,128)}', space=vmem, size = 0x12000, scoped, tag = 'internal scratch']
  %s0 = inlined_call_operand.vmem [shape: f32[16,32], index: 0, kind: input, shape index: {}]
  %s1 = inlined_call_operand.vmem [shape: f32[5,32], index: 1, kind: input, shape index: {}]
  %s2 = inlined_call_operand.vmem [shape: f32[16,64], index: 2, kind: input, shape index: {}]
  %s3 = inlined_call_operand.vmem [shape: f32[4,16,16], index: 3, kind: input, shape index: {}]
  %s4 = inlined_call_operand.vmem [shape: bf16[2,32,256], index: 4, kind: input, shape index: {}]
  %s5 = inlined_call_operand.vmem [shape: bf16[2,64,32], index: 5, kind: input, shape index: {}]
  %s6 = inlined_call_operand.vmem [shape: bf16[2,32,128], index: 6, kind: input, shape index: {}]
  %s7 = inlined_call_operand.vmem [shape: bf16[2,64,32], index: 7, kind: input, shape index: {}]
  %s8 = inlined_call_operand.vmem [shape: bf16[32,128], index: 8, kind: input, shape index: {}]
  %s9 = inlined_call_operand.vmem [shape: f32[16,128], index: 9, kind: output, shape index: {0}]
  %s10 = inlined_call_operand.vmem [shape: f32[16,32], index: 10, kind: output, shape index: {1}]
  %11 = xla_tuple %s9, %s10
  %s12 = sld [smem:[#allocation0]]
  $region54: #{music_x_transformer_forward.2} parent=0
    _
  %s14 = ssub.s32 1, %s12
  %s15 = scalar_select 0, %s14, %s12
  // Predicated region
  $region2: #{music_x_transformer_forward.2} parent=0 // pred_check
    _
  $region3: #{music_x_transformer_forward.2} parent=0 // pred_check_branch
    %17 = sbr.rel (0) target = $region5
  $region4: #{music_x_transformer_forward.2} parent=0 // pred_region
    _
  $region5: #{music_x_transformer_forward.2} parent=0 // pred_fallthru
    _
  // Predicated region
  $region6: #{music_x_transformer_forward.2} parent=0 // pred_check
    _
  $region7: #{music_x_transformer_forward.2} parent=0 // pred_check_branch
    %19 = sbr.rel (0) target = $region9
  $region8: #{music_x_transformer_forward.2} parent=0 // pred_region
    _
  $region9: #{music_x_transformer_forward.2} parent=0 // pred_fallthru
    _
  // Predicated region
  $region10: #{music_x_transformer_forward.2} parent=0 // pred_check
    _
  $region11: #{music_x_transformer_forward.2} parent=0 // pred_check_branch
    %21 = sbr.rel (0) target = $region13
  $region12: #{music_x_transformer_forward.2} parent=0 // pred_region
    _
  $region13: #{music_x_transformer_forward.2} parent=0 // pred_fallthru
    _
  // Predicated region
  $region14: #{music_x_transformer_forward.2} parent=0 // pred_check
    _
  $region15: #{music_x_transformer_forward.2} parent=0 // pred_check_branch
    %23 = sbr.rel (0) target = $region17
  $region16: #{music_x_transformer_forward.2} parent=0 // pred_region
    _
  $region17: #{music_x_transformer_forward.2} parent=0 // pred_fallthru
    _
  // Predicated region
  $region18: #{music_x_transformer_forward.2} parent=0 // pred_check
    _
  $region19: #{music_x_transformer_forward.2} parent=0 // pred_check_branch
    %25 = sbr.rel (0) target = $region21
  $region20: #{music_x_transformer_forward.2} parent=0 // pred_region
    _
  $region21: #{music_x_transformer_forward.2} parent=0 // pred_fallthru
    _
  // Predicated region
  $region22: #{music_x_transformer_forward.2} parent=0 // pred_check
    _
  $region23: #{music_x_transformer_forward.2} parent=0 // pred_check_branch
    %27 = sbr.rel (0) target = $region25
  $region24: #{music_x_transformer_forward.2} parent=0 // pred_region
    _
  $region25: #{music_x_transformer_forward.2} parent=0 // pred_fallthru
    _
  // Predicated region
  $region26: #{music_x_transformer_forward.2} parent=0 // pred_check
    _
  $region27: #{music_x_transformer_forward.2} parent=0 // pred_check_branch
    %29 = sbr.rel (0) target = $region29
  $region28: #{music_x_transformer_forward.2} parent=0 // pred_region
    _
  $region29: #{music_x_transformer_forward.2} parent=0 // pred_fallthru
    _
  // Predicated region
  $region30: #{music_x_transformer_forward.2} parent=0 // pred_check
    _
  $region31: #{music_x_transformer_forward.2} parent=0 // pred_check_branch
    %31 = sbr.rel (0) target = $region33
  $region32: #{music_x_transformer_forward.2} parent=0 // pred_region
    _
  $region33: #{music_x_transformer_forward.2} parent=0 // pred_fallthru
    _
  // Predicated region
  $region34: #{music_x_transformer_forward.2} parent=0 // pred_check
    _
  $region35: #{music_x_transformer_forward.2} parent=0 // pred_check_branch
    %33 = sbr.rel (0) target = $region37
  $region36: #{music_x_transformer_forward.2} parent=0 // pred_region
    _
  $region37: #{music_x_transformer_forward.2} parent=0 // pred_fallthru
    _
  %v35 = vld [vmem:[%s0] sm:$0xff]
  %v36 = vld [vmem:[%s0 + $0x8] sm:$0xff]
  %v37 = vld [vmem:[%s1] sm:$0x1f]
  %v38 = vld [vmem:[%s2] sm:$0xff]
  %v39 = vld [vmem:[%s2 + $0x8] sm:$0xff]
  %v40 = vmul.f32 %v35, %v35
  %v41 = vmul.f32 %v36, %v36
  %vm42 = vcmask 261120
  %v43 = vsel %vm42, %v40, 0.0
  %44 = vadd.xlane.f32.xlu0 %v43
  %v45 = vpop.xlane.xlu0 %44
  %v46 = vsel %vm42, %v41, 0.0
  %47 = vadd.xlane.f32.xlu0 %v46
  %v48 = vpop.xlane.xlu0 %47
  %v49 = vrcp.pop 32.0
  %v50 = vmul.f32 %v45, %v49
  %v51 = vmul.f32 %v48, %v49
  %v52 = vadd.f32 %v50, 1e-05
  %v53 = vadd.f32 %v51, 1e-05
  %v54 = vrsqrt.pop %v52
  %v55 = vrsqrt.pop %v53
  %v56 = vmul.f32 %v35, %v54
  %v57 = vmul.f32 %v36, %v55
  %v58 = vlaneseq
  %v59 = vshrl.u32 %v58, 7
  %v60 = vsub.s32 0, %v59
  %v61 = vrot.slane %v37, %v60
  %v62 = vmul.f32 %v56, %v61
  %v63 = vmul.f32 %v57, %v61
  %v64 = vpack.c.bf16 %v63, %v62
  %v65 = vld [vmem:[%s4] sm:$0xff]
  %v66 = vld [vmem:[%s4 + $0x8] sm:$0xff]
  %v67 = vld [vmem:[%s4 + $0x10] sm:$0xff]
  %v68 = vld [vmem:[%s4 + $0x18] sm:$0xff]
  %v73 = vunpack.c.l.b16 %v65
  %v74 = vunpack.c.h.b16 %v65
  %v75 = vunpack.c.l.b16 %v66
  %v76 = vunpack.c.h.b16 %v66
  %v77 = vunpack.c.l.b16 %v67
  %v78 = vunpack.c.h.b16 %v67
  %v79 = vunpack.c.l.b16 %v68
  %v80 = vunpack.c.h.b16 %v68
  %v81 = vpack.c.b16 %v75, %v73
  %v82 = vpack.c.b16 %v76, %v74
  %v83 = vpack.c.b16 %v79, %v77
  %v84 = vpack.c.b16 %v80, %v78
  %v90 = vsel %vm42, %v64, 0
  %92 = vmatprep.subr.bf16.mxu0 %v82
  %93 = vmatpush1.bf16.msra.mxu0 %v81
  %94 = vmatprep.subr.bf16.mxu0 %v84
  %95 = vmatpush1.bf16.msra.mxu0 %v83
  %96 = vmatprep.subr.bf16.mxu0 0
  %97 = vmatpush1.bf16.msra.mxu0 0
  %98 = vmatprep.subr.bf16.mxu0 0
  %99 = vmatpush1.bf16.msra.mxu0 0
  %100 = vmatprep.subr.bf16.mxu0 0
  %101 = vmatpush1.bf16.msra.mxu0 0
  %102 = vmatprep.subr.bf16.mxu0 0
  %103 = vmatpush1.bf16.msra.mxu0 0
  %104 = vmatprep.subr.bf16.mxu0 0
  %105 = vmatpush1.bf16.msra.mxu0 0
  %106 = vmatprep.subr.bf16.mxu0 0
  %107 = vmatpush1.bf16.msra.mxu0 0
  %108 = vmatprep.subr.bf16.mxu0 0
  %109 = vmatpush1.bf16.msra.mxu0 0
  %110 = vmatprep.subr.bf16.mxu0 0
  %111 = vmatpush1.bf16.msra.mxu0 0
  %112 = vmatprep.subr.bf16.mxu0 0
  %113 = vmatpush1.bf16.msra.mxu0 0
  %114 = vmatprep.subr.bf16.mxu0 0
  %115 = vmatpush1.bf16.msra.mxu0 0
  %116 = vmatprep.subr.bf16.mxu0 0
  %117 = vmatpush1.bf16.msra.mxu0 0
  %118 = vmatprep.subr.bf16.mxu0 0
  %119 = vmatpush1.bf16.msra.mxu0 0
  %120 = vmatprep.subr.bf16.mxu0 0
  %121 = vmatpush1.bf16.msra.mxu0 0
  %122 = vmatprep.subr.bf16.mxu0 0
  %123 = vmatpush1.bf16.msra.mxu0 0
  %124 = vmatprep.mubr.bf16.mxu0 0
  %125 = vmatmul.mubr.bf16.gmra.mrb[0].mxu0 %v90
  %v126 = vpop.f32.mrb[0].mxu0
  %v127 = vadd.f32 0.0, %v126
  %v128 = vpop.f32.mrb[0].mxu0
  %v129 = vadd.f32 0.0, %v128
  %v130 = vpop.f32.mrb[0].mxu0
  %v131 = vadd.f32 0.0, %v130
  %v132 = vpop.f32.mrb[0].mxu0
  %v133 = vadd.f32 0.0, %v132
  %134 = vdwg.mxu0
  %137 = vrot.lane.b32.xlu0 %v38, 96
  %v138 = vpop.permute.xlu0 %137
  %139 = vrot.lane.b32.xlu0 %v39, 96
  %v140 = vpop.permute.xlu0 %139
  %v143 = vmul.f32 %v127, %v138
  %v144 = vmul.f32 %v131, %v140
  %145 = vrot.lane.b32.xlu0 %v38, 32
  %v146 = vpop.permute.xlu0 %145
  %147 = vrot.lane.b32.xlu0 %v39, 32
  %v148 = vpop.permute.xlu0 %147
  %v151 = vmul.f32 %v127, %v146
  %v152 = vmul.f32 %v131, %v148
  %155 = vrot.lane.b32.xlu0 %v151, 96
  %v156 = vpop.permute.xlu0 %155
  %157 = vrot.lane.b32.xlu0 %v152, 96
  %v158 = vpop.permute.xlu0 %157
  %v161 = vadd.f32 %v143, %v156
  %v162 = vadd.f32 %v144, %v158
  %v163 = vpack.c.bf16 %v162, %v161
  %166 = vrot.lane.b32.xlu0 %v143, 96
  %v167 = vpop.permute.xlu0 %166
  %168 = vrot.lane.b32.xlu0 %v144, 96
  %v169 = vpop.permute.xlu0 %168
  %v172 = vadd.f32 %v151, %v167
  %v173 = vadd.f32 %v152, %v169
  %v174 = vmul.f32 %v172, 0.35355338
  %v175 = vmul.f32 %v173, 0.35355338
  %v176 = vpack.c.bf16 %v175, %v174
  %v177 = vpack.c.bf16 %v133, %v129
  %v178 = vld [vmem:[%s5] sm:$0xf]
  %v179 = vld [vmem:[%s5 + $0x4] sm:$0xf]
  %v180 = vld [vmem:[%s5 + $0x8] sm:$0xf]
  %v181 = vld [vmem:[%s5 + $0xc] sm:$0xf]
  %v182 = vld [vmem:[%s5 + $0x10] sm:$0xf]
  %v183 = vld [vmem:[%s5 + $0x14] sm:$0xf]
  %v184 = vld [vmem:[%s5 + $0x18] sm:$0xf]
  %v185 = vld [vmem:[%s5 + $0x1c] sm:$0xf]
  %187 = vrot.lane.b32.xlu0 %v176, 64
  %v188 = vpop.permute.xlu0 %187
  %vm189 = vcmask 64512
  %v191 = vsel %vm189, %v163, 0
  %v194 = vsel %vm189, %v188, 0
  %196 = vmatprep.subr.bf16.mxu0 0
  %197 = vmatpush1.bf16.xpose.msra.mxu0 %v194
  %198 = vmatprep.subr.bf16.mxu0 0
  %199 = vmatpush1.bf16.xpose.msra.mxu0 0
  %200 = vmatprep.subr.bf16.mxu0 0
  %201 = vmatpush1.bf16.xpose.msra.mxu0 0
  %202 = vmatprep.subr.bf16.mxu0 0
  %203 = vmatpush1.bf16.xpose.msra.mxu0 0
  %204 = vmatprep.subr.bf16.mxu0 0
  %205 = vmatpush1.bf16.xpose.msra.mxu0 0
  %206 = vmatprep.subr.bf16.mxu0 0
  %207 = vmatpush1.bf16.xpose.msra.mxu0 0
  %208 = vmatprep.subr.bf16.mxu0 0
  %209 = vmatpush1.bf16.xpose.msra.mxu0 0
  %210 = vmatprep.subr.bf16.mxu0 0
  %211 = vmatpush1.bf16.xpose.msra.mxu0 0
  %212 = vmatprep.subr.bf16.mxu0 0
  %213 = vmatpush1.bf16.xpose.msra.mxu0 0
  %214 = vmatprep.subr.bf16.mxu0 0
  %215 = vmatpush1.bf16.xpose.msra.mxu0 0
  %216 = vmatprep.subr.bf16.mxu0 0
  %217 = vmatpush1.bf16.xpose.msra.mxu0 0
  %218 = vmatprep.subr.bf16.mxu0 0
  %219 = vmatpush1.bf16.xpose.msra.mxu0 0
  %220 = vmatprep.subr.bf16.mxu0 0
  %221 = vmatpush1.bf16.xpose.msra.mxu0 0
  %222 = vmatprep.subr.bf16.mxu0 0
  %223 = vmatpush1.bf16.xpose.msra.mxu0 0
  %224 = vmatprep.subr.bf16.mxu0 0
  %225 = vmatpush1.bf16.xpose.msra.mxu0 0
  %226 = vmatprep.subr.bf16.mxu0 0
  %227 = vmatpush1.bf16.xpose.msra.mxu0 0
  %228 = vmatprep.mubr.bf16.mxu0 0
  %229 = vmatmul.mubr.bf16.gmra.mrb[0].mxu0 %v191
  %v230 = vpop.f32.mrb[0].mxu0
  %v231 = vadd.f32 0.0, %v230
  %v232 = vpop.f32.mrb[0].mxu0
  %v233 = vpop.f32.mrb[0].mxu0
  %v234 = vadd.f32 0.0, %v233
  %v235 = vpop.f32.mrb[0].mxu0
  %236 = vdwg.mxu0
  %v237 = vld [vmem:[%s3] sm:$0xff]
  %v238 = vld [vmem:[%s3 + $0x8] sm:$0xff]
  %v239 = vmul.f32 %v231, %v237
  %v240 = vmul.f32 %v234, %v238
  %v241 = vand.u32 2147483647, %v239
  %v242 = vand.u32 2147483647, %v240
  %vm243 = vcmask 130048
  %v244 = vsel %vm243, %v241, 0.0
  %245 = vadd.xlane.f32.xlu0 %v244
  %v246 = vpop.xlane.xlu0 %245
  %v247 = vsel %vm243, %v242, 0.0
  %248 = vadd.xlane.f32.xlu0 %v247
  %v249 = vpop.xlane.xlu0 %248
  %v250 = vmax.f32 %v246, 1.0
  %v251 = vmax.f32 %v249, 1.0
  %v252 = vmin.f32 %v250, 50000.0
  %v253 = vmin.f32 %v251, 50000.0
  %v254 = vrcp.pop %v252
  %v255 = vmul.f32 %v239, %v254
  %v256 = vrcp.pop %v253
  %v257 = vmul.f32 %v240, %v256
  %v258 = vpack.c.bf16 %v257, %v255
  %v260 = vsel %vm243, %v258, 0
  %262 = vmatprep.subr.bf16.mxu0 0
  %263 = vmatpush1.bf16.msra.mxu0 %v177
  %264 = vmatprep.subr.bf16.mxu0 0
  %265 = vmatpush1.bf16.msra.mxu0 0
  %266 = vmatprep.subr.bf16.mxu0 0
  %267 = vmatpush1.bf16.msra.mxu0 0
  %268 = vmatprep.subr.bf16.mxu0 0
  %269 = vmatpush1.bf16.msra.mxu0 0
  %270 = vmatprep.subr.bf16.mxu0 0
  %271 = vmatpush1.bf16.msra.mxu0 0
  %272 = vmatprep.subr.bf16.mxu0 0
  %273 = vmatpush1.bf16.msra.mxu0 0
  %274 = vmatprep.subr.bf16.mxu0 0
  %275 = vmatpush1.bf16.msra.mxu0 0
  %276 = vmatprep.subr.bf16.mxu0 0
  %277 = vmatpush1.bf16.msra.mxu0 0
  %278 = vmatprep.subr.bf16.mxu0 0
  %279 = vmatpush1.bf16.msra.mxu0 0
  %280 = vmatprep.subr.bf16.mxu0 0
  %281 = vmatpush1.bf16.msra.mxu0 0
  %282 = vmatprep.subr.bf16.mxu0 0
  %283 = vmatpush1.bf16.msra.mxu0 0
  %284 = vmatprep.subr.bf16.mxu0 0
  %285 = vmatpush1.bf16.msra.mxu0 0
  %286 = vmatprep.subr.bf16.mxu0 0
  %287 = vmatpush1.bf16.msra.mxu0 0
  %288 = vmatprep.subr.bf16.mxu0 0
  %289 = vmatpush1.bf16.msra.mxu0 0
  %290 = vmatprep.subr.bf16.mxu0 0
  %291 = vmatpush1.bf16.msra.mxu0 0
  %292 = vmatprep.subr.bf16.mxu0 0
  %293 = vmatpush1.bf16.msra.mxu0 0
  %294 = vmatprep.mubr.bf16.mxu0 0
  %295 = vmatmul.mubr.bf16.gmra.mrb[0].mxu0 %v260
  %v296 = vpop.f32.mrb[0].mxu0
  %v297 = vadd.f32 0.0, %v296
  %v298 = vpop.f32.mrb[0].mxu0
  %v299 = vpop.f32.mrb[0].mxu0
  %v300 = vadd.f32 0.0, %v299
  %v301 = vpop.f32.mrb[0].mxu0
  %302 = vdwg.mxu0
  %v303 = vmul.f32 %v297, %v297
  %v304 = vmul.f32 %v300, %v300
  %v305 = vsel %vm243, %v303, 0.0
  %306 = vadd.xlane.f32.xlu0 %v305
  %v307 = vpop.xlane.xlu0 %306
  %v308 = vsel %vm243, %v304, 0.0
  %309 = vadd.xlane.f32.xlu0 %v308
  %v310 = vpop.xlane.xlu0 %309
  %v311 = vrcp.pop 16.0
  %v312 = vmul.f32 %v307, %v311
  %v313 = vmul.f32 %v310, %v311
  %v314 = vadd.f32 %v312, 1e-05
  %v315 = vadd.f32 %v313, 1e-05
  %v316 = vrsqrt.pop %v314
  %v317 = vrsqrt.pop %v315
  %v318 = vmul.f32 %v297, %v316
  %v319 = vmul.f32 %v300, %v317
  %v320 = vxor.u32 %v129, 2147483648
  %v321 = vxor.u32 %v133, 2147483648
  %v322 = vmul.f32 %v320, 1.442695
  %v323 = vpow.pop %v322
  %v324 = vmul.f32 %v321, 1.442695
  %v325 = vpow.pop %v324
  %v326 = vadd.f32 %v323, 1.0
  %v327 = vadd.f32 %v325, 1.0
  %v328 = vrcp.pop %v326
  %v329 = vmul.f32 1.0, %v328
  %v330 = vrcp.pop %v327
  %v331 = vmul.f32 1.0, %v330
  %v332 = vmul.f32 %v129, %v329
  %v333 = vmul.f32 %v133, %v331
  %336 = vrot.lane.b32.xlu0 %v318, 64
  %v337 = vpop.permute.xlu0 %336
  %338 = vrot.lane.b32.xlu0 %v319, 64
  %v339 = vpop.permute.xlu0 %338
  %v342 = vmul.f32 %v332, %v337
  %v343 = vmul.f32 %v333, %v339
  %v344 = vpack.c.bf16 %v343, %v342
  %346 = vrot.lane.b32.xlu0 %v163, 120
  %v347 = vpop.permute.xlu0 %346
  %348 = vrot.lane.b32.xlu0 %v176, 56
  %v349 = vpop.permute.xlu0 %348
  %v351 = vsel %vm189, %v347, 0
  %v354 = vsel %vm189, %v349, 0
  %356 = vmatprep.subr.bf16.mxu0 0
  %357 = vmatpush1.bf16.xpose.msra.mxu0 %v354
  %358 = vmatprep.subr.bf16.mxu0 0
  %359 = vmatpush1.bf16.xpose.msra.mxu0 0
  %360 = vmatprep.subr.bf16.mxu0 0
  %361 = vmatpush1.bf16.xpose.msra.mxu0 0
  %362 = vmatprep.subr.bf16.mxu0 0
  %363 = vmatpush1.bf16.xpose.msra.mxu0 0
  %364 = vmatprep.subr.bf16.mxu0 0
  %365 = vmatpush1.bf16.xpose.msra.mxu0 0
  %366 = vmatprep.subr.bf16.mxu0 0
  %367 = vmatpush1.bf16.xpose.msra.mxu0 0
  %368 = vmatprep.subr.bf16.mxu0 0
  %369 = vmatpush1.bf16.xpose.msra.mxu0 0
  %370 = vmatprep.subr.bf16.mxu0 0
  %371 = vmatpush1.bf16.xpose.msra.mxu0 0
  %372 = vmatprep.subr.bf16.mxu0 0
  %373 = vmatpush1.bf16.xpose.msra.mxu0 0
  %374 = vmatprep.subr.bf16.mxu0 0
  %375 = vmatpush1.bf16.xpose.msra.mxu0 0
  %376 = vmatprep.subr.bf16.mxu0 0
  %377 = vmatpush1.bf16.xpose.msra.mxu0 0
  %378 = vmatprep.subr.bf16.mxu0 0
  %379 = vmatpush1.bf16.xpose.msra.mxu0 0
  %380 = vmatprep.subr.bf16.mxu0 0
  %381 = vmatpush1.bf16.xpose.msra.mxu0 0
  %382 = vmatprep.subr.bf16.mxu0 0
  %383 = vmatpush1.bf16.xpose.msra.mxu0 0
  %384 = vmatprep.subr.bf16.mxu0 0
  %385 = vmatpush1.bf16.xpose.msra.mxu0 0
  %386 = vmatprep.subr.bf16.mxu0 0
  %387 = vmatpush1.bf16.xpose.msra.mxu0 0
  %388 = vmatprep.mubr.bf16.mxu0 0
  %389 = vmatmul.mubr.bf16.gmra.mrb[0].mxu0 %v351
  %v390 = vpop.f32.mrb[0].mxu0
  %v391 = vadd.f32 0.0, %v390
  %v392 = vpop.f32.mrb[0].mxu0
  %v393 = vpop.f32.mrb[0].mxu0
  %v394 = vadd.f32 0.0, %v393
  %v395 = vpop.f32.mrb[0].mxu0
  %396 = vdwg.mxu0
  %s397 = scalar_lea.vmem %s3, 16
  %v398 = vld [vmem:[%s397] sm:$0xff]
  %v399 = vld [vmem:[%s397 + $0x8] sm:$0xff]
  %v400 = vmul.f32 %v391, %v398
  %v401 = vmul.f32 %v394, %v399
  %v402 = vand.u32 2147483647, %v400
  %v403 = vand.u32 2147483647, %v401
  %v404 = vsel %vm243, %v402, 0.0
  %405 = vadd.xlane.f32.xlu0 %v404
  %v406 = vpop.xlane.xlu0 %405
  %v407 = vsel %vm243, %v403, 0.0
  %408 = vadd.xlane.f32.xlu0 %v407
  %v409 = vpop.xlane.xlu0 %408
  %v410 = vmax.f32 %v406, 1.0
  %v411 = vmax.f32 %v409, 1.0
  %v412 = vmin.f32 %v410, 50000.0
  %v413 = vmin.f32 %v411, 50000.0
  %v414 = vrcp.pop %v412
  %v415 = vmul.f32 %v400, %v414
  %v416 = vrcp.pop %v413
  %v417 = vmul.f32 %v401, %v416
  %v418 = vpack.c.bf16 %v417, %v415
  %420 = vrot.lane.b32.xlu0 %v177, 112
  %v421 = vpop.permute.xlu0 %420
  %v424 = vsel %vm243, %v418, 0
  %426 = vmatprep.subr.bf16.mxu0 0
  %427 = vmatpush1.bf16.msra.mxu0 %v421
  %428 = vmatprep.subr.bf16.mxu0 0
  %429 = vmatpush1.bf16.msra.mxu0 0
  %430 = vmatprep.subr.bf16.mxu0 0
  %431 = vmatpush1.bf16.msra.mxu0 0
  %432 = vmatprep.subr.bf16.mxu0 0
  %433 = vmatpush1.bf16.msra.mxu0 0
  %434 = vmatprep.subr.bf16.mxu0 0
  %435 = vmatpush1.bf16.msra.mxu0 0
  %436 = vmatprep.subr.bf16.mxu0 0
  %437 = vmatpush1.bf16.msra.mxu0 0
  %438 = vmatprep.subr.bf16.mxu0 0
  %439 = vmatpush1.bf16.msra.mxu0 0
  %440 = vmatprep.subr.bf16.mxu0 0
  %441 = vmatpush1.bf16.msra.mxu0 0
  %442 = vmatprep.subr.bf16.mxu0 0
  %443 = vmatpush1.bf16.msra.mxu0 0
  %444 = vmatprep.subr.bf16.mxu0 0
  %445 = vmatpush1.bf16.msra.mxu0 0
  %446 = vmatprep.subr.bf16.mxu0 0
  %447 = vmatpush1.bf16.msra.mxu0 0
  %448 = vmatprep.subr.bf16.mxu0 0
  %449 = vmatpush1.bf16.msra.mxu0 0
  %450 = vmatprep.subr.bf16.mxu0 0
  %451 = vmatpush1.bf16.msra.mxu0 0
  %452 = vmatprep.subr.bf16.mxu0 0
  %453 = vmatpush1.bf16.msra.mxu0 0
  %454 = vmatprep.subr.bf16.mxu0 0
  %455 = vmatpush1.bf16.msra.mxu0 0
  %456 = vmatprep.subr.bf16.mxu0 0
  %457 = vmatpush1.bf16.msra.mxu0 0
  %458 = vmatprep.mubr.bf16.mxu0 0
  %459 = vmatmul.mubr.bf16.gmra.mrb[0].mxu0 %v424
  %v460 = vpop.f32.mrb[0].mxu0
  %v461 = vadd.f32 0.0, %v460
  %v462 = vpop.f32.mrb[0].mxu0
  %v463 = vpop.f32.mrb[0].mxu0
  %v464 = vadd.f32 0.0, %v463
  %v465 = vpop.f32.mrb[0].mxu0
  %466 = vdwg.mxu0
  %v467 = vmul.f32 %v461, %v461
  %v468 = vmul.f32 %v464, %v464
  %v469 = vsel %vm243, %v467, 0.0
  %470 = vadd.xlane.f32.xlu0 %v469
  %v471 = vpop.xlane.xlu0 %470
  %v472 = vsel %vm243, %v468, 0.0
  %473 = vadd.xlane.f32.xlu0 %v472
  %v474 = vpop.xlane.xlu0 %473
  %v475 = vmul.f32 %v471, %v311
  %v476 = vmul.f32 %v474, %v311
  %v477 = vadd.f32 %v475, 1e-05
  %v478 = vadd.f32 %v476, 1e-05
  %v479 = vrsqrt.pop %v477
  %v480 = vrsqrt.pop %v478
  %v481 = vmul.f32 %v461, %v479
  %v482 = vmul.f32 %v464, %v480
  %485 = vrot.lane.b32.xlu0 %v481, 80
  %v486 = vpop.permute.xlu0 %485
  %487 = vrot.lane.b32.xlu0 %v482, 80
  %v488 = vpop.permute.xlu0 %487
  %v491 = vmul.f32 %v332, %v486
  %v492 = vmul.f32 %v333, %v488
  %v493 = vpack.c.bf16 %v492, %v491
  %495 = vrot.lane.b32.xlu0 %v493, 48
  %v496 = vpop.permute.xlu0 %495
  %v499 = vunpack.c.l.b16 %v180
  %v500 = vunpack.c.l.b16 %v181
  %v501 = vpack.c.b16 %v500, %v499
  %v504 = vsel %vm243, %v496, 0
  %506 = vmatprep.subr.bf16.mxu0 0
  %507 = vmatpush1.bf16.msra.mxu0 %v501
  %508 = vmatprep.subr.bf16.mxu0 0
  %509 = vmatpush1.bf16.msra.mxu0 0
  %510 = vmatprep.subr.bf16.mxu0 0
  %511 = vmatpush1.bf16.msra.mxu0 0
  %512 = vmatprep.subr.bf16.mxu0 0
  %513 = vmatpush1.bf16.msra.mxu0 0
  %514 = vmatprep.subr.bf16.mxu0 0
  %515 = vmatpush1.bf16.msra.mxu0 0
  %516 = vmatprep.subr.bf16.mxu0 0
  %517 = vmatpush1.bf16.msra.mxu0 0
  %518 = vmatprep.subr.bf16.mxu0 0
  %519 = vmatpush1.bf16.msra.mxu0 0
  %520 = vmatprep.subr.bf16.mxu0 0
  %521 = vmatpush1.bf16.msra.mxu0 0
  %522 = vmatprep.subr.bf16.mxu0 0
  %523 = vmatpush1.bf16.msra.mxu0 0
  %524 = vmatprep.subr.bf16.mxu0 0
  %525 = vmatpush1.bf16.msra.mxu0 0
  %526 = vmatprep.subr.bf16.mxu0 0
  %527 = vmatpush1.bf16.msra.mxu0 0
  %528 = vmatprep.subr.bf16.mxu0 0
  %529 = vmatpush1.bf16.msra.mxu0 0
  %530 = vmatprep.subr.bf16.mxu0 0
  %531 = vmatpush1.bf16.msra.mxu0 0
  %532 = vmatprep.subr.bf16.mxu0 0
  %533 = vmatpush1.bf16.msra.mxu0 0
  %534 = vmatprep.subr.bf16.mxu0 0
  %535 = vmatpush1.bf16.msra.mxu0 0
  %536 = vmatprep.subr.bf16.mxu0 0
  %537 = vmatpush1.bf16.msra.mxu0 0
  %538 = vmatprep.mubr.bf16.mxu0 0
  %539 = vmatmul.mubr.bf16.gmra.mrb[0].mxu0 %v504
  %v540 = vpop.f32.mrb[0].mxu0
  %v541 = vadd.f32 0.0, %v540
  %v542 = vpop.f32.mrb[0].mxu0
  %v543 = vpop.f32.mrb[0].mxu0
  %v544 = vadd.f32 0.0, %v543
  %v545 = vpop.f32.mrb[0].mxu0
  %546 = vdwg.mxu0
  %548 = vrot.lane.b32.xlu0 %v344, 64
  %v549 = vpop.permute.xlu0 %548
  %v552 = vunpack.c.l.b16 %v178
  %v553 = vunpack.c.l.b16 %v179
  %v554 = vpack.c.b16 %v553, %v552
  %v557 = vsel %vm243, %v549, 0
  %559 = vmatprep.subr.bf16.mxu0 0
  %560 = vmatpush1.bf16.msra.mxu0 %v554
  %561 = vmatprep.subr.bf16.mxu0 0
  %562 = vmatpush1.bf16.msra.mxu0 0
  %563 = vmatprep.subr.bf16.mxu0 0
  %564 = vmatpush1.bf16.msra.mxu0 0
  %565 = vmatprep.subr.bf16.mxu0 0
  %566 = vmatpush1.bf16.msra.mxu0 0
  %567 = vmatprep.subr.bf16.mxu0 0
  %568 = vmatpush1.bf16.msra.mxu0 0
  %569 = vmatprep.subr.bf16.mxu0 0
  %570 = vmatpush1.bf16.msra.mxu0 0
  %571 = vmatprep.subr.bf16.mxu0 0
  %572 = vmatpush1.bf16.msra.mxu0 0
  %573 = vmatprep.subr.bf16.mxu0 0
  %574 = vmatpush1.bf16.msra.mxu0 0
  %575 = vmatprep.subr.bf16.mxu0 0
  %576 = vmatpush1.bf16.msra.mxu0 0
  %577 = vmatprep.subr.bf16.mxu0 0
  %578 = vmatpush1.bf16.msra.mxu0 0
  %579 = vmatprep.subr.bf16.mxu0 0
  %580 = vmatpush1.bf16.msra.mxu0 0
  %581 = vmatprep.subr.bf16.mxu0 0
  %582 = vmatpush1.bf16.msra.mxu0 0
  %583 = vmatprep.subr.bf16.mxu0 0
  %584 = vmatpush1.bf16.msra.mxu0 0
  %585 = vmatprep.subr.bf16.mxu0 0
  %586 = vmatpush1.bf16.msra.mxu0 0
  %587 = vmatprep.subr.bf16.mxu0 0
  %588 = vmatpush1.bf16.msra.mxu0 0
  %589 = vmatprep.subr.bf16.mxu0 0
  %590 = vmatpush1.bf16.msra.mxu0 0
  %591 = vmatprep.mubr.bf16.mxu0 0
  %592 = vmatmul.mubr.bf16.gmra.mrb[0].mxu0 %v557
  %v593 = vpop.f32.mrb[0].mxu0
  %v594 = vadd.f32 %v541, %v593
  %v595 = vpop.f32.mrb[0].mxu0
  %v596 = vpop.f32.mrb[0].mxu0
  %v597 = vadd.f32 %v544, %v596
  %v598 = vpop.f32.mrb[0].mxu0
  %599 = vdwg.mxu0
  %600 = vrot.lane.b32.xlu0 %v163, 112
  %v601 = vpop.permute.xlu0 %600
  %602 = vrot.lane.b32.xlu0 %v176, 48
  %v603 = vpop.permute.xlu0 %602
  %v605 = vsel %vm189, %v601, 0
  %v608 = vsel %vm189, %v603, 0
  %610 = vmatprep.subr.bf16.mxu0 0
  %611 = vmatpush1.bf16.xpose.msra.mxu0 %v608
  %612 = vmatprep.subr.bf16.mxu0 0
  %613 = vmatpush1.bf16.xpose.msra.mxu0 0
  %614 = vmatprep.subr.bf16.mxu0 0
  %615 = vmatpush1.bf16.xpose.msra.mxu0 0
  %616 = vmatprep.subr.bf16.mxu0 0
  %617 = vmatpush1.bf16.xpose.msra.mxu0 0
  %618 = vmatprep.subr.bf16.mxu0 0
  %619 = vmatpush1.bf16.xpose.msra.mxu0 0
  %620 = vmatprep.subr.bf16.mxu0 0
  %621 = vmatpush1.bf16.xpose.msra.mxu0 0
  %622 = vmatprep.subr.bf16.mxu0 0
  %623 = vmatpush1.bf16.xpose.msra.mxu0 0
  %624 = vmatprep.subr.bf16.mxu0 0
  %625 = vmatpush1.bf16.xpose.msra.mxu0 0
  %626 = vmatprep.subr.bf16.mxu0 0
  %627 = vmatpush1.bf16.xpose.msra.mxu0 0
  %628 = vmatprep.subr.bf16.mxu0 0
  %629 = vmatpush1.bf16.xpose.msra.mxu0 0
  %630 = vmatprep.subr.bf16.mxu0 0
  %631 = vmatpush1.bf16.xpose.msra.mxu0 0
  %632 = vmatprep.subr.bf16.mxu0 0
  %633 = vmatpush1.bf16.xpose.msra.mxu0 0
  %634 = vmatprep.subr.bf16.mxu0 0
  %635 = vmatpush1.bf16.xpose.msra.mxu0 0
  %636 = vmatprep.subr.bf16.mxu0 0
  %637 = vmatpush1.bf16.xpose.msra.mxu0 0
  %638 = vmatprep.subr.bf16.mxu0 0
  %639 = vmatpush1.bf16.xpose.msra.mxu0 0
  %640 = vmatprep.subr.bf16.mxu0 0
  %641 = vmatpush1.bf16.xpose.msra.mxu0 0
  %642 = vmatprep.mubr.bf16.mxu0 0
  %643 = vmatmul.mubr.bf16.gmra.mrb[0].mxu0 %v605
  %v644 = vpop.f32.mrb[0].mxu0
  %v645 = vadd.f32 0.0, %v644
  %v646 = vpop.f32.mrb[0].mxu0
  %v647 = vpop.f32.mrb[0].mxu0
  %v648 = vadd.f32 0.0, %v647
  %v649 = vpop.f32.mrb[0].mxu0
  %650 = vdwg.mxu0
  %s651 = scalar_lea.vmem %s3, 32
  %v652 = vld [vmem:[%s651] sm:$0xff]
  %v653 = vld [vmem:[%s651 + $0x8] sm:$0xff]
  %v654 = vmul.f32 %v645, %v652
  %v655 = vmul.f32 %v648, %v653
  %v656 = vand.u32 2147483647, %v654
  %v657 = vand.u32 2147483647, %v655
  %v658 = vsel %vm243, %v656, 0.0
  %659 = vadd.xlane.f32.xlu0 %v658
  %v660 = vpop.xlane.xlu0 %659
  %v661 = vsel %vm243, %v657, 0.0
  %662 = vadd.xlane.f32.xlu0 %v661
  %v663 = vpop.xlane.xlu0 %662
  %v664 = vmax.f32 %v660, 1.0
  %v665 = vmax.f32 %v663, 1.0
  %v666 = vmin.f32 %v664, 50000.0
  %v667 = vmin.f32 %v665, 50000.0
  %v668 = vrcp.pop %v666
  %v669 = vmul.f32 %v654, %v668
  %v670 = vrcp.pop %v667
  %v671 = vmul.f32 %v655, %v670
  %v672 = vpack.c.bf16 %v671, %v669
  %673 = vrot.lane.b32.xlu0 %v177, 96
  %v674 = vpop.permute.xlu0 %673
  %v677 = vsel %vm243, %v672, 0
  %679 = vmatprep.subr.bf16.mxu0 0
  %680 = vmatpush1.bf16.msra.mxu0 %v674
  %681 = vmatprep.subr.bf16.mxu0 0
  %682 = vmatpush1.bf16.msra.mxu0 0
  %683 = vmatprep.subr.bf16.mxu0 0
  %684 = vmatpush1.bf16.msra.mxu0 0
  %685 = vmatprep.subr.bf16.mxu0 0
  %686 = vmatpush1.bf16.msra.mxu0 0
  %687 = vmatprep.subr.bf16.mxu0 0
  %688 = vmatpush1.bf16.msra.mxu0 0
  %689 = vmatprep.subr.bf16.mxu0 0
  %690 = vmatpush1.bf16.msra.mxu0 0
  %691 = vmatprep.subr.bf16.mxu0 0
  %692 = vmatpush1.bf16.msra.mxu0 0
  %693 = vmatprep.subr.bf16.mxu0 0
  %694 = vmatpush1.bf16.msra.mxu0 0
  %695 = vmatprep.subr.bf16.mxu0 0
  %696 = vmatpush1.bf16.msra.mxu0 0
  %697 = vmatprep.subr.bf16.mxu0 0
  %698 = vmatpush1.bf16.msra.mxu0 0
  %699 = vmatprep.subr.bf16.mxu0 0
  %700 = vmatpush1.bf16.msra.mxu0 0
  %701 = vmatprep.subr.bf16.mxu0 0
  %702 = vmatpush1.bf16.msra.mxu0 0
  %703 = vmatprep.subr.bf16.mxu0 0
  %704 = vmatpush1.bf16.msra.mxu0 0
  %705 = vmatprep.subr.bf16.mxu0 0
  %706 = vmatpush1.bf16.msra.mxu0 0
  %707 = vmatprep.subr.bf16.mxu0 0
  %708 = vmatpush1.bf16.msra.mxu0 0
  %709 = vmatprep.subr.bf16.mxu0 0
  %710 = vmatpush1.bf16.msra.mxu0 0
  %711 = vmatprep.mubr.bf16.mxu0 0
  %712 = vmatmul.mubr.bf16.gmra.mrb[0].mxu0 %v677
  %v713 = vpop.f32.mrb[0].mxu0
  %v714 = vadd.f32 0.0, %v713
  %v715 = vpop.f32.mrb[0].mxu0
  %v716 = vpop.f32.mrb[0].mxu0
  %v717 = vadd.f32 0.0, %v716
  %v718 = vpop.f32.mrb[0].mxu0
  %719 = vdwg.mxu0
  %v720 = vmul.f32 %v714, %v714
  %v721 = vmul.f32 %v717, %v717
  %v722 = vsel %vm243, %v720, 0.0
  %723 = vadd.xlane.f32.xlu0 %v722
  %v724 = vpop.xlane.xlu0 %723
  %v725 = vsel %vm243, %v721, 0.0
  %726 = vadd.xlane.f32.xlu0 %v725
  %v727 = vpop.xlane.xlu0 %726
  %v728 = vmul.f32 %v724, %v311
  %v729 = vmul.f32 %v727, %v311
  %v730 = vadd.f32 %v728, 1e-05
  %v731 = vadd.f32 %v729, 1e-05
  %v732 = vrsqrt.pop %v730
  %v733 = vrsqrt.pop %v731
  %v734 = vmul.f32 %v714, %v732
  %v735 = vmul.f32 %v717, %v733
  %738 = vrot.lane.b32.xlu0 %v734, 96
  %v739 = vpop.permute.xlu0 %738
  %740 = vrot.lane.b32.xlu0 %v735, 96
  %v741 = vpop.permute.xlu0 %740
  %v744 = vmul.f32 %v332, %v739
  %v745 = vmul.f32 %v333, %v741
  %v746 = vpack.c.bf16 %v745, %v744
  %748 = vrot.lane.b32.xlu0 %v746, 32
  %v749 = vpop.permute.xlu0 %748
  %v752 = vunpack.c.l.b16 %v182
  %v753 = vunpack.c.l.b16 %v183
  %v754 = vpack.c.b16 %v753, %v752
  %v757 = vsel %vm243, %v749, 0
  %759 = vmatprep.subr.bf16.mxu0 0
  %760 = vmatpush1.bf16.msra.mxu0 %v754
  %761 = vmatprep.subr.bf16.mxu0 0
  %762 = vmatpush1.bf16.msra.mxu0 0
  %763 = vmatprep.subr.bf16.mxu0 0
  %764 = vmatpush1.bf16.msra.mxu0 0
  %765 = vmatprep.subr.bf16.mxu0 0
  %766 = vmatpush1.bf16.msra.mxu0 0
  %767 = vmatprep.subr.bf16.mxu0 0
  %768 = vmatpush1.bf16.msra.mxu0 0
  %769 = vmatprep.subr.bf16.mxu0 0
  %770 = vmatpush1.bf16.msra.mxu0 0
  %771 = vmatprep.subr.bf16.mxu0 0
  %772 = vmatpush1.bf16.msra.mxu0 0
  %773 = vmatprep.subr.bf16.mxu0 0
  %774 = vmatpush1.bf16.msra.mxu0 0
  %775 = vmatprep.subr.bf16.mxu0 0
  %776 = vmatpush1.bf16.msra.mxu0 0
  %777 = vmatprep.subr.bf16.mxu0 0
  %778 = vmatpush1.bf16.msra.mxu0 0
  %779 = vmatprep.subr.bf16.mxu0 0
  %780 = vmatpush1.bf16.msra.mxu0 0
  %781 = vmatprep.subr.bf16.mxu0 0
  %782 = vmatpush1.bf16.msra.mxu0 0
  %783 = vmatprep.subr.bf16.mxu0 0
  %784 = vmatpush1.bf16.msra.mxu0 0
  %785 = vmatprep.subr.bf16.mxu0 0
  %786 = vmatpush1.bf16.msra.mxu0 0
  %787 = vmatprep.subr.bf16.mxu0 0
  %788 = vmatpush1.bf16.msra.mxu0 0
  %789 = vmatprep.subr.bf16.mxu0 0
  %790 = vmatpush1.bf16.msra.mxu0 0
  %791 = vmatprep.mubr.bf16.mxu0 0
  %792 = vmatmul.mubr.bf16.gmra.mrb[0].mxu0 %v757
  %v793 = vpop.f32.mrb[0].mxu0
  %v794 = vadd.f32 0.0, %v793
  %v795 = vpop.f32.mrb[0].mxu0
  %v796 = vpop.f32.mrb[0].mxu0
  %v797 = vadd.f32 0.0, %v796
  %v798 = vpop.f32.mrb[0].mxu0
  %799 = vdwg.mxu0
  %v800 = vadd.f32 %v594, %v794
  %v801 = vadd.f32 %v597, %v797
  %802 = vrot.lane.b32.xlu0 %v163, 104
  %v803 = vpop.permute.xlu0 %802
  %804 = vrot.lane.b32.xlu0 %v176, 40
  %v805 = vpop.permute.xlu0 %804
  %v807 = vsel %vm189, %v803, 0
  %v810 = vsel %vm189, %v805, 0
  %812 = vmatprep.subr.bf16.mxu0 0
  %813 = vmatpush1.bf16.xpose.msra.mxu0 %v810
  %814 = vmatprep.subr.bf16.mxu0 0
  %815 = vmatpush1.bf16.xpose.msra.mxu0 0
  %816 = vmatprep.subr.bf16.mxu0 0
  %817 = vmatpush1.bf16.xpose.msra.mxu0 0
  %818 = vmatprep.subr.bf16.mxu0 0
  %819 = vmatpush1.bf16.xpose.msra.mxu0 0
  %820 = vmatprep.subr.bf16.mxu0 0
  %821 = vmatpush1.bf16.xpose.msra.mxu0 0
  %822 = vmatprep.subr.bf16.mxu0 0
  %823 = vmatpush1.bf16.xpose.msra.mxu0 0
  %824 = vmatprep.subr.bf16.mxu0 0
  %825 = vmatpush1.bf16.xpose.msra.mxu0 0
  %826 = vmatprep.subr.bf16.mxu0 0
  %827 = vmatpush1.bf16.xpose.msra.mxu0 0
  %828 = vmatprep.subr.bf16.mxu0 0
  %829 = vmatpush1.bf16.xpose.msra.mxu0 0
  %830 = vmatprep.subr.bf16.mxu0 0
  %831 = vmatpush1.bf16.xpose.msra.mxu0 0
  %832 = vmatprep.subr.bf16.mxu0 0
  %833 = vmatpush1.bf16.xpose.msra.mxu0 0
  %834 = vmatprep.subr.bf16.mxu0 0
  %835 = vmatpush1.bf16.xpose.msra.mxu0 0
  %836 = vmatprep.subr.bf16.mxu0 0
  %837 = vmatpush1.bf16.xpose.msra.mxu0 0
  %838 = vmatprep.subr.bf16.mxu0 0
  %839 = vmatpush1.bf16.xpose.msra.mxu0 0
  %840 = vmatprep.subr.bf16.mxu0 0
  %841 = vmatpush1.bf16.xpose.msra.mxu0 0
  %842 = vmatprep.subr.bf16.mxu0 0
  %843 = vmatpush1.bf16.xpose.msra.mxu0 0
  %844 = vmatprep.mubr.bf16.mxu0 0
  %845 = vmatmul.mubr.bf16.gmra.mrb[0].mxu0 %v807
  %v846 = vpop.f32.mrb[0].mxu0
  %v847 = vadd.f32 0.0, %v846
  %v848 = vpop.f32.mrb[0].mxu0
  %v849 = vpop.f32.mrb[0].mxu0
  %v850 = vadd.f32 0.0, %v849
  %v851 = vpop.f32.mrb[0].mxu0
  %852 = vdwg.mxu0
  %s853 = scalar_lea.vmem %s3, 48
  %v854 = vld [vmem:[%s853] sm:$0xff]
  %v855 = vld [vmem:[%s853 + $0x8] sm:$0xff]
  %v856 = vmul.f32 %v847, %v854
  %v857 = vmul.f32 %v850, %v855
  %v858 = vand.u32 2147483647, %v856
  %v859 = vand.u32 2147483647, %v857
  %v860 = vsel %vm243, %v858, 0.0
  %861 = vadd.xlane.f32.xlu0 %v860
  %v862 = vpop.xlane.xlu0 %861
  %v863 = vsel %vm243, %v859, 0.0
  %864 = vadd.xlane.f32.xlu0 %v863
  %v865 = vpop.xlane.xlu0 %864
  %v866 = vmax.f32 %v862, 1.0
  %v867 = vmax.f32 %v865, 1.0
  %v868 = vmin.f32 %v866, 50000.0
  %v869 = vmin.f32 %v867, 50000.0
  %v870 = vrcp.pop %v868
  %v871 = vmul.f32 %v856, %v870
  %v872 = vrcp.pop %v869
  %v873 = vmul.f32 %v857, %v872
  %v874 = vpack.c.bf16 %v873, %v871
  %875 = vrot.lane.b32.xlu0 %v177, 80
  %v876 = vpop.permute.xlu0 %875
  %v879 = vsel %vm243, %v874, 0
  %881 = vmatprep.subr.bf16.mxu0 0
  %882 = vmatpush1.bf16.msra.mxu0 %v876
  %883 = vmatprep.subr.bf16.mxu0 0
  %884 = vmatpush1.bf16.msra.mxu0 0
  %885 = vmatprep.subr.bf16.mxu0 0
  %886 = vmatpush1.bf16.msra.mxu0 0
  %887 = vmatprep.subr.bf16.mxu0 0
  %888 = vmatpush1.bf16.msra.mxu0 0
  %889 = vmatprep.subr.bf16.mxu0 0
  %890 = vmatpush1.bf16.msra.mxu0 0
  %891 = vmatprep.subr.bf16.mxu0 0
  %892 = vmatpush1.bf16.msra.mxu0 0
  %893 = vmatprep.subr.bf16.mxu0 0
  %894 = vmatpush1.bf16.msra.mxu0 0
  %895 = vmatprep.subr.bf16.mxu0 0
  %896 = vmatpush1.bf16.msra.mxu0 0
  %897 = vmatprep.subr.bf16.mxu0 0
  %898 = vmatpush1.bf16.msra.mxu0 0
  %899 = vmatprep.subr.bf16.mxu0 0
  %900 = vmatpush1.bf16.msra.mxu0 0
  %901 = vmatprep.subr.bf16.mxu0 0
  %902 = vmatpush1.bf16.msra.mxu0 0
  %903 = vmatprep.subr.bf16.mxu0 0
  %904 = vmatpush1.bf16.msra.mxu0 0
  %905 = vmatprep.subr.bf16.mxu0 0
  %906 = vmatpush1.bf16.msra.mxu0 0
  %907 = vmatprep.subr.bf16.mxu0 0
  %908 = vmatpush1.bf16.msra.mxu0 0
  %909 = vmatprep.subr.bf16.mxu0 0
  %910 = vmatpush1.bf16.msra.mxu0 0
  %911 = vmatprep.subr.bf16.mxu0 0
  %912 = vmatpush1.bf16.msra.mxu0 0
  %913 = vmatprep.mubr.bf16.mxu0 0
  %914 = vmatmul.mubr.bf16.gmra.mrb[0].mxu0 %v879
  %v915 = vpop.f32.mrb[0].mxu0
  %v916 = vadd.f32 0.0, %v915
  %v917 = vpop.f32.mrb[0].mxu0
  %v918 = vpop.f32.mrb[0].mxu0
  %v919 = vadd.f32 0.0, %v918
  %v920 = vpop.f32.mrb[0].mxu0
  %921 = vdwg.mxu0
  %v922 = vmul.f32 %v916, %v916
  %v923 = vmul.f32 %v919, %v919
  %v924 = vsel %vm243, %v922, 0.0
  %925 = vadd.xlane.f32.xlu0 %v924
  %v926 = vpop.xlane.xlu0 %925
  %v927 = vsel %vm243, %v923, 0.0
  %928 = vadd.xlane.f32.xlu0 %v927
  %v929 = vpop.xlane.xlu0 %928
  %v930 = vmul.f32 %v926, %v311
  %v931 = vmul.f32 %v929, %v311
  %v932 = vadd.f32 %v930, 1e-05
  %v933 = vadd.f32 %v931, 1e-05
  %v934 = vrsqrt.pop %v932
  %v935 = vrsqrt.pop %v933
  %v936 = vmul.f32 %v916, %v934
  %v937 = vmul.f32 %v919, %v935
  %940 = vrot.lane.b32.xlu0 %v936, 112
  %v941 = vpop.permute.xlu0 %940
  %942 = vrot.lane.b32.xlu0 %v937, 112
  %v943 = vpop.permute.xlu0 %942
  %v946 = vmul.f32 %v332, %v941
  %v947 = vmul.f32 %v333, %v943
  %v948 = vpack.c.bf16 %v947, %v946
  %950 = vrot.lane.b32.xlu0 %v948, 16
  %v951 = vpop.permute.xlu0 %950
  %v954 = vunpack.c.l.b16 %v184
  %v955 = vunpack.c.l.b16 %v185
  %v956 = vpack.c.b16 %v955, %v954
  %v959 = vsel %vm243, %v951, 0
  %961 = vmatprep.subr.bf16.mxu0 0
  %962 = vmatpush1.bf16.msra.mxu0 %v956
  %963 = vmatprep.subr.bf16.mxu0 0
  %964 = vmatpush1.bf16.msra.mxu0 0
  %965 = vmatprep.subr.bf16.mxu0 0
  %966 = vmatpush1.bf16.msra.mxu0 0
  %967 = vmatprep.subr.bf16.mxu0 0
  %968 = vmatpush1.bf16.msra.mxu0 0
  %969 = vmatprep.subr.bf16.mxu0 0
  %970 = vmatpush1.bf16.msra.mxu0 0
  %971 = vmatprep.subr.bf16.mxu0 0
  %972 = vmatpush1.bf16.msra.mxu0 0
  %973 = vmatprep.subr.bf16.mxu0 0
  %974 = vmatpush1.bf16.msra.mxu0 0
  %975 = vmatprep.subr.bf16.mxu0 0
  %976 = vmatpush1.bf16.msra.mxu0 0
  %977 = vmatprep.subr.bf16.mxu0 0
  %978 = vmatpush1.bf16.msra.mxu0 0
  %979 = vmatprep.subr.bf16.mxu0 0
  %980 = vmatpush1.bf16.msra.mxu0 0
  %981 = vmatprep.subr.bf16.mxu0 0
  %982 = vmatpush1.bf16.msra.mxu0 0
  %983 = vmatprep.subr.bf16.mxu0 0
  %984 = vmatpush1.bf16.msra.mxu0 0
  %985 = vmatprep.subr.bf16.mxu0 0
  %986 = vmatpush1.bf16.msra.mxu0 0
  %987 = vmatprep.subr.bf16.mxu0 0
  %988 = vmatpush1.bf16.msra.mxu0 0
  %989 = vmatprep.subr.bf16.mxu0 0
  %990 = vmatpush1.bf16.msra.mxu0 0
  %991 = vmatprep.subr.bf16.mxu0 0
  %992 = vmatpush1.bf16.msra.mxu0 0
  %993 = vmatprep.mubr.bf16.mxu0 0
  %994 = vmatmul.mubr.bf16.gmra.mrb[0].mxu0 %v959
  %v995 = vpop.f32.mrb[0].mxu0
  %v996 = vadd.f32 0.0, %v995
  %v997 = vpop.f32.mrb[0].mxu0
  %v998 = vpop.f32.mrb[0].mxu0
  %v999 = vadd.f32 0.0, %v998
  %v1000 = vpop.f32.mrb[0].mxu0
  %1001 = vdwg.mxu0
  %v1002 = vadd.f32 %v800, %v996
  %v1003 = vadd.f32 %v801, %v999
  %v1004 = vadd.f32 %v35, %v1002
  %v1005 = vadd.f32 %v36, %v1003
  %v1006 = vmul.f32 %v1004, %v1004
  %v1007 = vmul.f32 %v1005, %v1005
  %v1008 = vsel %vm42, %v1006, 0.0
  %1009 = vadd.xlane.f32.xlu0 %v1008
  %v1010 = vpop.xlane.xlu0 %1009
  %v1011 = vsel %vm42, %v1007, 0.0
  %1012 = vadd.xlane.f32.xlu0 %v1011
  %v1013 = vpop.xlane.xlu0 %1012
  %v1014 = vmul.f32 %v1010, %v49
  %v1015 = vmul.f32 %v1013, %v49
  %v1016 = vadd.f32 %v1014, 1e-05
  %v1017 = vadd.f32 %v1015, 1e-05
  %v1018 = vrsqrt.pop %v1016
  %v1019 = vrsqrt.pop %v1017
  %v1020 = vmul.f32 %v1004, %v1018
  %v1021 = vmul.f32 %v1005, %v1019
  %v1022 = vlaneseq
  %v1023 = vshrl.u32 %v1022, 7
  %v1024 = vsub.s32 1, %v1023
  %v1025 = vrot.slane %v37, %v1024
  %v1026 = vmul.f32 %v1020, %v1025
  %v1027 = vmul.f32 %v1021, %v1025
  %v1028 = vpack.c.bf16 %v1027, %v1026
  %v1029 = vld [vmem:[%s6] sm:$0xf]
  %v1030 = vld [vmem:[%s6 + $0x4] sm:$0xf]
  %v1031 = vld [vmem:[%s6 + $0x8] sm:$0xf]
  %v1032 = vld [vmem:[%s6 + $0xc] sm:$0xf]
  %v1037 = vunpack.c.l.b16 %v1029
  %v1038 = vunpack.c.l.b16 %v1030
  %v1039 = vunpack.c.l.b16 %v1031
  %v1040 = vunpack.c.l.b16 %v1032
  %v1041 = vpack.c.b16 %v1038, %v1037
  %v1042 = vpack.c.b16 %v1040, %v1039
  %v1046 = vsel %vm42, %v1028, 0
  %1048 = vmatprep.subr.bf16.mxu0 0
  %1049 = vmatpush1.bf16.msra.mxu0 %v1041
  %1050 = vmatprep.subr.bf16.mxu0 0
  %1051 = vmatpush1.bf16.msra.mxu0 %v1042
  %1052 = vmatprep.subr.bf16.mxu0 0
  %1053 = vmatpush1.bf16.msra.mxu0 0
  %1054 = vmatprep.subr.bf16.mxu0 0
  %1055 = vmatpush1.bf16.msra.mxu0 0
  %1056 = vmatprep.subr.bf16.mxu0 0
  %1057 = vmatpush1.bf16.msra.mxu0 0
  %1058 = vmatprep.subr.bf16.mxu0 0
  %1059 = vmatpush1.bf16.msra.mxu0 0
  %1060 = vmatprep.subr.bf16.mxu0 0
  %1061 = vmatpush1.bf16.msra.mxu0 0
  %1062 = vmatprep.subr.bf16.mxu0 0
  %1063 = vmatpush1.bf16.msra.mxu0 0
  %1064 = vmatprep.subr.bf16.mxu0 0
  %1065 = vmatpush1.bf16.msra.mxu0 0
  %1066 = vmatprep.subr.bf16.mxu0 0
  %1067 = vmatpush1.bf16.msra.mxu0 0
  %1068 = vmatprep.subr.bf16.mxu0 0
  %1069 = vmatpush1.bf16.msra.mxu0 0
  %1070 = vmatprep.subr.bf16.mxu0 0
  %1071 = vmatpush1.bf16.msra.mxu0 0
  %1072 = vmatprep.subr.bf16.mxu0 0
  %1073 = vmatpush1.bf16.msra.mxu0 0
  %1074 = vmatprep.subr.bf16.mxu0 0
  %1075 = vmatpush1.bf16.msra.mxu0 0
  %1076 = vmatprep.subr.bf16.mxu0 0
  %1077 = vmatpush1.bf16.msra.mxu0 0
  %1078 = vmatprep.subr.bf16.mxu0 0
  %1079 = vmatpush1.bf16.msra.mxu0 0
  %1080 = vmatprep.mubr.bf16.mxu0 0
  %1081 = vmatmul.mubr.bf16.gmra.mrb[0].mxu0 %v1046
  %v1082 = vpop.f32.mrb[0].mxu0
  %v1083 = vadd.f32 0.0, %v1082
  %v1084 = vpop.f32.mrb[0].mxu0
  %v1085 = vpop.f32.mrb[0].mxu0
  %v1086 = vadd.f32 0.0, %v1085
  %v1087 = vpop.f32.mrb[0].mxu0
  %1088 = vdwg.mxu0
  %v1089 = vmul.f32 %v1083, 0.5
  %v1090 = vmul.f32 %v1086, 0.5
  %v1091 = vmul.f32 %v1083, 0.70710677
  %v1092 = vmul.f32 %v1086, 0.70710677
  %vm1093 = vcmp.ge.f32.partialorder %v1091, 0.0
  %vm1094 = vcmp.ge.f32.partialorder %v1092, 0.0
  %v1095 = vsel %vm1093, 1.0, -1.0
  %v1096 = vsel %vm1094, 1.0, -1.0
  %v1097 = vand.u32 2147483647, %v1091
  %v1098 = vand.u32 2147483647, %v1092
  %v1099 = vmul.f32 %v1097, 0.3275911
  %v1100 = vmul.f32 %v1098, 0.3275911
  %v1101 = vadd.f32 %v1099, 1.0
  %v1102 = vadd.f32 %v1100, 1.0
  %v1103 = vrcp.pop %v1101
  %v1104 = vmul.f32 1.0, %v1103
  %v1105 = vrcp.pop %v1102
  %v1106 = vmul.f32 1.0, %v1105
  %v1107 = vmul.f32 %v1104, 1.0614054
  %v1108 = vmul.f32 %v1106, 1.0614054
  %v1109 = vadd.f32 %v1107, -1.4531521
  %v1110 = vadd.f32 %v1108, -1.4531521
  %v1111 = vmul.f32 %v1109, %v1104
  %v1112 = vmul.f32 %v1110, %v1106
  %v1113 = vadd.f32 %v1111, 1.4214138
  %v1114 = vadd.f32 %v1112, 1.4214138
  %v1115 = vmul.f32 %v1113, %v1104
  %v1116 = vmul.f32 %v1114, %v1106
  %v1117 = vadd.f32 %v1115, -0.28449672
  %v1118 = vadd.f32 %v1116, -0.28449672
  %v1119 = vmul.f32 %v1117, %v1104
  %v1120 = vmul.f32 %v1118, %v1106
  %v1121 = vadd.f32 %v1119, 0.2548296
  %v1122 = vadd.f32 %v1120, 0.2548296
  %v1123 = vmul.f32 %v1121, %v1104
  %v1124 = vmul.f32 %v1122, %v1106
  %v1125 = vsub.f32 0.0, %v1097
  %v1126 = vsub.f32 0.0, %v1098
  %v1127 = vmul.f32 %v1125, %v1097
  %v1128 = vmul.f32 %v1126, %v1098
  %v1129 = vmul.f32 %v1127, 1.442695
  %v1130 = vpow.pop %v1129
  %v1131 = vmul.f32 %v1128, 1.442695
  %v1132 = vpow.pop %v1131
  %v1133 = vmul.f32 %v1123, %v1130
  %v1134 = vmul.f32 %v1124, %v1132
  %v1135 = vsub.f32 1.0, %v1133
  %v1136 = vsub.f32 1.0, %v1134
  %v1137 = vmul.f32 %v1095, %v1135
  %v1138 = vmul.f32 %v1096, %v1136
  %v1139 = vadd.f32 %v1137, 1.0
  %v1140 = vadd.f32 %v1138, 1.0
  %v1141 = vmul.f32 %v1089, %v1139
  %v1142 = vmul.f32 %v1090, %v1140
  %1145 = vrot.lane.b32.xlu0 %v1083, 64
  %v1146 = vpop.permute.xlu0 %1145
  %1147 = vrot.lane.b32.xlu0 %v1086, 64
  %v1148 = vpop.permute.xlu0 %1147
  %v1151 = vmul.f32 %v1141, %v1146
  %v1152 = vmul.f32 %v1142, %v1148
  %v1153 = vpack.c.bf16 %v1152, %v1151
  %v1154 = vld [vmem:[%s7] sm:$0xf]
  %v1155 = vld [vmem:[%s7 + $0x4] sm:$0xf]
  %v1156 = vld [vmem:[%s7 + $0x8] sm:$0xf]
  %v1157 = vld [vmem:[%s7 + $0xc] sm:$0xf]
  %v1158 = vld [vmem:[%s7 + $0x10] sm:$0xf]
  %v1159 = vld [vmem:[%s7 + $0x14] sm:$0xf]
  %v1160 = vld [vmem:[%s7 + $0x18] sm:$0xf]
  %v1161 = vld [vmem:[%s7 + $0x1c] sm:$0xf]
  %v1170 = vunpack.c.l.b16 %v1154
  %v1171 = vunpack.c.l.b16 %v1155
  %v1172 = vunpack.c.l.b16 %v1156
  %v1173 = vunpack.c.l.b16 %v1157
  %v1174 = vunpack.c.l.b16 %v1158
  %v1175 = vunpack.c.l.b16 %v1159
  %v1176 = vunpack.c.l.b16 %v1160
  %v1177 = vunpack.c.l.b16 %v1161
  %v1178 = vpack.c.b16 %v1171, %v1170
  %v1179 = vpack.c.b16 %v1173, %v1172
  %v1180 = vpack.c.b16 %v1175, %v1174
  %v1181 = vpack.c.b16 %v1177, %v1176
  %vm1186 = vcmask 523264
  %v1188 = vsel %vm1186, %v1153, 0
  %1190 = vmatprep.subr.bf16.mxu0 0
  %1191 = vmatpush1.bf16.msra.mxu0 %v1178
  %1192 = vmatprep.subr.bf16.mxu0 0
  %1193 = vmatpush1.bf16.msra.mxu0 %v1179
  %1194 = vmatprep.subr.bf16.mxu0 0
  %1195 = vmatpush1.bf16.msra.mxu0 %v1180
  %1196 = vmatprep.subr.bf16.mxu0 0
  %1197 = vmatpush1.bf16.msra.mxu0 %v1181
  %1198 = vmatprep.subr.bf16.mxu0 0
  %1199 = vmatpush1.bf16.msra.mxu0 0
  %1200 = vmatprep.subr.bf16.mxu0 0
  %1201 = vmatpush1.bf16.msra.mxu0 0
  %1202 = vmatprep.subr.bf16.mxu0 0
  %1203 = vmatpush1.bf16.msra.mxu0 0
  %1204 = vmatprep.subr.bf16.mxu0 0
  %1205 = vmatpush1.bf16.msra.mxu0 0
  %1206 = vmatprep.subr.bf16.mxu0 0
  %1207 = vmatpush1.bf16.msra.mxu0 0
  %1208 = vmatprep.subr.bf16.mxu0 0
  %1209 = vmatpush1.bf16.msra.mxu0 0
  %1210 = vmatprep.subr.bf16.mxu0 0
  %1211 = vmatpush1.bf16.msra.mxu0 0
  %1212 = vmatprep.subr.bf16.mxu0 0
  %1213 = vmatpush1.bf16.msra.mxu0 0
  %1214 = vmatprep.subr.bf16.mxu0 0
  %1215 = vmatpush1.bf16.msra.mxu0 0
  %1216 = vmatprep.subr.bf16.mxu0 0
  %1217 = vmatpush1.bf16.msra.mxu0 0
  %1218 = vmatprep.subr.bf16.mxu0 0
  %1219 = vmatpush1.bf16.msra.mxu0 0
  %1220 = vmatprep.subr.bf16.mxu0 0
  %1221 = vmatpush1.bf16.msra.mxu0 0
  %1222 = vmatprep.mubr.bf16.mxu0 0
  %1223 = vmatmul.mubr.bf16.gmra.mrb[0].mxu0 %v1188
  %v1224 = vpop.f32.mrb[0].mxu0
  %v1225 = vadd.f32 0.0, %v1224
  %v1226 = vpop.f32.mrb[0].mxu0
  %v1227 = vpop.f32.mrb[0].mxu0
  %v1228 = vadd.f32 0.0, %v1227
  %v1229 = vpop.f32.mrb[0].mxu0
  %1230 = vdwg.mxu0
  %v1231 = vadd.f32 %v1004, %v1225
  %v1232 = vadd.f32 %v1005, %v1228
  %v1233 = vmul.f32 %v1231, %v1231
  %v1234 = vmul.f32 %v1232, %v1232
  %v1235 = vsel %vm42, %v1233, 0.0
  %1236 = vadd.xlane.f32.xlu0 %v1235
  %v1237 = vpop.xlane.xlu0 %1236
  %v1238 = vsel %vm42, %v1234, 0.0
  %1239 = vadd.xlane.f32.xlu0 %v1238
  %v1240 = vpop.xlane.xlu0 %1239
  %v1241 = vmul.f32 %v1237, %v49
  %v1242 = vmul.f32 %v1240, %v49
  %v1243 = vadd.f32 %v1241, 1e-05
  %v1244 = vadd.f32 %v1242, 1e-05
  %v1245 = vrsqrt.pop %v1243
  %v1246 = vrsqrt.pop %v1244
  %v1247 = vmul.f32 %v1231, %v1245
  %v1248 = vmul.f32 %v1232, %v1246
  %v1249 = vlaneseq
  %v1250 = vshrl.u32 %v1249, 7
  %v1251 = vsub.s32 2, %v1250
  %v1252 = vrot.slane %v37, %v1251
  %v1253 = vmul.f32 %v1247, %v1252
  %v1254 = vmul.f32 %v1248, %v1252
  %v1255 = vpack.c.bf16 %v1254, %v1253
  %s1256 = scalar_lea.vmem %s4, 32
  %v1257 = vld [vmem:[%s1256] sm:$0xff]
  %v1258 = vld [vmem:[%s1256 + $0x8] sm:$0xff]
  %v1259 = vld [vmem:[%s1256 + $0x10] sm:$0xff]
  %v1260 = vld [vmem:[%s1256 + $0x18] sm:$0xff]
  %v1265 = vunpack.c.l.b16 %v1257
  %v1266 = vunpack.c.h.b16 %v1257
  %v1267 = vunpack.c.l.b16 %v1258
  %v1268 = vunpack.c.h.b16 %v1258
  %v1269 = vunpack.c.l.b16 %v1259
  %v1270 = vunpack.c.h.b16 %v1259
  %v1271 = vunpack.c.l.b16 %v1260
  %v1272 = vunpack.c.h.b16 %v1260
  %v1273 = vpack.c.b16 %v1267, %v1265
  %v1274 = vpack.c.b16 %v1268, %v1266
  %v1275 = vpack.c.b16 %v1271, %v1269
  %v1276 = vpack.c.b16 %v1272, %v1270
  %v1282 = vsel %vm42, %v1255, 0
  %1284 = vmatprep.subr.bf16.mxu0 %v1274
  %1285 = vmatpush1.bf16.msra.mxu0 %v1273
  %1286 = vmatprep.subr.bf16.mxu0 %v1276
  %1287 = vmatpush1.bf16.msra.mxu0 %v1275
  %1288 = vmatprep.subr.bf16.mxu0 0
  %1289 = vmatpush1.bf16.msra.mxu0 0
  %1290 = vmatprep.subr.bf16.mxu0 0
  %1291 = vmatpush1.bf16.msra.mxu0 0
  %1292 = vmatprep.subr.bf16.mxu0 0
  %1293 = vmatpush1.bf16.msra.mxu0 0
  %1294 = vmatprep.subr.bf16.mxu0 0
  %1295 = vmatpush1.bf16.msra.mxu0 0
  %1296 = vmatprep.subr.bf16.mxu0 0
  %1297 = vmatpush1.bf16.msra.mxu0 0
  %1298 = vmatprep.subr.bf16.mxu0 0
  %1299 = vmatpush1.bf16.msra.mxu0 0
  %1300 = vmatprep.subr.bf16.mxu0 0
  %1301 = vmatpush1.bf16.msra.mxu0 0
  %1302 = vmatprep.subr.bf16.mxu0 0
  %1303 = vmatpush1.bf16.msra.mxu0 0
  %1304 = vmatprep.subr.bf16.mxu0 0
  %1305 = vmatpush1.bf16.msra.mxu0 0
  %1306 = vmatprep.subr.bf16.mxu0 0
  %1307 = vmatpush1.bf16.msra.mxu0 0
  %1308 = vmatprep.subr.bf16.mxu0 0
  %1309 = vmatpush1.bf16.msra.mxu0 0
  %1310 = vmatprep.subr.bf16.mxu0 0
  %1311 = vmatpush1.bf16.msra.mxu0 0
  %1312 = vmatprep.subr.bf16.mxu0 0
  %1313 = vmatpush1.bf16.msra.mxu0 0
  %1314 = vmatprep.subr.bf16.mxu0 0
  %1315 = vmatpush1.bf16.msra.mxu0 0
  %1316 = vmatprep.mubr.bf16.mxu0 0
  %1317 = vmatmul.mubr.bf16.gmra.mrb[0].mxu0 %v1282
  %v1318 = vpop.f32.mrb[0].mxu0
  %v1319 = vadd.f32 0.0, %v1318
  %v1320 = vpop.f32.mrb[0].mxu0
  %v1321 = vadd.f32 0.0, %v1320
  %v1322 = vpop.f32.mrb[0].mxu0
  %v1323 = vadd.f32 0.0, %v1322
  %v1324 = vpop.f32.mrb[0].mxu0
  %v1325 = vadd.f32 0.0, %v1324
  %1326 = vdwg.mxu0
  %v1327 = vmul.f32 %v1319, %v138
  %v1328 = vmul.f32 %v1323, %v140
  %v1329 = vmul.f32 %v1319, %v146
  %v1330 = vmul.f32 %v1323, %v148
  %1333 = vrot.lane.b32.xlu0 %v1329, 96
  %v1334 = vpop.permute.xlu0 %1333
  %1335 = vrot.lane.b32.xlu0 %v1330, 96
  %v1336 = vpop.permute.xlu0 %1335
  %v1339 = vadd.f32 %v1327, %v1334
  %v1340 = vadd.f32 %v1328, %v1336
  %v1341 = vpack.c.bf16 %v1340, %v1339
  %1344 = vrot.lane.b32.xlu0 %v1327, 96
  %v1345 = vpop.permute.xlu0 %1344
  %1346 = vrot.lane.b32.xlu0 %v1328, 96
  %v1347 = vpop.permute.xlu0 %1346
  %v1350 = vadd.f32 %v1329, %v1345
  %v1351 = vadd.f32 %v1330, %v1347
  %v1352 = vmul.f32 %v1350, 0.35355338
  %v1353 = vmul.f32 %v1351, 0.35355338
  %v1354 = vpack.c.bf16 %v1353, %v1352
  %v1355 = vpack.c.bf16 %v1325, %v1321
  %s1356 = scalar_lea.vmem %s5, 32
  %v1357 = vld [vmem:[%s1356] sm:$0xf]
  %v1358 = vld [vmem:[%s1356 + $0x4] sm:$0xf]
  %v1359 = vld [vmem:[%s1356 + $0x8] sm:$0xf]
  %v1360 = vld [vmem:[%s1356 + $0xc] sm:$0xf]
  %v1361 = vld [vmem:[%s1356 + $0x10] sm:$0xf]
  %v1362 = vld [vmem:[%s1356 + $0x14] sm:$0xf]
  %v1363 = vld [vmem:[%s1356 + $0x18] sm:$0xf]
  %v1364 = vld [vmem:[%s1356 + $0x1c] sm:$0xf]
  %1366 = vrot.lane.b32.xlu0 %v1354, 64
  %v1367 = vpop.permute.xlu0 %1366
  %v1369 = vsel %vm189, %v1341, 0
  %v1372 = vsel %vm189, %v1367, 0
  %1374 = vmatprep.subr.bf16.mxu0 0
  %1375 = vmatpush1.bf16.xpose.msra.mxu0 %v1372
  %1376 = vmatprep.subr.bf16.mxu0 0
  %1377 = vmatpush1.bf16.xpose.msra.mxu0 0
  %1378 = vmatprep.subr.bf16.mxu0 0
  %1379 = vmatpush1.bf16.xpose.msra.mxu0 0
  %1380 = vmatprep.subr.bf16.mxu0 0
  %1381 = vmatpush1.bf16.xpose.msra.mxu0 0
  %1382 = vmatprep.subr.bf16.mxu0 0
  %1383 = vmatpush1.bf16.xpose.msra.mxu0 0
  %1384 = vmatprep.subr.bf16.mxu0 0
  %1385 = vmatpush1.bf16.xpose.msra.mxu0 0
  %1386 = vmatprep.subr.bf16.mxu0 0
  %1387 = vmatpush1.bf16.xpose.msra.mxu0 0
  %1388 = vmatprep.subr.bf16.mxu0 0
  %1389 = vmatpush1.bf16.xpose.msra.mxu0 0
  %1390 = vmatprep.subr.bf16.mxu0 0
  %1391 = vmatpush1.bf16.xpose.msra.mxu0 0
  %1392 = vmatprep.subr.bf16.mxu0 0
  %1393 = vmatpush1.bf16.xpose.msra.mxu0 0
  %1394 = vmatprep.subr.bf16.mxu0 0
  %1395 = vmatpush1.bf16.xpose.msra.mxu0 0
  %1396 = vmatprep.subr.bf16.mxu0 0
  %1397 = vmatpush1.bf16.xpose.msra.mxu0 0
  %1398 = vmatprep.subr.bf16.mxu0 0
  %1399 = vmatpush1.bf16.xpose.msra.mxu0 0
  %1400 = vmatprep.subr.bf16.mxu0 0
  %1401 = vmatpush1.bf16.xpose.msra.mxu0 0
  %1402 = vmatprep.subr.bf16.mxu0 0
  %1403 = vmatpush1.bf16.xpose.msra.mxu0 0
  %1404 = vmatprep.subr.bf16.mxu0 0
  %1405 = vmatpush1.bf16.xpose.msra.mxu0 0
  %1406 = vmatprep.mubr.bf16.mxu0 0
  %1407 = vmatmul.mubr.bf16.gmra.mrb[0].mxu0 %v1369
  %v1408 = vpop.f32.mrb[0].mxu0
  %v1409 = vadd.f32 0.0, %v1408
  %v1410 = vpop.f32.mrb[0].mxu0
  %v1411 = vpop.f32.mrb[0].mxu0
  %v1412 = vadd.f32 0.0, %v1411
  %v1413 = vpop.f32.mrb[0].mxu0
  %1414 = vdwg.mxu0
  %v1415 = vmul.f32 %v1409, %v237
  %v1416 = vmul.f32 %v1412, %v238
  %v1417 = vand.u32 2147483647, %v1415
  %v1418 = vand.u32 2147483647, %v1416
  %v1419 = vsel %vm243, %v1417, 0.0
  %1420 = vadd.xlane.f32.xlu0 %v1419
  %v1421 = vpop.xlane.xlu0 %1420
  %v1422 = vsel %vm243, %v1418, 0.0
  %1423 = vadd.xlane.f32.xlu0 %v1422
  %v1424 = vpop.xlane.xlu0 %1423
  %v1425 = vmax.f32 %v1421, 1.0
  %v1426 = vmax.f32 %v1424, 1.0
  %v1427 = vmin.f32 %v1425, 50000.0
  %v1428 = vmin.f32 %v1426, 50000.0
  %v1429 = vrcp.pop %v1427
  %v1430 = vmul.f32 %v1415, %v1429
  %v1431 = vrcp.pop %v1428
  %v1432 = vmul.f32 %v1416, %v1431
  %v1433 = vpack.c.bf16 %v1432, %v1430
  %v1435 = vsel %vm243, %v1433, 0
  %1437 = vmatprep.subr.bf16.mxu0 0
  %1438 = vmatpush1.bf16.msra.mxu0 %v1355
  %1439 = vmatprep.subr.bf16.mxu0 0
  %1440 = vmatpush1.bf16.msra.mxu0 0
  %1441 = vmatprep.subr.bf16.mxu0 0
  %1442 = vmatpush1.bf16.msra.mxu0 0
  %1443 = vmatprep.subr.bf16.mxu0 0
  %1444 = vmatpush1.bf16.msra.mxu0 0
  %1445 = vmatprep.subr.bf16.mxu0 0
  %1446 = vmatpush1.bf16.msra.mxu0 0
  %1447 = vmatprep.subr.bf16.mxu0 0
  %1448 = vmatpush1.bf16.msra.mxu0 0
  %1449 = vmatprep.subr.bf16.mxu0 0
  %1450 = vmatpush1.bf16.msra.mxu0 0
  %1451 = vmatprep.subr.bf16.mxu0 0
  %1452 = vmatpush1.bf16.msra.mxu0 0
  %1453 = vmatprep.subr.bf16.mxu0 0
  %1454 = vmatpush1.bf16.msra.mxu0 0
  %1455 = vmatprep.subr.bf16.mxu0 0
  %1456 = vmatpush1.bf16.msra.mxu0 0
  %1457 = vmatprep.subr.bf16.mxu0 0
  %1458 = vmatpush1.bf16.msra.mxu0 0
  %1459 = vmatprep.subr.bf16.mxu0 0
  %1460 = vmatpush1.bf16.msra.mxu0 0
  %1461 = vmatprep.subr.bf16.mxu0 0
  %1462 = vmatpush1.bf16.msra.mxu0 0
  %1463 = vmatprep.subr.bf16.mxu0 0
  %1464 = vmatpush1.bf16.msra.mxu0 0
  %1465 = vmatprep.subr.bf16.mxu0 0
  %1466 = vmatpush1.bf16.msra.mxu0 0
  %1467 = vmatprep.subr.bf16.mxu0 0
  %1468 = vmatpush1.bf16.msra.mxu0 0
  %1469 = vmatprep.mubr.bf16.mxu0 0
  %1470 = vmatmul.mubr.bf16.gmra.mrb[0].mxu0 %v1435
  %v1471 = vpop.f32.mrb[0].mxu0
  %v1472 = vadd.f32 0.0, %v1471
  %v1473 = vpop.f32.mrb[0].mxu0
  %v1474 = vpop.f32.mrb[0].mxu0
  %v1475 = vadd.f32 0.0, %v1474
  %v1476 = vpop.f32.mrb[0].mxu0
  %1477 = vdwg.mxu0
  %v1478 = vmul.f32 %v1472, %v1472
  %v1479 = vmul.f32 %v1475, %v1475
  %v1480 = vsel %vm243, %v1478, 0.0
  %1481 = vadd.xlane.f32.xlu0 %v1480
  %v1482 = vpop.xlane.xlu0 %1481
  %v1483 = vsel %vm243, %v1479, 0.0
  %1484 = vadd.xlane.f32.xlu0 %v1483
  %v1485 = vpop.xlane.xlu0 %1484
  %v1486 = vmul.f32 %v1482, %v311
  %v1487 = vmul.f32 %v1485, %v311
  %v1488 = vadd.f32 %v1486, 1e-05
  %v1489 = vadd.f32 %v1487, 1e-05
  %v1490 = vrsqrt.pop %v1488
  %v1491 = vrsqrt.pop %v1489
  %v1492 = vmul.f32 %v1472, %v1490
  %v1493 = vmul.f32 %v1475, %v1491
  %v1494 = vxor.u32 %v1321, 2147483648
  %v1495 = vxor.u32 %v1325, 2147483648
  %v1496 = vmul.f32 %v1494, 1.442695
  %v1497 = vpow.pop %v1496
  %v1498 = vmul.f32 %v1495, 1.442695
  %v1499 = vpow.pop %v1498
  %v1500 = vadd.f32 %v1497, 1.0
  %v1501 = vadd.f32 %v1499, 1.0
  %v1502 = vrcp.pop %v1500
  %v1503 = vmul.f32 1.0, %v1502
  %v1504 = vrcp.pop %v1501
  %v1505 = vmul.f32 1.0, %v1504
  %v1506 = vmul.f32 %v1321, %v1503
  %v1507 = vmul.f32 %v1325, %v1505
  %1510 = vrot.lane.b32.xlu0 %v1492, 64
  %v1511 = vpop.permute.xlu0 %1510
  %1512 = vrot.lane.b32.xlu0 %v1493, 64
  %v1513 = vpop.permute.xlu0 %1512
  %v1516 = vmul.f32 %v1506, %v1511
  %v1517 = vmul.f32 %v1507, %v1513
  %v1518 = vpack.c.bf16 %v1517, %v1516
  %1520 = vrot.lane.b32.xlu0 %v1341, 120
  %v1521 = vpop.permute.xlu0 %1520
  %1522 = vrot.lane.b32.xlu0 %v1354, 56
  %v1523 = vpop.permute.xlu0 %1522
  %v1525 = vsel %vm189, %v1521, 0
  %v1528 = vsel %vm189, %v1523, 0
  %1530 = vmatprep.subr.bf16.mxu0 0
  %1531 = vmatpush1.bf16.xpose.msra.mxu0 %v1528
  %1532 = vmatprep.subr.bf16.mxu0 0
  %1533 = vmatpush1.bf16.xpose.msra.mxu0 0
  %1534 = vmatprep.subr.bf16.mxu0 0
  %1535 = vmatpush1.bf16.xpose.msra.mxu0 0
  %1536 = vmatprep.subr.bf16.mxu0 0
  %1537 = vmatpush1.bf16.xpose.msra.mxu0 0
  %1538 = vmatprep.subr.bf16.mxu0 0
  %1539 = vmatpush1.bf16.xpose.msra.mxu0 0
  %1540 = vmatprep.subr.bf16.mxu0 0
  %1541 = vmatpush1.bf16.xpose.msra.mxu0 0
  %1542 = vmatprep.subr.bf16.mxu0 0
  %1543 = vmatpush1.bf16.xpose.msra.mxu0 0
  %1544 = vmatprep.subr.bf16.mxu0 0
  %1545 = vmatpush1.bf16.xpose.msra.mxu0 0
  %1546 = vmatprep.subr.bf16.mxu0 0
  %1547 = vmatpush1.bf16.xpose.msra.mxu0 0
  %1548 = vmatprep.subr.bf16.mxu0 0
  %1549 = vmatpush1.bf16.xpose.msra.mxu0 0
  %1550 = vmatprep.subr.bf16.mxu0 0
  %1551 = vmatpush1.bf16.xpose.msra.mxu0 0
  %1552 = vmatprep.subr.bf16.mxu0 0
  %1553 = vmatpush1.bf16.xpose.msra.mxu0 0
  %1554 = vmatprep.subr.bf16.mxu0 0
  %1555 = vmatpush1.bf16.xpose.msra.mxu0 0
  %1556 = vmatprep.subr.bf16.mxu0 0
  %1557 = vmatpush1.bf16.xpose.msra.mxu0 0
  %1558 = vmatprep.subr.bf16.mxu0 0
  %1559 = vmatpush1.bf16.xpose.msra.mxu0 0
  %1560 = vmatprep.subr.bf16.mxu0 0
  %1561 = vmatpush1.bf16.xpose.msra.mxu0 0
  %1562 = vmatprep.mubr.bf16.mxu0 0
  %1563 = vmatmul.mubr.bf16.gmra.mrb[0].mxu0 %v1525
  %v1564 = vpop.f32.mrb[0].mxu0
  %v1565 = vadd.f32 0.0, %v1564
  %v1566 = vpop.f32.mrb[0].mxu0
  %v1567 = vpop.f32.mrb[0].mxu0
  %v1568 = vadd.f32 0.0, %v1567
  %v1569 = vpop.f32.mrb[0].mxu0
  %1570 = vdwg.mxu0
  %v1571 = vmul.f32 %v1565, %v398
  %v1572 = vmul.f32 %v1568, %v399
  %v1573 = vand.u32 2147483647, %v1571
  %v1574 = vand.u32 2147483647, %v1572
  %v1575 = vsel %vm243, %v1573, 0.0
  %1576 = vadd.xlane.f32.xlu0 %v1575
  %v1577 = vpop.xlane.xlu0 %1576
  %v1578 = vsel %vm243, %v1574, 0.0
  %1579 = vadd.xlane.f32.xlu0 %v1578
  %v1580 = vpop.xlane.xlu0 %1579
  %v1581 = vmax.f32 %v1577, 1.0
  %v1582 = vmax.f32 %v1580, 1.0
  %v1583 = vmin.f32 %v1581, 50000.0
  %v1584 = vmin.f32 %v1582, 50000.0
  %v1585 = vrcp.pop %v1583
  %v1586 = vmul.f32 %v1571, %v1585
  %v1587 = vrcp.pop %v1584
  %v1588 = vmul.f32 %v1572, %v1587
  %v1589 = vpack.c.bf16 %v1588, %v1586
  %1591 = vrot.lane.b32.xlu0 %v1355, 112
  %v1592 = vpop.permute.xlu0 %1591
  %v1595 = vsel %vm243, %v1589, 0
  %1597 = vmatprep.subr.bf16.mxu0 0
  %1598 = vmatpush1.bf16.msra.mxu0 %v1592
  %1599 = vmatprep.subr.bf16.mxu0 0
  %1600 = vmatpush1.bf16.msra.mxu0 0
  %1601 = vmatprep.subr.bf16.mxu0 0
  %1602 = vmatpush1.bf16.msra.mxu0 0
  %1603 = vmatprep.subr.bf16.mxu0 0
  %1604 = vmatpush1.bf16.msra.mxu0 0
  %1605 = vmatprep.subr.bf16.mxu0 0
  %1606 = vmatpush1.bf16.msra.mxu0 0
  %1607 = vmatprep.subr.bf16.mxu0 0
  %1608 = vmatpush1.bf16.msra.mxu0 0
  %1609 = vmatprep.subr.bf16.mxu0 0
  %1610 = vmatpush1.bf16.msra.mxu0 0
  %1611 = vmatprep.subr.bf16.mxu0 0
  %1612 = vmatpush1.bf16.msra.mxu0 0
  %1613 = vmatprep.subr.bf16.mxu0 0
  %1614 = vmatpush1.bf16.msra.mxu0 0
  %1615 = vmatprep.subr.bf16.mxu0 0
  %1616 = vmatpush1.bf16.msra.mxu0 0
  %1617 = vmatprep.subr.bf16.mxu0 0
  %1618 = vmatpush1.bf16.msra.mxu0 0
  %1619 = vmatprep.subr.bf16.mxu0 0
  %1620 = vmatpush1.bf16.msra.mxu0 0
  %1621 = vmatprep.subr.bf16.mxu0 0
  %1622 = vmatpush1.bf16.msra.mxu0 0
  %1623 = vmatprep.subr.bf16.mxu0 0
  %1624 = vmatpush1.bf16.msra.mxu0 0
  %1625 = vmatprep.subr.bf16.mxu0 0
  %1626 = vmatpush1.bf16.msra.mxu0 0
  %1627 = vmatprep.subr.bf16.mxu0 0
  %1628 = vmatpush1.bf16.msra.mxu0 0
  %1629 = vmatprep.mubr.bf16.mxu0 0
  %1630 = vmatmul.mubr.bf16.gmra.mrb[0].mxu0 %v1595
  %v1631 = vpop.f32.mrb[0].mxu0
  %v1632 = vadd.f32 0.0, %v1631
  %v1633 = vpop.f32.mrb[0].mxu0
  %v1634 = vpop.f32.mrb[0].mxu0
  %v1635 = vadd.f32 0.0, %v1634
  %v1636 = vpop.f32.mrb[0].mxu0
  %1637 = vdwg.mxu0
  %v1638 = vmul.f32 %v1632, %v1632
  %v1639 = vmul.f32 %v1635, %v1635
  %v1640 = vsel %vm243, %v1638, 0.0
  %1641 = vadd.xlane.f32.xlu0 %v1640
  %v1642 = vpop.xlane.xlu0 %1641
  %v1643 = vsel %vm243, %v1639, 0.0
  %1644 = vadd.xlane.f32.xlu0 %v1643
  %v1645 = vpop.xlane.xlu0 %1644
  %v1646 = vmul.f32 %v1642, %v311
  %v1647 = vmul.f32 %v1645, %v311
  %v1648 = vadd.f32 %v1646, 1e-05
  %v1649 = vadd.f32 %v1647, 1e-05
  %v1650 = vrsqrt.pop %v1648
  %v1651 = vrsqrt.pop %v1649
  %v1652 = vmul.f32 %v1632, %v1650
  %v1653 = vmul.f32 %v1635, %v1651
  %1656 = vrot.lane.b32.xlu0 %v1652, 80
  %v1657 = vpop.permute.xlu0 %1656
  %1658 = vrot.lane.b32.xlu0 %v1653, 80
  %v1659 = vpop.permute.xlu0 %1658
  %v1662 = vmul.f32 %v1506, %v1657
  %v1663 = vmul.f32 %v1507, %v1659
  %v1664 = vpack.c.bf16 %v1663, %v1662
  %1666 = vrot.lane.b32.xlu0 %v1664, 48
  %v1667 = vpop.permute.xlu0 %1666
  %v1670 = vunpack.c.l.b16 %v1359
  %v1671 = vunpack.c.l.b16 %v1360
  %v1672 = vpack.c.b16 %v1671, %v1670
  %v1675 = vsel %vm243, %v1667, 0
  %1677 = vmatprep.subr.bf16.mxu0 0
  %1678 = vmatpush1.bf16.msra.mxu0 %v1672
  %1679 = vmatprep.subr.bf16.mxu0 0
  %1680 = vmatpush1.bf16.msra.mxu0 0
  %1681 = vmatprep.subr.bf16.mxu0 0
  %1682 = vmatpush1.bf16.msra.mxu0 0
  %1683 = vmatprep.subr.bf16.mxu0 0
  %1684 = vmatpush1.bf16.msra.mxu0 0
  %1685 = vmatprep.subr.bf16.mxu0 0
  %1686 = vmatpush1.bf16.msra.mxu0 0
  %1687 = vmatprep.subr.bf16.mxu0 0
  %1688 = vmatpush1.bf16.msra.mxu0 0
  %1689 = vmatprep.subr.bf16.mxu0 0
  %1690 = vmatpush1.bf16.msra.mxu0 0
  %1691 = vmatprep.subr.bf16.mxu0 0
  %1692 = vmatpush1.bf16.msra.mxu0 0
  %1693 = vmatprep.subr.bf16.mxu0 0
  %1694 = vmatpush1.bf16.msra.mxu0 0
  %1695 = vmatprep.subr.bf16.mxu0 0
  %1696 = vmatpush1.bf16.msra.mxu0 0
  %1697 = vmatprep.subr.bf16.mxu0 0
  %1698 = vmatpush1.bf16.msra.mxu0 0
  %1699 = vmatprep.subr.bf16.mxu0 0
  %1700 = vmatpush1.bf16.msra.mxu0 0
  %1701 = vmatprep.subr.bf16.mxu0 0
  %1702 = vmatpush1.bf16.msra.mxu0 0
  %1703 = vmatprep.subr.bf16.mxu0 0
  %1704 = vmatpush1.bf16.msra.mxu0 0
  %1705 = vmatprep.subr.bf16.mxu0 0
  %1706 = vmatpush1.bf16.msra.mxu0 0
  %1707 = vmatprep.subr.bf16.mxu0 0
  %1708 = vmatpush1.bf16.msra.mxu0 0
  %1709 = vmatprep.mubr.bf16.mxu0 0
  %1710 = vmatmul.mubr.bf16.gmra.mrb[0].mxu0 %v1675
  %v1711 = vpop.f32.mrb[0].mxu0
  %v1712 = vadd.f32 0.0, %v1711
  %v1713 = vpop.f32.mrb[0].mxu0
  %v1714 = vpop.f32.mrb[0].mxu0
  %v1715 = vadd.f32 0.0, %v1714
  %v1716 = vpop.f32.mrb[0].mxu0
  %1717 = vdwg.mxu0
  %1719 = vrot.lane.b32.xlu0 %v1518, 64
  %v1720 = vpop.permute.xlu0 %1719
  %v1723 = vunpack.c.l.b16 %v1357
  %v1724 = vunpack.c.l.b16 %v1358
  %v1725 = vpack.c.b16 %v1724, %v1723
  %v1728 = vsel %vm243, %v1720, 0
  %1730 = vmatprep.subr.bf16.mxu0 0
  %1731 = vmatpush1.bf16.msra.mxu0 %v1725
  %1732 = vmatprep.subr.bf16.mxu0 0
  %1733 = vmatpush1.bf16.msra.mxu0 0
  %1734 = vmatprep.subr.bf16.mxu0 0
  %1735 = vmatpush1.bf16.msra.mxu0 0
  %1736 = vmatprep.subr.bf16.mxu0 0
  %1737 = vmatpush1.bf16.msra.mxu0 0
  %1738 = vmatprep.subr.bf16.mxu0 0
  %1739 = vmatpush1.bf16.msra.mxu0 0
  %1740 = vmatprep.subr.bf16.mxu0 0
  %1741 = vmatpush1.bf16.msra.mxu0 0
  %1742 = vmatprep.subr.bf16.mxu0 0
  %1743 = vmatpush1.bf16.msra.mxu0 0
  %1744 = vmatprep.subr.bf16.mxu0 0
  %1745 = vmatpush1.bf16.msra.mxu0 0
  %1746 = vmatprep.subr.bf16.mxu0 0
  %1747 = vmatpush1.bf16.msra.mxu0 0
  %1748 = vmatprep.subr.bf16.mxu0 0
  %1749 = vmatpush1.bf16.msra.mxu0 0
  %1750 = vmatprep.subr.bf16.mxu0 0
  %1751 = vmatpush1.bf16.msra.mxu0 0
  %1752 = vmatprep.subr.bf16.mxu0 0
  %1753 = vmatpush1.bf16.msra.mxu0 0
  %1754 = vmatprep.subr.bf16.mxu0 0
  %1755 = vmatpush1.bf16.msra.mxu0 0
  %1756 = vmatprep.subr.bf16.mxu0 0
  %1757 = vmatpush1.bf16.msra.mxu0 0
  %1758 = vmatprep.subr.bf16.mxu0 0
  %1759 = vmatpush1.bf16.msra.mxu0 0
  %1760 = vmatprep.subr.bf16.mxu0 0
  %1761 = vmatpush1.bf16.msra.mxu0 0
  %1762 = vmatprep.mubr.bf16.mxu0 0
  %1763 = vmatmul.mubr.bf16.gmra.mrb[0].mxu0 %v1728
  %v1764 = vpop.f32.mrb[0].mxu0
  %v1765 = vadd.f32 %v1712, %v1764
  %v1766 = vpop.f32.mrb[0].mxu0
  %v1767 = vpop.f32.mrb[0].mxu0
  %v1768 = vadd.f32 %v1715, %v1767
  %v1769 = vpop.f32.mrb[0].mxu0
  %1770 = vdwg.mxu0
  %1771 = vrot.lane.b32.xlu0 %v1341, 112
  %v1772 = vpop.permute.xlu0 %1771
  %1773 = vrot.lane.b32.xlu0 %v1354, 48
  %v1774 = vpop.permute.xlu0 %1773
  %v1776 = vsel %vm189, %v1772, 0
  %v1779 = vsel %vm189, %v1774, 0
  %1781 = vmatprep.subr.bf16.mxu0 0
  %1782 = vmatpush1.bf16.xpose.msra.mxu0 %v1779
  %1783 = vmatprep.subr.bf16.mxu0 0
  %1784 = vmatpush1.bf16.xpose.msra.mxu0 0
  %1785 = vmatprep.subr.bf16.mxu0 0
  %1786 = vmatpush1.bf16.xpose.msra.mxu0 0
  %1787 = vmatprep.subr.bf16.mxu0 0
  %1788 = vmatpush1.bf16.xpose.msra.mxu0 0
  %1789 = vmatprep.subr.bf16.mxu0 0
  %1790 = vmatpush1.bf16.xpose.msra.mxu0 0
  %1791 = vmatprep.subr.bf16.mxu0 0
  %1792 = vmatpush1.bf16.xpose.msra.mxu0 0
  %1793 = vmatprep.subr.bf16.mxu0 0
  %1794 = vmatpush1.bf16.xpose.msra.mxu0 0
  %1795 = vmatprep.subr.bf16.mxu0 0
  %1796 = vmatpush1.bf16.xpose.msra.mxu0 0
  %1797 = vmatprep.subr.bf16.mxu0 0
  %1798 = vmatpush1.bf16.xpose.msra.mxu0 0
  %1799 = vmatprep.subr.bf16.mxu0 0
  %1800 = vmatpush1.bf16.xpose.msra.mxu0 0
  %1801 = vmatprep.subr.bf16.mxu0 0
  %1802 = vmatpush1.bf16.xpose.msra.mxu0 0
  %1803 = vmatprep.subr.bf16.mxu0 0
  %1804 = vmatpush1.bf16.xpose.msra.mxu0 0
  %1805 = vmatprep.subr.bf16.mxu0 0
  %1806 = vmatpush1.bf16.xpose.msra.mxu0 0
  %1807 = vmatprep.subr.bf16.mxu0 0
  %1808 = vmatpush1.bf16.xpose.msra.mxu0 0
  %1809 = vmatprep.subr.bf16.mxu0 0
  %1810 = vmatpush1.bf16.xpose.msra.mxu0 0
  %1811 = vmatprep.subr.bf16.mxu0 0
  %1812 = vmatpush1.bf16.xpose.msra.mxu0 0
  %1813 = vmatprep.mubr.bf16.mxu0 0
  %1814 = vmatmul.mubr.bf16.gmra.mrb[0].mxu0 %v1776
  %v1815 = vpop.f32.mrb[0].mxu0
  %v1816 = vadd.f32 0.0, %v1815
  %v1817 = vpop.f32.mrb[0].mxu0
  %v1818 = vpop.f32.mrb[0].mxu0
  %v1819 = vadd.f32 0.0, %v1818
  %v1820 = vpop.f32.mrb[0].mxu0
  %1821 = vdwg.mxu0
  %v1822 = vmul.f32 %v1816, %v652
  %v1823 = vmul.f32 %v1819, %v653
  %v1824 = vand.u32 2147483647, %v1822
  %v1825 = vand.u32 2147483647, %v1823
  %v1826 = vsel %vm243, %v1824, 0.0
  %1827 = vadd.xlane.f32.xlu0 %v1826
  %v1828 = vpop.xlane.xlu0 %1827
  %v1829 = vsel %vm243, %v1825, 0.0
  %1830 = vadd.xlane.f32.xlu0 %v1829
  %v1831 = vpop.xlane.xlu0 %1830
  %v1832 = vmax.f32 %v1828, 1.0
  %v1833 = vmax.f32 %v1831, 1.0
  %v1834 = vmin.f32 %v1832, 50000.0
  %v1835 = vmin.f32 %v1833, 50000.0
  %v1836 = vrcp.pop %v1834
  %v1837 = vmul.f32 %v1822, %v1836
  %v1838 = vrcp.pop %v1835
  %v1839 = vmul.f32 %v1823, %v1838
  %v1840 = vpack.c.bf16 %v1839, %v1837
  %1841 = vrot.lane.b32.xlu0 %v1355, 96
  %v1842 = vpop.permute.xlu0 %1841
  %v1845 = vsel %vm243, %v1840, 0
  %1847 = vmatprep.subr.bf16.mxu0 0
  %1848 = vmatpush1.bf16.msra.mxu0 %v1842
  %1849 = vmatprep.subr.bf16.mxu0 0
  %1850 = vmatpush1.bf16.msra.mxu0 0
  %1851 = vmatprep.subr.bf16.mxu0 0
  %1852 = vmatpush1.bf16.msra.mxu0 0
  %1853 = vmatprep.subr.bf16.mxu0 0
  %1854 = vmatpush1.bf16.msra.mxu0 0
  %1855 = vmatprep.subr.bf16.mxu0 0
  %1856 = vmatpush1.bf16.msra.mxu0 0
  %1857 = vmatprep.subr.bf16.mxu0 0
  %1858 = vmatpush1.bf16.msra.mxu0 0
  %1859 = vmatprep.subr.bf16.mxu0 0
  %1860 = vmatpush1.bf16.msra.mxu0 0
  %1861 = vmatprep.subr.bf16.mxu0 0
  %1862 = vmatpush1.bf16.msra.mxu0 0
  %1863 = vmatprep.subr.bf16.mxu0 0
  %1864 = vmatpush1.bf16.msra.mxu0 0
  %1865 = vmatprep.subr.bf16.mxu0 0
  %1866 = vmatpush1.bf16.msra.mxu0 0
  %1867 = vmatprep.subr.bf16.mxu0 0
  %1868 = vmatpush1.bf16.msra.mxu0 0
  %1869 = vmatprep.subr.bf16.mxu0 0
  %1870 = vmatpush1.bf16.msra.mxu0 0
  %1871 = vmatprep.subr.bf16.mxu0 0
  %1872 = vmatpush1.bf16.msra.mxu0 0
  %1873 = vmatprep.subr.bf16.mxu0 0
  %1874 = vmatpush1.bf16.msra.mxu0 0
  %1875 = vmatprep.subr.bf16.mxu0 0
  %1876 = vmatpush1.bf16.msra.mxu0 0
  %1877 = vmatprep.subr.bf16.mxu0 0
  %1878 = vmatpush1.bf16.msra.mxu0 0
  %1879 = vmatprep.mubr.bf16.mxu0 0
  %1880 = vmatmul.mubr.bf16.gmra.mrb[0].mxu0 %v1845
  %v1881 = vpop.f32.mrb[0].mxu0
  %v1882 = vadd.f32 0.0, %v1881
  %v1883 = vpop.f32.mrb[0].mxu0
  %v1884 = vpop.f32.mrb[0].mxu0
  %v1885 = vadd.f32 0.0, %v1884
  %v1886 = vpop.f32.mrb[0].mxu0
  %1887 = vdwg.mxu0
  %v1888 = vmul.f32 %v1882, %v1882
  %v1889 = vmul.f32 %v1885, %v1885
  %v1890 = vsel %vm243, %v1888, 0.0
  %1891 = vadd.xlane.f32.xlu0 %v1890
  %v1892 = vpop.xlane.xlu0 %1891
  %v1893 = vsel %vm243, %v1889, 0.0
  %1894 = vadd.xlane.f32.xlu0 %v1893
  %v1895 = vpop.xlane.xlu0 %1894
  %v1896 = vmul.f32 %v1892, %v311
  %v1897 = vmul.f32 %v1895, %v311
  %v1898 = vadd.f32 %v1896, 1e-05
  %v1899 = vadd.f32 %v1897, 1e-05
  %v1900 = vrsqrt.pop %v1898
  %v1901 = vrsqrt.pop %v1899
  %v1902 = vmul.f32 %v1882, %v1900
  %v1903 = vmul.f32 %v1885, %v1901
  %1906 = vrot.lane.b32.xlu0 %v1902, 96
  %v1907 = vpop.permute.xlu0 %1906
  %1908 = vrot.lane.b32.xlu0 %v1903, 96
  %v1909 = vpop.permute.xlu0 %1908
  %v1912 = vmul.f32 %v1506, %v1907
  %v1913 = vmul.f32 %v1507, %v1909
  %v1914 = vpack.c.bf16 %v1913, %v1912
  %1916 = vrot.lane.b32.xlu0 %v1914, 32
  %v1917 = vpop.permute.xlu0 %1916
  %v1920 = vunpack.c.l.b16 %v1361
  %v1921 = vunpack.c.l.b16 %v1362
  %v1922 = vpack.c.b16 %v1921, %v1920
  %v1925 = vsel %vm243, %v1917, 0
  %1927 = vmatprep.subr.bf16.mxu0 0
  %1928 = vmatpush1.bf16.msra.mxu0 %v1922
  %1929 = vmatprep.subr.bf16.mxu0 0
  %1930 = vmatpush1.bf16.msra.mxu0 0
  %1931 = vmatprep.subr.bf16.mxu0 0
  %1932 = vmatpush1.bf16.msra.mxu0 0
  %1933 = vmatprep.subr.bf16.mxu0 0
  %1934 = vmatpush1.bf16.msra.mxu0 0
  %1935 = vmatprep.subr.bf16.mxu0 0
  %1936 = vmatpush1.bf16.msra.mxu0 0
  %1937 = vmatprep.subr.bf16.mxu0 0
  %1938 = vmatpush1.bf16.msra.mxu0 0
  %1939 = vmatprep.subr.bf16.mxu0 0
  %1940 = vmatpush1.bf16.msra.mxu0 0
  %1941 = vmatprep.subr.bf16.mxu0 0
  %1942 = vmatpush1.bf16.msra.mxu0 0
  %1943 = vmatprep.subr.bf16.mxu0 0
  %1944 = vmatpush1.bf16.msra.mxu0 0
  %1945 = vmatprep.subr.bf16.mxu0 0
  %1946 = vmatpush1.bf16.msra.mxu0 0
  %1947 = vmatprep.subr.bf16.mxu0 0
  %1948 = vmatpush1.bf16.msra.mxu0 0
  %1949 = vmatprep.subr.bf16.mxu0 0
  %1950 = vmatpush1.bf16.msra.mxu0 0
  %1951 = vmatprep.subr.bf16.mxu0 0
  %1952 = vmatpush1.bf16.msra.mxu0 0
  %1953 = vmatprep.subr.bf16.mxu0 0
  %1954 = vmatpush1.bf16.msra.mxu0 0
  %1955 = vmatprep.subr.bf16.mxu0 0
  %1956 = vmatpush1.bf16.msra.mxu0 0
  %1957 = vmatprep.subr.bf16.mxu0 0
  %1958 = vmatpush1.bf16.msra.mxu0 0
  %1959 = vmatprep.mubr.bf16.mxu0 0
  %1960 = vmatmul.mubr.bf16.gmra.mrb[0].mxu0 %v1925
  %v1961 = vpop.f32.mrb[0].mxu0
  %v1962 = vadd.f32 0.0, %v1961
  %v1963 = vpop.f32.mrb[0].mxu0
  %v1964 = vpop.f32.mrb[0].mxu0
  %v1965 = vadd.f32 0.0, %v1964
  %v1966 = vpop.f32.mrb[0].mxu0
  %1967 = vdwg.mxu0
  %v1968 = vadd.f32 %v1765, %v1962
  %v1969 = vadd.f32 %v1768, %v1965
  %1970 = vrot.lane.b32.xlu0 %v1341, 104
  %v1971 = vpop.permute.xlu0 %1970
  %1972 = vrot.lane.b32.xlu0 %v1354, 40
  %v1973 = vpop.permute.xlu0 %1972
  %v1975 = vsel %vm189, %v1971, 0
  %v1978 = vsel %vm189, %v1973, 0
  %1980 = vmatprep.subr.bf16.mxu0 0
  %1981 = vmatpush1.bf16.xpose.msra.mxu0 %v1978
  %1982 = vmatprep.subr.bf16.mxu0 0
  %1983 = vmatpush1.bf16.xpose.msra.mxu0 0
  %1984 = vmatprep.subr.bf16.mxu0 0
  %1985 = vmatpush1.bf16.xpose.msra.mxu0 0
  %1986 = vmatprep.subr.bf16.mxu0 0
  %1987 = vmatpush1.bf16.xpose.msra.mxu0 0
  %1988 = vmatprep.subr.bf16.mxu0 0
  %1989 = vmatpush1.bf16.xpose.msra.mxu0 0
  %1990 = vmatprep.subr.bf16.mxu0 0
  %1991 = vmatpush1.bf16.xpose.msra.mxu0 0
  %1992 = vmatprep.subr.bf16.mxu0 0
  %1993 = vmatpush1.bf16.xpose.msra.mxu0 0
  %1994 = vmatprep.subr.bf16.mxu0 0
  %1995 = vmatpush1.bf16.xpose.msra.mxu0 0
  %1996 = vmatprep.subr.bf16.mxu0 0
  %1997 = vmatpush1.bf16.xpose.msra.mxu0 0
  %1998 = vmatprep.subr.bf16.mxu0 0
  %1999 = vmatpush1.bf16.xpose.msra.mxu0 0
  %2000 = vmatprep.subr.bf16.mxu0 0
  %2001 = vmatpush1.bf16.xpose.msra.mxu0 0
  %2002 = vmatprep.subr.bf16.mxu0 0
  %2003 = vmatpush1.bf16.xpose.msra.mxu0 0
  %2004 = vmatprep.subr.bf16.mxu0 0
  %2005 = vmatpush1.bf16.xpose.msra.mxu0 0
  %2006 = vmatprep.subr.bf16.mxu0 0
  %2007 = vmatpush1.bf16.xpose.msra.mxu0 0
  %2008 = vmatprep.subr.bf16.mxu0 0
  %2009 = vmatpush1.bf16.xpose.msra.mxu0 0
  %2010 = vmatprep.subr.bf16.mxu0 0
  %2011 = vmatpush1.bf16.xpose.msra.mxu0 0
  %2012 = vmatprep.mubr.bf16.mxu0 0
  %2013 = vmatmul.mubr.bf16.gmra.mrb[0].mxu0 %v1975
  %v2014 = vpop.f32.mrb[0].mxu0
  %v2015 = vadd.f32 0.0, %v2014
  %v2016 = vpop.f32.mrb[0].mxu0
  %v2017 = vpop.f32.mrb[0].mxu0
  %v2018 = vadd.f32 0.0, %v2017
  %v2019 = vpop.f32.mrb[0].mxu0
  %2020 = vdwg.mxu0
  %v2021 = vmul.f32 %v2015, %v854
  %v2022 = vmul.f32 %v2018, %v855
  %v2023 = vand.u32 2147483647, %v2021
  %v2024 = vand.u32 2147483647, %v2022
  %v2025 = vsel %vm243, %v2023, 0.0
  %2026 = vadd.xlane.f32.xlu0 %v2025
  %v2027 = vpop.xlane.xlu0 %2026
  %v2028 = vsel %vm243, %v2024, 0.0
  %2029 = vadd.xlane.f32.xlu0 %v2028
  %v2030 = vpop.xlane.xlu0 %2029
  %v2031 = vmax.f32 %v2027, 1.0
  %v2032 = vmax.f32 %v2030, 1.0
  %v2033 = vmin.f32 %v2031, 50000.0
  %v2034 = vmin.f32 %v2032, 50000.0
  %v2035 = vrcp.pop %v2033
  %v2036 = vmul.f32 %v2021, %v2035
  %v2037 = vrcp.pop %v2034
  %v2038 = vmul.f32 %v2022, %v2037
  %v2039 = vpack.c.bf16 %v2038, %v2036
  %2040 = vrot.lane.b32.xlu0 %v1355, 80
  %v2041 = vpop.permute.xlu0 %2040
  %v2044 = vsel %vm243, %v2039, 0
  %2046 = vmatprep.subr.bf16.mxu0 0
  %2047 = vmatpush1.bf16.msra.mxu0 %v2041
  %2048 = vmatprep.subr.bf16.mxu0 0
  %2049 = vmatpush1.bf16.msra.mxu0 0
  %2050 = vmatprep.subr.bf16.mxu0 0
  %2051 = vmatpush1.bf16.msra.mxu0 0
  %2052 = vmatprep.subr.bf16.mxu0 0
  %2053 = vmatpush1.bf16.msra.mxu0 0
  %2054 = vmatprep.subr.bf16.mxu0 0
  %2055 = vmatpush1.bf16.msra.mxu0 0
  %2056 = vmatprep.subr.bf16.mxu0 0
  %2057 = vmatpush1.bf16.msra.mxu0 0
  %2058 = vmatprep.subr.bf16.mxu0 0
  %2059 = vmatpush1.bf16.msra.mxu0 0
  %2060 = vmatprep.subr.bf16.mxu0 0
  %2061 = vmatpush1.bf16.msra.mxu0 0
  %2062 = vmatprep.subr.bf16.mxu0 0
  %2063 = vmatpush1.bf16.msra.mxu0 0
  %2064 = vmatprep.subr.bf16.mxu0 0
  %2065 = vmatpush1.bf16.msra.mxu0 0
  %2066 = vmatprep.subr.bf16.mxu0 0
  %2067 = vmatpush1.bf16.msra.mxu0 0
  %2068 = vmatprep.subr.bf16.mxu0 0
  %2069 = vmatpush1.bf16.msra.mxu0 0
  %2070 = vmatprep.subr.bf16.mxu0 0
  %2071 = vmatpush1.bf16.msra.mxu0 0
  %2072 = vmatprep.subr.bf16.mxu0 0
  %2073 = vmatpush1.bf16.msra.mxu0 0
  %2074 = vmatprep.subr.bf16.mxu0 0
  %2075 = vmatpush1.bf16.msra.mxu0 0
  %2076 = vmatprep.subr.bf16.mxu0 0
  %2077 = vmatpush1.bf16.msra.mxu0 0
  %2078 = vmatprep.mubr.bf16.mxu0 0
  %2079 = vmatmul.mubr.bf16.gmra.mrb[0].mxu0 %v2044
  %v2080 = vpop.f32.mrb[0].mxu0
  %v2081 = vadd.f32 0.0, %v2080
  %v2082 = vpop.f32.mrb[0].mxu0
  %v2083 = vpop.f32.mrb[0].mxu0
  %v2084 = vadd.f32 0.0, %v2083
  %v2085 = vpop.f32.mrb[0].mxu0
  %2086 = vdwg.mxu0
  %v2087 = vmul.f32 %v2081, %v2081
  %v2088 = vmul.f32 %v2084, %v2084
  %v2089 = vsel %vm243, %v2087, 0.0
  %2090 = vadd.xlane.f32.xlu0 %v2089
  %v2091 = vpop.xlane.xlu0 %2090
  %v2092 = vsel %vm243, %v2088, 0.0
  %2093 = vadd.xlane.f32.xlu0 %v2092
  %v2094 = vpop.xlane.xlu0 %2093
  %v2095 = vmul.f32 %v2091, %v311
  %v2096 = vmul.f32 %v2094, %v311
  %v2097 = vadd.f32 %v2095, 1e-05
  %v2098 = vadd.f32 %v2096, 1e-05
  %v2099 = vrsqrt.pop %v2097
  %v2100 = vrsqrt.pop %v2098
  %v2101 = vmul.f32 %v2081, %v2099
  %v2102 = vmul.f32 %v2084, %v2100
  %2105 = vrot.lane.b32.xlu0 %v2101, 112
  %v2106 = vpop.permute.xlu0 %2105
  %2107 = vrot.lane.b32.xlu0 %v2102, 112
  %v2108 = vpop.permute.xlu0 %2107
  %v2111 = vmul.f32 %v1506, %v2106
  %v2112 = vmul.f32 %v1507, %v2108
  %v2113 = vpack.c.bf16 %v2112, %v2111
  %2115 = vrot.lane.b32.xlu0 %v2113, 16
  %v2116 = vpop.permute.xlu0 %2115
  %v2119 = vunpack.c.l.b16 %v1363
  %v2120 = vunpack.c.l.b16 %v1364
  %v2121 = vpack.c.b16 %v2120, %v2119
  %v2124 = vsel %vm243, %v2116, 0
  %2126 = vmatprep.subr.bf16.mxu0 0
  %2127 = vmatpush1.bf16.msra.mxu0 %v2121
  %2128 = vmatprep.subr.bf16.mxu0 0
  %2129 = vmatpush1.bf16.msra.mxu0 0
  %2130 = vmatprep.subr.bf16.mxu0 0
  %2131 = vmatpush1.bf16.msra.mxu0 0
  %2132 = vmatprep.subr.bf16.mxu0 0
  %2133 = vmatpush1.bf16.msra.mxu0 0
  %2134 = vmatprep.subr.bf16.mxu0 0
  %2135 = vmatpush1.bf16.msra.mxu0 0
  %2136 = vmatprep.subr.bf16.mxu0 0
  %2137 = vmatpush1.bf16.msra.mxu0 0
  %2138 = vmatprep.subr.bf16.mxu0 0
  %2139 = vmatpush1.bf16.msra.mxu0 0
  %2140 = vmatprep.subr.bf16.mxu0 0
  %2141 = vmatpush1.bf16.msra.mxu0 0
  %2142 = vmatprep.subr.bf16.mxu0 0
  %2143 = vmatpush1.bf16.msra.mxu0 0
  %2144 = vmatprep.subr.bf16.mxu0 0
  %2145 = vmatpush1.bf16.msra.mxu0 0
  %2146 = vmatprep.subr.bf16.mxu0 0
  %2147 = vmatpush1.bf16.msra.mxu0 0
  %2148 = vmatprep.subr.bf16.mxu0 0
  %2149 = vmatpush1.bf16.msra.mxu0 0
  %2150 = vmatprep.subr.bf16.mxu0 0
  %2151 = vmatpush1.bf16.msra.mxu0 0
  %2152 = vmatprep.subr.bf16.mxu0 0
  %2153 = vmatpush1.bf16.msra.mxu0 0
  %2154 = vmatprep.subr.bf16.mxu0 0
  %2155 = vmatpush1.bf16.msra.mxu0 0
  %2156 = vmatprep.subr.bf16.mxu0 0
  %2157 = vmatpush1.bf16.msra.mxu0 0
  %2158 = vmatprep.mubr.bf16.mxu0 0
  %2159 = vmatmul.mubr.bf16.gmra.mrb[0].mxu0 %v2124
  %v2160 = vpop.f32.mrb[0].mxu0
  %v2161 = vadd.f32 0.0, %v2160
  %v2162 = vpop.f32.mrb[0].mxu0
  %v2163 = vpop.f32.mrb[0].mxu0
  %v2164 = vadd.f32 0.0, %v2163
  %v2165 = vpop.f32.mrb[0].mxu0
  %2166 = vdwg.mxu0
  %v2167 = vadd.f32 %v1968, %v2161
  %v2168 = vadd.f32 %v1969, %v2164
  %v2169 = vadd.f32 %v1231, %v2167
  %v2170 = vadd.f32 %v1232, %v2168
  %v2171 = vmul.f32 %v2169, %v2169
  %v2172 = vmul.f32 %v2170, %v2170
  %v2173 = vsel %vm42, %v2171, 0.0
  %2174 = vadd.xlane.f32.xlu0 %v2173
  %v2175 = vpop.xlane.xlu0 %2174
  %v2176 = vsel %vm42, %v2172, 0.0
  %2177 = vadd.xlane.f32.xlu0 %v2176
  %v2178 = vpop.xlane.xlu0 %2177
  %v2179 = vmul.f32 %v2175, %v49
  %v2180 = vmul.f32 %v2178, %v49
  %v2181 = vadd.f32 %v2179, 1e-05
  %v2182 = vadd.f32 %v2180, 1e-05
  %v2183 = vrsqrt.pop %v2181
  %v2184 = vrsqrt.pop %v2182
  %v2185 = vmul.f32 %v2169, %v2183
  %v2186 = vmul.f32 %v2170, %v2184
  %v2187 = vlaneseq
  %v2188 = vshrl.u32 %v2187, 7
  %v2189 = vsub.s32 3, %v2188
  %v2190 = vrot.slane %v37, %v2189
  %v2191 = vmul.f32 %v2185, %v2190
  %v2192 = vmul.f32 %v2186, %v2190
  %v2193 = vpack.c.bf16 %v2192, %v2191
  %s2194 = scalar_lea.vmem %s6, 16
  %v2195 = vld [vmem:[%s2194] sm:$0xf]
  %v2196 = vld [vmem:[%s2194 + $0x4] sm:$0xf]
  %v2197 = vld [vmem:[%s2194 + $0x8] sm:$0xf]
  %v2198 = vld [vmem:[%s2194 + $0xc] sm:$0xf]
  %v2203 = vunpack.c.l.b16 %v2195
  %v2204 = vunpack.c.l.b16 %v2196
  %v2205 = vunpack.c.l.b16 %v2197
  %v2206 = vunpack.c.l.b16 %v2198
  %v2207 = vpack.c.b16 %v2204, %v2203
  %v2208 = vpack.c.b16 %v2206, %v2205
  %v2212 = vsel %vm42, %v2193, 0
  %2214 = vmatprep.subr.bf16.mxu0 0
  %2215 = vmatpush1.bf16.msra.mxu0 %v2207
  %2216 = vmatprep.subr.bf16.mxu0 0
  %2217 = vmatpush1.bf16.msra.mxu0 %v2208
  %2218 = vmatprep.subr.bf16.mxu0 0
  %2219 = vmatpush1.bf16.msra.mxu0 0
  %2220 = vmatprep.subr.bf16.mxu0 0
  %2221 = vmatpush1.bf16.msra.mxu0 0
  %2222 = vmatprep.subr.bf16.mxu0 0
  %2223 = vmatpush1.bf16.msra.mxu0 0
  %2224 = vmatprep.subr.bf16.mxu0 0
  %2225 = vmatpush1.bf16.msra.mxu0 0
  %2226 = vmatprep.subr.bf16.mxu0 0
  %2227 = vmatpush1.bf16.msra.mxu0 0
  %2228 = vmatprep.subr.bf16.mxu0 0
  %2229 = vmatpush1.bf16.msra.mxu0 0
  %2230 = vmatprep.subr.bf16.mxu0 0
  %2231 = vmatpush1.bf16.msra.mxu0 0
  %2232 = vmatprep.subr.bf16.mxu0 0
  %2233 = vmatpush1.bf16.msra.mxu0 0
  %2234 = vmatprep.subr.bf16.mxu0 0
  %2235 = vmatpush1.bf16.msra.mxu0 0
  %2236 = vmatprep.subr.bf16.mxu0 0
  %2237 = vmatpush1.bf16.msra.mxu0 0
  %2238 = vmatprep.subr.bf16.mxu0 0
  %2239 = vmatpush1.bf16.msra.mxu0 0
  %2240 = vmatprep.subr.bf16.mxu0 0
  %2241 = vmatpush1.bf16.msra.mxu0 0
  %2242 = vmatprep.subr.bf16.mxu0 0
  %2243 = vmatpush1.bf16.msra.mxu0 0
  %2244 = vmatprep.subr.bf16.mxu0 0
  %2245 = vmatpush1.bf16.msra.mxu0 0
  %2246 = vmatprep.mubr.bf16.mxu0 0
  %2247 = vmatmul.mubr.bf16.gmra.mrb[0].mxu0 %v2212
  %v2248 = vpop.f32.mrb[0].mxu0
  %v2249 = vadd.f32 0.0, %v2248
  %v2250 = vpop.f32.mrb[0].mxu0
  %v2251 = vpop.f32.mrb[0].mxu0
  %v2252 = vadd.f32 0.0, %v2251
  %v2253 = vpop.f32.mrb[0].mxu0
  %2254 = vdwg.mxu0
  %v2255 = vmul.f32 %v2249, 0.5
  %v2256 = vmul.f32 %v2252, 0.5
  %v2257 = vmul.f32 %v2249, 0.70710677
  %v2258 = vmul.f32 %v2252, 0.70710677
  %vm2259 = vcmp.ge.f32.partialorder %v2257, 0.0
  %vm2260 = vcmp.ge.f32.partialorder %v2258, 0.0
  %v2261 = vsel %vm2259, 1.0, -1.0
  %v2262 = vsel %vm2260, 1.0, -1.0
  %v2263 = vand.u32 2147483647, %v2257
  %v2264 = vand.u32 2147483647, %v2258
  %v2265 = vmul.f32 %v2263, 0.3275911
  %v2266 = vmul.f32 %v2264, 0.3275911
  %v2267 = vadd.f32 %v2265, 1.0
  %v2268 = vadd.f32 %v2266, 1.0
  %v2269 = vrcp.pop %v2267
  %v2270 = vmul.f32 1.0, %v2269
  %v2271 = vrcp.pop %v2268
  %v2272 = vmul.f32 1.0, %v2271
  %v2273 = vmul.f32 %v2270, 1.0614054
  %v2274 = vmul.f32 %v2272, 1.0614054
  %v2275 = vadd.f32 %v2273, -1.4531521
  %v2276 = vadd.f32 %v2274, -1.4531521
  %v2277 = vmul.f32 %v2275, %v2270
  %v2278 = vmul.f32 %v2276, %v2272
  %v2279 = vadd.f32 %v2277, 1.4214138
  %v2280 = vadd.f32 %v2278, 1.4214138
  %v2281 = vmul.f32 %v2279, %v2270
  %v2282 = vmul.f32 %v2280, %v2272
  %v2283 = vadd.f32 %v2281, -0.28449672
  %v2284 = vadd.f32 %v2282, -0.28449672
  %v2285 = vmul.f32 %v2283, %v2270
  %v2286 = vmul.f32 %v2284, %v2272
  %v2287 = vadd.f32 %v2285, 0.2548296
  %v2288 = vadd.f32 %v2286, 0.2548296
  %v2289 = vmul.f32 %v2287, %v2270
  %v2290 = vmul.f32 %v2288, %v2272
  %v2291 = vsub.f32 0.0, %v2263
  %v2292 = vsub.f32 0.0, %v2264
  %v2293 = vmul.f32 %v2291, %v2263
  %v2294 = vmul.f32 %v2292, %v2264
  %v2295 = vmul.f32 %v2293, 1.442695
  %v2296 = vpow.pop %v2295
  %v2297 = vmul.f32 %v2294, 1.442695
  %v2298 = vpow.pop %v2297
  %v2299 = vmul.f32 %v2289, %v2296
  %v2300 = vmul.f32 %v2290, %v2298
  %v2301 = vsub.f32 1.0, %v2299
  %v2302 = vsub.f32 1.0, %v2300
  %v2303 = vmul.f32 %v2261, %v2301
  %v2304 = vmul.f32 %v2262, %v2302
  %v2305 = vadd.f32 %v2303, 1.0
  %v2306 = vadd.f32 %v2304, 1.0
  %v2307 = vmul.f32 %v2255, %v2305
  %v2308 = vmul.f32 %v2256, %v2306
  %2311 = vrot.lane.b32.xlu0 %v2249, 64
  %v2312 = vpop.permute.xlu0 %2311
  %2313 = vrot.lane.b32.xlu0 %v2252, 64
  %v2314 = vpop.permute.xlu0 %2313
  %v2317 = vmul.f32 %v2307, %v2312
  %v2318 = vmul.f32 %v2308, %v2314
  %v2319 = vpack.c.bf16 %v2318, %v2317
  %s2320 = scalar_lea.vmem %s7, 32
  %v2321 = vld [vmem:[%s2320] sm:$0xf]
  %v2322 = vld [vmem:[%s2320 + $0x4] sm:$0xf]
  %v2323 = vld [vmem:[%s2320 + $0x8] sm:$0xf]
  %v2324 = vld [vmem:[%s2320 + $0xc] sm:$0xf]
  %v2325 = vld [vmem:[%s2320 + $0x10] sm:$0xf]
  %v2326 = vld [vmem:[%s2320 + $0x14] sm:$0xf]
  %v2327 = vld [vmem:[%s2320 + $0x18] sm:$0xf]
  %v2328 = vld [vmem:[%s2320 + $0x1c] sm:$0xf]
  %v2337 = vunpack.c.l.b16 %v2321
  %v2338 = vunpack.c.l.b16 %v2322
  %v2339 = vunpack.c.l.b16 %v2323
  %v2340 = vunpack.c.l.b16 %v2324
  %v2341 = vunpack.c.l.b16 %v2325
  %v2342 = vunpack.c.l.b16 %v2326
  %v2343 = vunpack.c.l.b16 %v2327
  %v2344 = vunpack.c.l.b16 %v2328
  %v2345 = vpack.c.b16 %v2338, %v2337
  %v2346 = vpack.c.b16 %v2340, %v2339
  %v2347 = vpack.c.b16 %v2342, %v2341
  %v2348 = vpack.c.b16 %v2344, %v2343
  %v2354 = vsel %vm1186, %v2319, 0
  %2356 = vmatprep.subr.bf16.mxu0 0
  %2357 = vmatpush1.bf16.msra.mxu0 %v2345
  %2358 = vmatprep.subr.bf16.mxu0 0
  %2359 = vmatpush1.bf16.msra.mxu0 %v2346
  %2360 = vmatprep.subr.bf16.mxu0 0
  %2361 = vmatpush1.bf16.msra.mxu0 %v2347
  %2362 = vmatprep.subr.bf16.mxu0 0
  %2363 = vmatpush1.bf16.msra.mxu0 %v2348
  %2364 = vmatprep.subr.bf16.mxu0 0
  %2365 = vmatpush1.bf16.msra.mxu0 0
  %2366 = vmatprep.subr.bf16.mxu0 0
  %2367 = vmatpush1.bf16.msra.mxu0 0
  %2368 = vmatprep.subr.bf16.mxu0 0
  %2369 = vmatpush1.bf16.msra.mxu0 0
  %2370 = vmatprep.subr.bf16.mxu0 0
  %2371 = vmatpush1.bf16.msra.mxu0 0
  %2372 = vmatprep.subr.bf16.mxu0 0
  %2373 = vmatpush1.bf16.msra.mxu0 0
  %2374 = vmatprep.subr.bf16.mxu0 0
  %2375 = vmatpush1.bf16.msra.mxu0 0
  %2376 = vmatprep.subr.bf16.mxu0 0
  %2377 = vmatpush1.bf16.msra.mxu0 0
  %2378 = vmatprep.subr.bf16.mxu0 0
  %2379 = vmatpush1.bf16.msra.mxu0 0
  %2380 = vmatprep.subr.bf16.mxu0 0
  %2381 = vmatpush1.bf16.msra.mxu0 0
  %2382 = vmatprep.subr.bf16.mxu0 0
  %2383 = vmatpush1.bf16.msra.mxu0 0
  %2384 = vmatprep.subr.bf16.mxu0 0
  %2385 = vmatpush1.bf16.msra.mxu0 0
  %2386 = vmatprep.subr.bf16.mxu0 0
  %2387 = vmatpush1.bf16.msra.mxu0 0
  %2388 = vmatprep.mubr.bf16.mxu0 0
  %2389 = vmatmul.mubr.bf16.gmra.mrb[0].mxu0 %v2354
  %v2390 = vpop.f32.mrb[0].mxu0
  %v2391 = vadd.f32 0.0, %v2390
  %v2392 = vpop.f32.mrb[0].mxu0
  %v2393 = vpop.f32.mrb[0].mxu0
  %v2394 = vadd.f32 0.0, %v2393
  %v2395 = vpop.f32.mrb[0].mxu0
  %2396 = vdwg.mxu0
  %v2397 = vadd.f32 %v2169, %v2391
  %v2398 = vadd.f32 %v2170, %v2394
  %v2399 = vmul.f32 %v2397, %v2397
  %v2400 = vmul.f32 %v2398, %v2398
  %v2401 = vsel %vm42, %v2399, 0.0
  %2402 = vadd.xlane.f32.xlu0 %v2401
  %v2403 = vpop.xlane.xlu0 %2402
  %v2404 = vsel %vm42, %v2400, 0.0
  %2405 = vadd.xlane.f32.xlu0 %v2404
  %v2406 = vpop.xlane.xlu0 %2405
  %v2407 = vmul.f32 %v2403, %v49
  %v2408 = vmul.f32 %v2406, %v49
  %v2409 = vadd.f32 %v2407, 1e-05
  %v2410 = vadd.f32 %v2408, 1e-05
  %v2411 = vrsqrt.pop %v2409
  %v2412 = vrsqrt.pop %v2410
  %v2413 = vmul.f32 %v2397, %v2411
  %v2414 = vmul.f32 %v2398, %v2412
  %v2415 = vlaneseq
  %v2416 = vshrl.u32 %v2415, 7
  %v2417 = vsub.s32 4, %v2416
  %v2418 = vrot.slane %v37, %v2417
  %v2419 = vmul.f32 %v2413, %v2418
  %v2420 = vmul.f32 %v2414, %v2418
  %2421 = vst.msk [vmem:[%s10] sm:$0xff] %vm42, %v2419
  %2422 = vst.msk [vmem:[%s10 + $0x8] sm:$0xff] %vm42, %v2420
  %v2423 = vpack.c.bf16 %v2420, %v2419
  %v2424 = vld [vmem:[%s8] sm:$0xf]
  %v2425 = vld [vmem:[%s8 + $0x4] sm:$0xf]
  %v2426 = vld [vmem:[%s8 + $0x8] sm:$0xf]
  %v2427 = vld [vmem:[%s8 + $0xc] sm:$0xf]
  %v2432 = vunpack.c.l.b16 %v2424
  %v2433 = vunpack.c.l.b16 %v2425
  %v2434 = vunpack.c.l.b16 %v2426
  %v2435 = vunpack.c.l.b16 %v2427
  %v2436 = vpack.c.b16 %v2433, %v2432
  %v2437 = vpack.c.b16 %v2435, %v2434
  %v2441 = vsel %vm42, %v2423, 0
  %2443 = vmatprep.subr.bf16.mxu0 0
  %2444 = vmatpush1.bf16.msra.mxu0 %v2436
  %2445 = vmatprep.subr.bf16.mxu0 0
  %2446 = vmatpush1.bf16.msra.mxu0 %v2437
  %2447 = vmatprep.subr.bf16.mxu0 0
  %2448 = vmatpush1.bf16.msra.mxu0 0
  %2449 = vmatprep.subr.bf16.mxu0 0
  %2450 = vmatpush1.bf16.msra.mxu0 0
  %2451 = vmatprep.subr.bf16.mxu0 0
  %2452 = vmatpush1.bf16.msra.mxu0 0
  %2453 = vmatprep.subr.bf16.mxu0 0
  %2454 = vmatpush1.bf16.msra.mxu0 0
  %2455 = vmatprep.subr.bf16.mxu0 0
  %2456 = vmatpush1.bf16.msra.mxu0 0
  %2457 = vmatprep.subr.bf16.mxu0 0
  %2458 = vmatpush1.bf16.msra.mxu0 0
  %2459 = vmatprep.subr.bf16.mxu0 0
  %2460 = vmatpush1.bf16.msra.mxu0 0
  %2461 = vmatprep.subr.bf16.mxu0 0
  %2462 = vmatpush1.bf16.msra.mxu0 0
  %2463 = vmatprep.subr.bf16.mxu0 0
  %2464 = vmatpush1.bf16.msra.mxu0 0
  %2465 = vmatprep.subr.bf16.mxu0 0
  %2466 = vmatpush1.bf16.msra.mxu0 0
  %2467 = vmatprep.subr.bf16.mxu0 0
  %2468 = vmatpush1.bf16.msra.mxu0 0
  %2469 = vmatprep.subr.bf16.mxu0 0
  %2470 = vmatpush1.bf16.msra.mxu0 0
  %2471 = vmatprep.subr.bf16.mxu0 0
  %2472 = vmatpush1.bf16.msra.mxu0 0
  %2473 = vmatprep.subr.bf16.mxu0 0
  %2474 = vmatpush1.bf16.msra.mxu0 0
  %2475 = vmatprep.mubr.bf16.mxu0 0
  %2476 = vmatmul.mubr.bf16.gmra.mrb[0].mxu0 %v2441
  %v2477 = vpop.f32.mrb[0].mxu0
  %v2478 = vadd.f32 0.0, %v2477
  %v2479 = vpop.f32.mrb[0].mxu0
  %v2480 = vpop.f32.mrb[0].mxu0
  %v2481 = vadd.f32 0.0, %v2480
  %v2482 = vpop.f32.mrb[0].mxu0
  %2483 = vdwg.mxu0
  %2484 = vst [vmem:[%s9] sm:$0xff] %v2478
  %2485 = vst [vmem:[%s9 + $0x8] sm:$0xff] %v2481
  // Predicated region
  $region38: #{music_x_transformer_forward.2} parent=0 // pred_check
    _
  $region39: #{music_x_transformer_forward.2} parent=0 // pred_check_branch
    %2487 = sbr.rel (0) target = $region41
  $region40: #{music_x_transformer_forward.2} parent=0 // pred_region
    _
  $region41: #{music_x_transformer_forward.2} parent=0 // pred_fallthru
    _
  // Predicated region
  $region42: #{music_x_transformer_forward.2} parent=0 // pred_check
    _
  $region43: #{music_x_transformer_forward.2} parent=0 // pred_check_branch
    %2489 = sbr.rel (0) target = $region45
  $region44: #{music_x_transformer_forward.2} parent=0 // pred_region
    _
  $region45: #{music_x_transformer_forward.2} parent=0 // pred_fallthru
    _
  // Predicated region
  $region46: #{music_x_transformer_forward.2} parent=0 // pred_check
    _
  $region47: #{music_x_transformer_forward.2} parent=0 // pred_check_branch
    %2491 = sbr.rel (0) target = $region49
  $region48: #{music_x_transformer_forward.2} parent=0 // pred_region
    _
  $region49: #{music_x_transformer_forward.2} parent=0 // pred_fallthru
    _
  // Predicated region
  $region50: #{music_x_transformer_forward.2} parent=0 // pred_check
    _
  $region51: #{music_x_transformer_forward.2} parent=0 // pred_check_branch
    %2493 = sbr.rel (0) target = $region53
  $region52: #{music_x_transformer_forward.2} parent=0 // pred_region
    _
  $region53: #{music_x_transformer_forward.2} parent=0 // pred_fallthru
    _

</llo_original>
